<compile_context>
chip_gen: v7x
topology: tpu7x:2x2x1
jax: 0.10.0
libtpu: 0.0.40
codegen_flags: <defaults>
</compile_context>

<pallas_src>
import jax
import jax.numpy as jnp
from jax import lax
from jax.experimental import pallas as pl
from jax.experimental.pallas import tpu as pltpu

K = 7           # conv kernel size
PAD = 3         # conv padding (SAME)
CH = 32         # channel_size
CIN = 12        # ECG leads
L0 = 500        # input length implied by fc1 = Linear(2976, 16)
L1 = L0 // 2    # 250 after avgpool1
L2 = L1 // 2    # 125 after second pool
L3 = L2 // 2    # 62  after third pool (drops trailing odd sample)
FLAT = 48 * L3  # 2976


def scale(arr, m, s):
    arr = arr - m
    arr = arr / (s + 1e-07)
    return arr


# ----------------------------------------------------------------------------
# In-kernel helpers
# ----------------------------------------------------------------------------
def _slab(h):
    """im2col slab for a SAME k=7 conv: (C, L) activation -> (K*C, L) bf16.

    Rows are tap-major: [tap0: ch0..C-1, tap1: ch0..C-1, ...], matching the
    wrapper-side weight reshape transpose(w,(0,2,1)).reshape(Cout, K*C).
    """
    hb = h.astype(jnp.bfloat16)
    c, length = hb.shape
    zpad = jnp.zeros((c, PAD), jnp.bfloat16)
    hp = jnp.concatenate([zpad, hb, zpad], axis=1)                 # (C, L+6)
    return jnp.concatenate([hp[:, t:t + length] for t in range(K)], axis=0)


def _conv(slabs, weights, b_col):
    """SAME conv1d (+bias+relu) as a sum of per-branch MXU matmuls.

    Each branch: bf16 (Cout, K*Cb) @ bf16 (K*Cb, L) -> f32, single MXU pass.
    """
    acc = jnp.dot(weights[0], slabs[0], preferred_element_type=jnp.float32)
    for w, s in zip(weights[1:], slabs[1:]):
        acc = acc + jnp.dot(w, s, preferred_element_type=jnp.float32)
    return jnp.maximum(acc + b_col, 0.0)


def _pool(h, p):
    """AvgPool1d(2,2) as a matmul against a precomputed 0.0/0.5 matrix."""
    return jnp.dot(h.astype(jnp.bfloat16), p, preferred_element_type=jnp.float32)


def ml4cvd_kernel(x_ref,
                  w1, b1, w2, b2,
                  w3a, w3b, b3,
                  w4a, w4b, w4c, b4,
                  w5, b5,
                  w6a, w6b, b6,
                  w7a, w7b, w7c, b7,
                  w8, b8,
                  w9a, w9b, b9,
                  p1, p2, p3,
                  fw1, fb1, fw2t, fb2, fw3, fb3,
                  out_ref):
    x = x_ref[0]                                                # (12, 500) f32

    # ---- stage 1 (length 500) ----
    h = _conv([_slab(x)], [w1[...]], b1[...])                   # (32, 500)
    h = _conv([_slab(h)], [w2[...]], b2[...])                   # (32, 500)
    h = _pool(h, p1[...])                                       # (32, 250)

    # ---- stage 2 (length 250): per-branch slabs reused across skip-concats ----
    s_h = _slab(h)                                              # (224, 250)
    x1 = _conv([s_h], [w2[...]], b2[...])                       # conv2 reused
    s_x1 = _slab(x1)
    x2 = _conv([s_h, s_x1], [w3a[...], w3b[...]], b3[...])      # conv3 on [h,x1]
    s_x2 = _slab(x2)
    y = _conv([s_h, s_x1, s_x2],
              [w4a[...], w4b[...], w4c[...]], b4[...])          # conv4, (24, 250)
    y = _pool(y, p2[...])                                       # (24, 125)

    # ---- stage 3 (length 125) ----
    s_y = _slab(y)                                              # (168, 125)
    x3 = _conv([s_y], [w5[...]], b5[...])                       # (24, 125)
    s_x3 = _slab(x3)
    x4 = _conv([s_y, s_x3], [w6a[...], w6b[...]], b6[...])      # conv6 on [y,x3]
    s_x4 = _slab(x4)
    y = _conv([s_y, s_x3, s_x4],
              [w7a[...], w7b[...], w7c[...]], b7[...])          # conv7, (16, 125)
    y = _pool(y, p3[...])                                       # (16, 62)

    # ---- stage 4 (length 62) ----
    s_y2 = _slab(y)                                             # (112, 62)
    x5 = _conv([s_y2], [w8[...]], b8[...])                      # (16, 62)
    s_x5 = _slab(x5)
    x6 = _conv([s_y2, s_x5], [w9a[...], w9b[...]], b9[...])     # conv9 on [y,x5]
    yc = jnp.concatenate([y, x5, x6], axis=0)                   # (48, 62) f32

    # fc1: weight pre-reshaped to (16, 48, 62) so the PyTorch view(B, -1)
    # flatten becomes a direct (c, l) contraction (tiny; kept in f32).
    t = jnp.sum(fw1[...] * yc[None, :, :], axis=2)              # (16, 48)
    a1 = jnp.maximum(jnp.sum(t, axis=1, keepdims=True) + fb1[...], 0.0)   # (16, 1)

    # fc2: weight pre-transposed to (16, 64)
    a2 = jnp.maximum(jnp.sum(fw2t[...] * a1, axis=0, keepdims=True) + fb2[...],
                     0.0)                                        # (1, 64)

    # fc3: weight stays (1, 64)
    out = jnp.sum(fw3[...] * a2, axis=1, keepdims=True) + fb3[...]         # (1, 1)
    out_ref[...] = out[None]                                     # (1, 1, 1)


# ----------------------------------------------------------------------------
# Wrapper
# ----------------------------------------------------------------------------
def _pool_matrix(l_in, l_out):
    """(l_in, l_out) AvgPool1d(2,2) matrix (built once in the wrapper)."""
    rows = jnp.arange(l_in)[:, None]
    cols = jnp.arange(l_out)[None, :]
    hit = (rows == 2 * cols) | (rows == 2 * cols + 1)
    return jnp.where(hit, 0.5, 0.0).astype(jnp.bfloat16)


@jax.jit
def ml4cvd_forward(x, params):
    (w1, b1, w2, b2, w3, b3, w4, b4, w5, b5, w6, b6, w7, b7, w8, b8, w9, b9,
     fw1, fb1, fw2, fb2, fw3, fb3) = params
    B = x.shape[0]

    def wmat(w):
        # (Cout, Cin, K) -> (Cout, K*Cin) bf16, tap-major, to match slab order.
        cout, cin, k = w.shape
        return jnp.transpose(w, (0, 2, 1)).reshape(cout, k * cin).astype(jnp.bfloat16)

    def wsplit(w, parts):
        # Split along input channels (matching the torch.cat order) then wmat.
        cin = w.shape[1] // parts
        return tuple(wmat(w[:, i * cin:(i + 1) * cin, :]) for i in range(parts))

    def bcol(b):
        return b.reshape(-1, 1).astype(jnp.float32)

    w3a, w3b = wsplit(w3, 2)          # conv3 over [h, x1]
    w4a, w4b, w4c = wsplit(w4, 3)     # conv4 over [h, x1, x2]
    w6a, w6b = wsplit(w6, 2)          # conv6 over [y, x3]
    w7a, w7b, w7c = wsplit(w7, 3)     # conv7 over [y, x3, x4]
    w9a, w9b = wsplit(w9, 2)          # conv9 over [y, x5]

    args = (
        x.astype(jnp.float32),
        wmat(w1), bcol(b1), wmat(w2), bcol(b2),
        w3a, w3b, bcol(b3),
        w4a, w4b, w4c, bcol(b4),
        wmat(w5), bcol(b5),
        w6a, w6b, bcol(b6),
        w7a, w7b, w7c, bcol(b7),
        wmat(w8), bcol(b8),
        w9a, w9b, bcol(b9),
        _pool_matrix(L0, L1), _pool_matrix(L1, L2), _pool_matrix(L2, L3),
        fw1.reshape(16, 48, L3).astype(jnp.float32), fb1.reshape(16, 1),
        fw2.T.astype(jnp.float32), fb2.reshape(1, 64),
        fw3.astype(jnp.float32), fb3.reshape(1, 1),
    )

    def const_spec(a):
        # Full-array block, constant index map -> resident across grid steps.
        return pl.BlockSpec(a.shape, lambda b, _nd=a.ndim: (0,) * _nd)

    in_specs = [pl.BlockSpec((1, CIN, L0), lambda b: (b, 0, 0))]
    in_specs += [const_spec(a) for a in args[1:]]

    out = pl.pallas_call(
        ml4cvd_kernel,
        out_shape=jax.ShapeDtypeStruct((B, 1, 1), jnp.float32),
        grid=(B,),
        in_specs=in_specs,
        out_specs=pl.BlockSpec((1, 1, 1), lambda b: (b, 0, 0)),
        compiler_params=pltpu.CompilerParams(
            dimension_semantics=("parallel",)),
    )(*args)
    return out.reshape(B, 1)


# ----------------------------------------------------------------------------
# Pure-JAX reference (full f32 precision) for verification
# ----------------------------------------------------------------------------
def reference_forward(x, params):
    (w1, b1, w2, b2, w3, b3, w4, b4, w5, b5, w6, b6, w7, b7, w8, b8, w9, b9,
     fw1, fb1, fw2, fb2, fw3, fb3) = params
    hi = lax.Precision.HIGHEST

    def conv(v, w, b):
        y = lax.conv_general_dilated(v, w, (1,), [(PAD, PAD)],
                                     dimension_numbers=("NCH", "OIH", "NCH"),
                                     precision=hi)
        return y + b[None, :, None]

    def pool(v):
        Bv, Cv, Lv = v.shape
        m = Lv // 2
        return v[:, :, :2 * m].reshape(Bv, Cv, m, 2).mean(-1)

    relu = jax.nn.relu
    h = relu(conv(x, w1, b1))
    h = relu(conv(h, w2, b2))
    h = pool(h)
    x1 = relu(conv(h, w2, b2))
    c1 = jnp.concatenate([h, x1], axis=1)
    x2 = relu(conv(c1, w3, b3))
    y = jnp.concatenate([h, x1, x2], axis=1)
    y = relu(conv(y, w4, b4))
    y = pool(y)
    x3 = relu(conv(y, w5, b5))
    c2 = jnp.concatenate([y, x3], axis=1)
    x4 = relu(conv(c2, w6, b6))
    y = jnp.concatenate([y, x3, x4], axis=1)
    y = relu(conv(y, w7, b7))
    y = pool(y)
    x5 = relu(conv(y, w8, b8))
    c3 = jnp.concatenate([y, x5], axis=1)
    x6 = relu(conv(c3, w9, b9))
    y = jnp.concatenate([y, x5, x6], axis=1)
    y = y.reshape(y.shape[0], -1)
    y = relu(jnp.dot(y, fw1.T, precision=hi) + fb1)
    y = relu(jnp.dot(y, fw2.T, precision=hi) + fb2)
    return jnp.dot(y, fw3.T, precision=hi) + fb3


def init_params(key):
    ks = jax.random.split(key, 24)

    def uni(k, shape, fan_in):
        bound = 1.0 / (fan_in ** 0.5)
        return jax.random.uniform(k, shape, jnp.float32, -bound, bound)

    def conv_p(kw, kb, cout, cin):
        return uni(kw, (cout, cin, K), cin * K), uni(kb, (cout,), cin * K)

    w1, b1 = conv_p(ks[0], ks[1], CH, CIN)        # conv1: 12 -> 32
    w2, b2 = conv_p(ks[2], ks[3], CH, CH)         # conv2: 32 -> 32
    w3, b3 = conv_p(ks[4], ks[5], CH, CH * 2)     # conv3: 64 -> 32
    w4, b4 = conv_p(ks[6], ks[7], 24, CH * 3)     # conv4: 96 -> 24
    w5, b5 = conv_p(ks[8], ks[9], 24, 24)         # conv5: 24 -> 24
    w6, b6 = conv_p(ks[10], ks[11], 24, 48)       # conv6: 48 -> 24
    w7, b7 = conv_p(ks[12], ks[13], 16, 72)       # conv7: 72 -> 16
    w8, b8 = conv_p(ks[14], ks[15], 16, 16)       # conv8: 16 -> 16
    w9, b9 = conv_p(ks[16], ks[17], 16, 32)       # conv9: 32 -> 16
    fw1 = uni(ks[18], (16, FLAT), FLAT); fb1 = uni(ks[19], (16,), FLAT)
    fw2 = uni(ks[20], (64, 16), 16);     fb2 = uni(ks[21], (64,), 16)
    fw3 = uni(ks[22], (1, 64), 64);      fb3 = uni(ks[23], (1,), 64)
    return (w1, b1, w2, b2, w3, b3, w4, b4, w5, b5, w6, b6, w7, b7,
            w8, b8, w9, b9, fw1, fb1, fw2, fb2, fw3, fb3)


if __name__ == "__main__":
    key = jax.random.PRNGKey(0)
    kp, kx = jax.random.split(key)

    params = init_params(kp)

    # Synthetic 12-lead ECG: (batch=2, leads=12, samples=500), preprocessed
    # with the script's scale(x, 1.547, 156.82).
    x_raw = 1.547 + 156.82 * jax.random.normal(kx, (2, CIN, L0), jnp.float32)
    x = scale(x_raw, 1.547, 156.82)

    out = ml4cvd_forward(x, params)
    out = jax.block_until_ready(out)

    ref = reference_forward(x, params)
    assert out.shape == (2, 1), out.shape
    # Tolerance accounts for single-pass bf16 MXU operands (f32 accumulation).
    assert jnp.allclose(out, ref, atol=5e-3, rtol=5e-3), (out, ref)

    print("KERNEL_OK")
</pallas_src>

<mosaic_0001>
module attributes {stable_mosaic.version = 11 : i64} {
  func.func @ml4cvd_kernel(%arg0: i32, %arg1: memref<1x12x500xf32, #tpu.memory_space<vmem>>, %arg2: memref<32x84xbf16, #tpu.memory_space<vmem>>, %arg3: memref<32x1xf32, #tpu.memory_space<vmem>>, %arg4: memref<32x224xbf16, #tpu.memory_space<vmem>>, %arg5: memref<32x1xf32, #tpu.memory_space<vmem>>, %arg6: memref<32x224xbf16, #tpu.memory_space<vmem>>, %arg7: memref<32x224xbf16, #tpu.memory_space<vmem>>, %arg8: memref<32x1xf32, #tpu.memory_space<vmem>>, %arg9: memref<24x224xbf16, #tpu.memory_space<vmem>>, %arg10: memref<24x224xbf16, #tpu.memory_space<vmem>>, %arg11: memref<24x224xbf16, #tpu.memory_space<vmem>>, %arg12: memref<24x1xf32, #tpu.memory_space<vmem>>, %arg13: memref<24x168xbf16, #tpu.memory_space<vmem>>, %arg14: memref<24x1xf32, #tpu.memory_space<vmem>>, %arg15: memref<24x168xbf16, #tpu.memory_space<vmem>>, %arg16: memref<24x168xbf16, #tpu.memory_space<vmem>>, %arg17: memref<24x1xf32, #tpu.memory_space<vmem>>, %arg18: memref<16x168xbf16, #tpu.memory_space<vmem>>, %arg19: memref<16x168xbf16, #tpu.memory_space<vmem>>, %arg20: memref<16x168xbf16, #tpu.memory_space<vmem>>, %arg21: memref<16x1xf32, #tpu.memory_space<vmem>>, %arg22: memref<16x112xbf16, #tpu.memory_space<vmem>>, %arg23: memref<16x1xf32, #tpu.memory_space<vmem>>, %arg24: memref<16x112xbf16, #tpu.memory_space<vmem>>, %arg25: memref<16x112xbf16, #tpu.memory_space<vmem>>, %arg26: memref<16x1xf32, #tpu.memory_space<vmem>>, %arg27: memref<500x250xbf16, #tpu.memory_space<vmem>>, %arg28: memref<250x125xbf16, #tpu.memory_space<vmem>>, %arg29: memref<125x62xbf16, #tpu.memory_space<vmem>>, %arg30: memref<16x48x62xf32, #tpu.memory_space<vmem>>, %arg31: memref<16x1xf32, #tpu.memory_space<vmem>>, %arg32: memref<16x64xf32, #tpu.memory_space<vmem>>, %arg33: memref<1x64xf32, #tpu.memory_space<vmem>>, %arg34: memref<1x64xf32, #tpu.memory_space<vmem>>, %arg35: memref<1x1xf32, #tpu.memory_space<vmem>>, %arg36: memref<1x1x1xf32, #tpu.memory_space<vmem>>) attributes {dimension_semantics = [#tpu.dimension_semantics<parallel>], iteration_bounds = array<i64: 2>, scalar_prefetch = 0 : i64, scratch_operands = 0 : i64, tpu.core_type = #tpu.core_type<tc>, window_params = [{transform_indices = @transform_0, window_bounds = array<i64: 1, 12, 500>}, {pipeline_mode = #tpu.pipeline_mode<synchronous>, transform_indices = @transform_1, window_bounds = array<i64: 32, 84>}, {pipeline_mode = #tpu.pipeline_mode<synchronous>, transform_indices = @transform_2, window_bounds = array<i64: 32, 1>}, {pipeline_mode = #tpu.pipeline_mode<synchronous>, transform_indices = @transform_3, window_bounds = array<i64: 32, 224>}, {pipeline_mode = #tpu.pipeline_mode<synchronous>, transform_indices = @transform_4, window_bounds = array<i64: 32, 1>}, {pipeline_mode = #tpu.pipeline_mode<synchronous>, transform_indices = @transform_5, window_bounds = array<i64: 32, 224>}, {pipeline_mode = #tpu.pipeline_mode<synchronous>, transform_indices = @transform_6, window_bounds = array<i64: 32, 224>}, {pipeline_mode = #tpu.pipeline_mode<synchronous>, transform_indices = @transform_7, window_bounds = array<i64: 32, 1>}, {pipeline_mode = #tpu.pipeline_mode<synchronous>, transform_indices = @transform_8, window_bounds = array<i64: 24, 224>}, {pipeline_mode = #tpu.pipeline_mode<synchronous>, transform_indices = @transform_9, window_bounds = array<i64: 24, 224>}, {pipeline_mode = #tpu.pipeline_mode<synchronous>, transform_indices = @transform_10, window_bounds = array<i64: 24, 224>}, {pipeline_mode = #tpu.pipeline_mode<synchronous>, transform_indices = @transform_11, window_bounds = array<i64: 24, 1>}, {pipeline_mode = #tpu.pipeline_mode<synchronous>, transform_indices = @transform_12, window_bounds = array<i64: 24, 168>}, {pipeline_mode = #tpu.pipeline_mode<synchronous>, transform_indices = @transform_13, window_bounds = array<i64: 24, 1>}, {pipeline_mode = #tpu.pipeline_mode<synchronous>, transform_indices = @transform_14, window_bounds = array<i64: 24, 168>}, {pipeline_mode = #tpu.pipeline_mode<synchronous>, transform_indices = @transform_15, window_bounds = array<i64: 24, 168>}, {pipeline_mode = #tpu.pipeline_mode<synchronous>, transform_indices = @transform_16, window_bounds = array<i64: 24, 1>}, {pipeline_mode = #tpu.pipeline_mode<synchronous>, transform_indices = @transform_17, window_bounds = array<i64: 16, 168>}, {pipeline_mode = #tpu.pipeline_mode<synchronous>, transform_indices = @transform_18, window_bounds = array<i64: 16, 168>}, {pipeline_mode = #tpu.pipeline_mode<synchronous>, transform_indices = @transform_19, window_bounds = array<i64: 16, 168>}, {pipeline_mode = #tpu.pipeline_mode<synchronous>, transform_indices = @transform_20, window_bounds = array<i64: 16, 1>}, {pipeline_mode = #tpu.pipeline_mode<synchronous>, transform_indices = @transform_21, window_bounds = array<i64: 16, 112>}, {pipeline_mode = #tpu.pipeline_mode<synchronous>, transform_indices = @transform_22, window_bounds = array<i64: 16, 1>}, {pipeline_mode = #tpu.pipeline_mode<synchronous>, transform_indices = @transform_23, window_bounds = array<i64: 16, 112>}, {pipeline_mode = #tpu.pipeline_mode<synchronous>, transform_indices = @transform_24, window_bounds = array<i64: 16, 112>}, {pipeline_mode = #tpu.pipeline_mode<synchronous>, transform_indices = @transform_25, window_bounds = array<i64: 16, 1>}, {pipeline_mode = #tpu.pipeline_mode<synchronous>, transform_indices = @transform_26, window_bounds = array<i64: 500, 250>}, {pipeline_mode = #tpu.pipeline_mode<synchronous>, transform_indices = @transform_27, window_bounds = array<i64: 250, 125>}, {pipeline_mode = #tpu.pipeline_mode<synchronous>, transform_indices = @transform_28, window_bounds = array<i64: 125, 62>}, {pipeline_mode = #tpu.pipeline_mode<synchronous>, transform_indices = @transform_29, window_bounds = array<i64: 16, 48, 62>}, {pipeline_mode = #tpu.pipeline_mode<synchronous>, transform_indices = @transform_30, window_bounds = array<i64: 16, 1>}, {pipeline_mode = #tpu.pipeline_mode<synchronous>, transform_indices = @transform_31, window_bounds = array<i64: 16, 64>}, {pipeline_mode = #tpu.pipeline_mode<synchronous>, transform_indices = @transform_32, window_bounds = array<i64: 1, 64>}, {pipeline_mode = #tpu.pipeline_mode<synchronous>, transform_indices = @transform_33, window_bounds = array<i64: 1, 64>}, {pipeline_mode = #tpu.pipeline_mode<synchronous>, transform_indices = @transform_34, window_bounds = array<i64: 1, 1>}, {transform_indices = @transform_35, window_bounds = array<i64: 1, 1, 1>}]} {
    %c0 = arith.constant 0 : index
    %c0_0 = arith.constant 0 : index
    %c0_1 = arith.constant 0 : index
    %0 = vector.load %arg1[%c0, %c0_0, %c0_1] : memref<1x12x500xf32, #tpu.memory_space<vmem>>, vector<1x12x500xf32>
    %1 = vector.shape_cast %0 : vector<1x12x500xf32> to vector<12x500xf32>
    %2 = arith.truncf %1 : vector<12x500xf32> to vector<12x500xbf16>
    %cst = arith.constant 0.000000e+00 : bf16
    %3 = vector.broadcast %cst : bf16 to vector<12x3xbf16>
    %4 = tpu.concatenate %3, %2, %3 in 1 : vector<12x3xbf16>, vector<12x500xbf16>, vector<12x3xbf16> -> vector<12x506xbf16>
    %5 = vector.extract_strided_slice %4 {offsets = [0, 0], sizes = [12, 500], strides = [1, 1]} : vector<12x506xbf16> to vector<12x500xbf16>
    %6 = vector.extract_strided_slice %4 {offsets = [0, 1], sizes = [12, 500], strides = [1, 1]} : vector<12x506xbf16> to vector<12x500xbf16>
    %7 = vector.extract_strided_slice %4 {offsets = [0, 2], sizes = [12, 500], strides = [1, 1]} : vector<12x506xbf16> to vector<12x500xbf16>
    %8 = vector.extract_strided_slice %4 {offsets = [0, 3], sizes = [12, 500], strides = [1, 1]} : vector<12x506xbf16> to vector<12x500xbf16>
    %9 = vector.extract_strided_slice %4 {offsets = [0, 4], sizes = [12, 500], strides = [1, 1]} : vector<12x506xbf16> to vector<12x500xbf16>
    %10 = vector.extract_strided_slice %4 {offsets = [0, 5], sizes = [12, 500], strides = [1, 1]} : vector<12x506xbf16> to vector<12x500xbf16>
    %11 = vector.extract_strided_slice %4 {offsets = [0, 6], sizes = [12, 500], strides = [1, 1]} : vector<12x506xbf16> to vector<12x500xbf16>
    %12 = tpu.concatenate %5, %6, %7, %8, %9, %10, %11 in 0 : vector<12x500xbf16>, vector<12x500xbf16>, vector<12x500xbf16>, vector<12x500xbf16>, vector<12x500xbf16>, vector<12x500xbf16>, vector<12x500xbf16> -> vector<84x500xbf16>
    %c0_2 = arith.constant 0 : index
    %c0_3 = arith.constant 0 : index
    %13 = vector.load %arg2[%c0_2, %c0_3] : memref<32x84xbf16, #tpu.memory_space<vmem>>, vector<32x84xbf16>
    %c0_4 = arith.constant 0 : index
    %c0_5 = arith.constant 0 : index
    %14 = vector.load %arg3[%c0_4, %c0_5] : memref<32x1xf32, #tpu.memory_space<vmem>>, vector<32x1xf32>
    %cst_6 = arith.constant dense<0.000000e+00> : vector<32x500xf32>
    %15 = tpu.matmul %13, %12, %cst_6 {dimension_numbers = #tpu.dot_dimension_numbers<[1], [0], [0], [1], [0, 0, 1, 1], [], []>} : vector<32x84xbf16>, vector<84x500xbf16>, vector<32x500xf32> -> vector<32x500xf32>
    %16 = vector.broadcast %14 : vector<32x1xf32> to vector<32x500xf32>
    %17 = arith.addf %15, %16 : vector<32x500xf32>
    %cst_7 = arith.constant 0.000000e+00 : f32
    %18 = vector.broadcast %cst_7 : f32 to vector<32x500xf32>
    %19 = arith.maximumf %17, %18 : vector<32x500xf32>
    %20 = arith.truncf %19 : vector<32x500xf32> to vector<32x500xbf16>
    %cst_8 = arith.constant 0.000000e+00 : bf16
    %21 = vector.broadcast %cst_8 : bf16 to vector<32x3xbf16>
    %22 = tpu.concatenate %21, %20, %21 in 1 : vector<32x3xbf16>, vector<32x500xbf16>, vector<32x3xbf16> -> vector<32x506xbf16>
    %23 = vector.extract_strided_slice %22 {offsets = [0, 0], sizes = [32, 500], strides = [1, 1]} : vector<32x506xbf16> to vector<32x500xbf16>
    %24 = vector.extract_strided_slice %22 {offsets = [0, 1], sizes = [32, 500], strides = [1, 1]} : vector<32x506xbf16> to vector<32x500xbf16>
    %25 = vector.extract_strided_slice %22 {offsets = [0, 2], sizes = [32, 500], strides = [1, 1]} : vector<32x506xbf16> to vector<32x500xbf16>
    %26 = vector.extract_strided_slice %22 {offsets = [0, 3], sizes = [32, 500], strides = [1, 1]} : vector<32x506xbf16> to vector<32x500xbf16>
    %27 = vector.extract_strided_slice %22 {offsets = [0, 4], sizes = [32, 500], strides = [1, 1]} : vector<32x506xbf16> to vector<32x500xbf16>
    %28 = vector.extract_strided_slice %22 {offsets = [0, 5], sizes = [32, 500], strides = [1, 1]} : vector<32x506xbf16> to vector<32x500xbf16>
    %29 = vector.extract_strided_slice %22 {offsets = [0, 6], sizes = [32, 500], strides = [1, 1]} : vector<32x506xbf16> to vector<32x500xbf16>
    %30 = tpu.concatenate %23, %24, %25, %26, %27, %28, %29 in 0 : vector<32x500xbf16>, vector<32x500xbf16>, vector<32x500xbf16>, vector<32x500xbf16>, vector<32x500xbf16>, vector<32x500xbf16>, vector<32x500xbf16> -> vector<224x500xbf16>
    %c0_9 = arith.constant 0 : index
    %c0_10 = arith.constant 0 : index
    %31 = vector.load %arg4[%c0_9, %c0_10] : memref<32x224xbf16, #tpu.memory_space<vmem>>, vector<32x224xbf16>
    %c0_11 = arith.constant 0 : index
    %c0_12 = arith.constant 0 : index
    %32 = vector.load %arg5[%c0_11, %c0_12] : memref<32x1xf32, #tpu.memory_space<vmem>>, vector<32x1xf32>
    %cst_13 = arith.constant dense<0.000000e+00> : vector<32x500xf32>
    %33 = tpu.matmul %31, %30, %cst_13 {dimension_numbers = #tpu.dot_dimension_numbers<[1], [0], [0], [1], [0, 0, 1, 1], [], []>} : vector<32x224xbf16>, vector<224x500xbf16>, vector<32x500xf32> -> vector<32x500xf32>
    %34 = vector.broadcast %32 : vector<32x1xf32> to vector<32x500xf32>
    %35 = arith.addf %33, %34 : vector<32x500xf32>
    %cst_14 = arith.constant 0.000000e+00 : f32
    %36 = vector.broadcast %cst_14 : f32 to vector<32x500xf32>
    %37 = arith.maximumf %35, %36 : vector<32x500xf32>
    %c0_15 = arith.constant 0 : index
    %c0_16 = arith.constant 0 : index
    %38 = vector.load %arg27[%c0_15, %c0_16] : memref<500x250xbf16, #tpu.memory_space<vmem>>, vector<500x250xbf16>
    %39 = arith.truncf %37 : vector<32x500xf32> to vector<32x500xbf16>
    %cst_17 = arith.constant dense<0.000000e+00> : vector<32x250xf32>
    %40 = tpu.matmul %39, %38, %cst_17 {dimension_numbers = #tpu.dot_dimension_numbers<[1], [0], [0], [1], [0, 0, 1, 1], [], []>} : vector<32x500xbf16>, vector<500x250xbf16>, vector<32x250xf32> -> vector<32x250xf32>
    %41 = arith.truncf %40 : vector<32x250xf32> to vector<32x250xbf16>
    %cst_18 = arith.constant 0.000000e+00 : bf16
    %42 = vector.broadcast %cst_18 : bf16 to vector<32x3xbf16>
    %43 = tpu.concatenate %42, %41, %42 in 1 : vector<32x3xbf16>, vector<32x250xbf16>, vector<32x3xbf16> -> vector<32x256xbf16>
    %44 = vector.extract_strided_slice %43 {offsets = [0, 0], sizes = [32, 250], strides = [1, 1]} : vector<32x256xbf16> to vector<32x250xbf16>
    %45 = vector.extract_strided_slice %43 {offsets = [0, 1], sizes = [32, 250], strides = [1, 1]} : vector<32x256xbf16> to vector<32x250xbf16>
    %46 = vector.extract_strided_slice %43 {offsets = [0, 2], sizes = [32, 250], strides = [1, 1]} : vector<32x256xbf16> to vector<32x250xbf16>
    %47 = vector.extract_strided_slice %43 {offsets = [0, 3], sizes = [32, 250], strides = [1, 1]} : vector<32x256xbf16> to vector<32x250xbf16>
    %48 = vector.extract_strided_slice %43 {offsets = [0, 4], sizes = [32, 250], strides = [1, 1]} : vector<32x256xbf16> to vector<32x250xbf16>
    %49 = vector.extract_strided_slice %43 {offsets = [0, 5], sizes = [32, 250], strides = [1, 1]} : vector<32x256xbf16> to vector<32x250xbf16>
    %50 = vector.extract_strided_slice %43 {offsets = [0, 6], sizes = [32, 250], strides = [1, 1]} : vector<32x256xbf16> to vector<32x250xbf16>
    %51 = tpu.concatenate %44, %45, %46, %47, %48, %49, %50 in 0 : vector<32x250xbf16>, vector<32x250xbf16>, vector<32x250xbf16>, vector<32x250xbf16>, vector<32x250xbf16>, vector<32x250xbf16>, vector<32x250xbf16> -> vector<224x250xbf16>
    %c0_19 = arith.constant 0 : index
    %c0_20 = arith.constant 0 : index
    %52 = vector.load %arg4[%c0_19, %c0_20] : memref<32x224xbf16, #tpu.memory_space<vmem>>, vector<32x224xbf16>
    %c0_21 = arith.constant 0 : index
    %c0_22 = arith.constant 0 : index
    %53 = vector.load %arg5[%c0_21, %c0_22] : memref<32x1xf32, #tpu.memory_space<vmem>>, vector<32x1xf32>
    %cst_23 = arith.constant dense<0.000000e+00> : vector<32x250xf32>
    %54 = tpu.matmul %52, %51, %cst_23 {dimension_numbers = #tpu.dot_dimension_numbers<[1], [0], [0], [1], [0, 0, 1, 1], [], []>} : vector<32x224xbf16>, vector<224x250xbf16>, vector<32x250xf32> -> vector<32x250xf32>
    %55 = vector.broadcast %53 : vector<32x1xf32> to vector<32x250xf32>
    %56 = arith.addf %54, %55 : vector<32x250xf32>
    %cst_24 = arith.constant 0.000000e+00 : f32
    %57 = vector.broadcast %cst_24 : f32 to vector<32x250xf32>
    %58 = arith.maximumf %56, %57 : vector<32x250xf32>
    %59 = arith.truncf %58 : vector<32x250xf32> to vector<32x250xbf16>
    %cst_25 = arith.constant 0.000000e+00 : bf16
    %60 = vector.broadcast %cst_25 : bf16 to vector<32x3xbf16>
    %61 = tpu.concatenate %60, %59, %60 in 1 : vector<32x3xbf16>, vector<32x250xbf16>, vector<32x3xbf16> -> vector<32x256xbf16>
    %62 = vector.extract_strided_slice %61 {offsets = [0, 0], sizes = [32, 250], strides = [1, 1]} : vector<32x256xbf16> to vector<32x250xbf16>
    %63 = vector.extract_strided_slice %61 {offsets = [0, 1], sizes = [32, 250], strides = [1, 1]} : vector<32x256xbf16> to vector<32x250xbf16>
    %64 = vector.extract_strided_slice %61 {offsets = [0, 2], sizes = [32, 250], strides = [1, 1]} : vector<32x256xbf16> to vector<32x250xbf16>
    %65 = vector.extract_strided_slice %61 {offsets = [0, 3], sizes = [32, 250], strides = [1, 1]} : vector<32x256xbf16> to vector<32x250xbf16>
    %66 = vector.extract_strided_slice %61 {offsets = [0, 4], sizes = [32, 250], strides = [1, 1]} : vector<32x256xbf16> to vector<32x250xbf16>
    %67 = vector.extract_strided_slice %61 {offsets = [0, 5], sizes = [32, 250], strides = [1, 1]} : vector<32x256xbf16> to vector<32x250xbf16>
    %68 = vector.extract_strided_slice %61 {offsets = [0, 6], sizes = [32, 250], strides = [1, 1]} : vector<32x256xbf16> to vector<32x250xbf16>
    %69 = tpu.concatenate %62, %63, %64, %65, %66, %67, %68 in 0 : vector<32x250xbf16>, vector<32x250xbf16>, vector<32x250xbf16>, vector<32x250xbf16>, vector<32x250xbf16>, vector<32x250xbf16>, vector<32x250xbf16> -> vector<224x250xbf16>
    %c0_26 = arith.constant 0 : index
    %c0_27 = arith.constant 0 : index
    %70 = vector.load %arg6[%c0_26, %c0_27] : memref<32x224xbf16, #tpu.memory_space<vmem>>, vector<32x224xbf16>
    %c0_28 = arith.constant 0 : index
    %c0_29 = arith.constant 0 : index
    %71 = vector.load %arg7[%c0_28, %c0_29] : memref<32x224xbf16, #tpu.memory_space<vmem>>, vector<32x224xbf16>
    %c0_30 = arith.constant 0 : index
    %c0_31 = arith.constant 0 : index
    %72 = vector.load %arg8[%c0_30, %c0_31] : memref<32x1xf32, #tpu.memory_space<vmem>>, vector<32x1xf32>
    %cst_32 = arith.constant dense<0.000000e+00> : vector<32x250xf32>
    %73 = tpu.matmul %70, %51, %cst_32 {dimension_numbers = #tpu.dot_dimension_numbers<[1], [0], [0], [1], [0, 0, 1, 1], [], []>} : vector<32x224xbf16>, vector<224x250xbf16>, vector<32x250xf32> -> vector<32x250xf32>
    %cst_33 = arith.constant dense<0.000000e+00> : vector<32x250xf32>
    %74 = tpu.matmul %71, %69, %cst_33 {dimension_numbers = #tpu.dot_dimension_numbers<[1], [0], [0], [1], [0, 0, 1, 1], [], []>} : vector<32x224xbf16>, vector<224x250xbf16>, vector<32x250xf32> -> vector<32x250xf32>
    %75 = arith.addf %73, %74 : vector<32x250xf32>
    %76 = vector.broadcast %72 : vector<32x1xf32> to vector<32x250xf32>
    %77 = arith.addf %75, %76 : vector<32x250xf32>
    %cst_34 = arith.constant 0.000000e+00 : f32
    %78 = vector.broadcast %cst_34 : f32 to vector<32x250xf32>
    %79 = arith.maximumf %77, %78 : vector<32x250xf32>
    %80 = arith.truncf %79 : vector<32x250xf32> to vector<32x250xbf16>
    %cst_35 = arith.constant 0.000000e+00 : bf16
    %81 = vector.broadcast %cst_35 : bf16 to vector<32x3xbf16>
    %82 = tpu.concatenate %81, %80, %81 in 1 : vector<32x3xbf16>, vector<32x250xbf16>, vector<32x3xbf16> -> vector<32x256xbf16>
    %83 = vector.extract_strided_slice %82 {offsets = [0, 0], sizes = [32, 250], strides = [1, 1]} : vector<32x256xbf16> to vector<32x250xbf16>
    %84 = vector.extract_strided_slice %82 {offsets = [0, 1], sizes = [32, 250], strides = [1, 1]} : vector<32x256xbf16> to vector<32x250xbf16>
    %85 = vector.extract_strided_slice %82 {offsets = [0, 2], sizes = [32, 250], strides = [1, 1]} : vector<32x256xbf16> to vector<32x250xbf16>
    %86 = vector.extract_strided_slice %82 {offsets = [0, 3], sizes = [32, 250], strides = [1, 1]} : vector<32x256xbf16> to vector<32x250xbf16>
    %87 = vector.extract_strided_slice %82 {offsets = [0, 4], sizes = [32, 250], strides = [1, 1]} : vector<32x256xbf16> to vector<32x250xbf16>
    %88 = vector.extract_strided_slice %82 {offsets = [0, 5], sizes = [32, 250], strides = [1, 1]} : vector<32x256xbf16> to vector<32x250xbf16>
    %89 = vector.extract_strided_slice %82 {offsets = [0, 6], sizes = [32, 250], strides = [1, 1]} : vector<32x256xbf16> to vector<32x250xbf16>
    %90 = tpu.concatenate %83, %84, %85, %86, %87, %88, %89 in 0 : vector<32x250xbf16>, vector<32x250xbf16>, vector<32x250xbf16>, vector<32x250xbf16>, vector<32x250xbf16>, vector<32x250xbf16>, vector<32x250xbf16> -> vector<224x250xbf16>
    %c0_36 = arith.constant 0 : index
    %c0_37 = arith.constant 0 : index
    %91 = vector.load %arg9[%c0_36, %c0_37] : memref<24x224xbf16, #tpu.memory_space<vmem>>, vector<24x224xbf16>
    %c0_38 = arith.constant 0 : index
    %c0_39 = arith.constant 0 : index
    %92 = vector.load %arg10[%c0_38, %c0_39] : memref<24x224xbf16, #tpu.memory_space<vmem>>, vector<24x224xbf16>
    %c0_40 = arith.constant 0 : index
    %c0_41 = arith.constant 0 : index
    %93 = vector.load %arg11[%c0_40, %c0_41] : memref<24x224xbf16, #tpu.memory_space<vmem>>, vector<24x224xbf16>
    %c0_42 = arith.constant 0 : index
    %c0_43 = arith.constant 0 : index
    %94 = vector.load %arg12[%c0_42, %c0_43] : memref<24x1xf32, #tpu.memory_space<vmem>>, vector<24x1xf32>
    %cst_44 = arith.constant dense<0.000000e+00> : vector<24x250xf32>
    %95 = tpu.matmul %91, %51, %cst_44 {dimension_numbers = #tpu.dot_dimension_numbers<[1], [0], [0], [1], [0, 0, 1, 1], [], []>} : vector<24x224xbf16>, vector<224x250xbf16>, vector<24x250xf32> -> vector<24x250xf32>
    %cst_45 = arith.constant dense<0.000000e+00> : vector<24x250xf32>
    %96 = tpu.matmul %92, %69, %cst_45 {dimension_numbers = #tpu.dot_dimension_numbers<[1], [0], [0], [1], [0, 0, 1, 1], [], []>} : vector<24x224xbf16>, vector<224x250xbf16>, vector<24x250xf32> -> vector<24x250xf32>
    %97 = arith.addf %95, %96 : vector<24x250xf32>
    %cst_46 = arith.constant dense<0.000000e+00> : vector<24x250xf32>
    %98 = tpu.matmul %93, %90, %cst_46 {dimension_numbers = #tpu.dot_dimension_numbers<[1], [0], [0], [1], [0, 0, 1, 1], [], []>} : vector<24x224xbf16>, vector<224x250xbf16>, vector<24x250xf32> -> vector<24x250xf32>
    %99 = arith.addf %97, %98 : vector<24x250xf32>
    %100 = vector.broadcast %94 : vector<24x1xf32> to vector<24x250xf32>
    %101 = arith.addf %99, %100 : vector<24x250xf32>
    %cst_47 = arith.constant 0.000000e+00 : f32
    %102 = vector.broadcast %cst_47 : f32 to vector<24x250xf32>
    %103 = arith.maximumf %101, %102 : vector<24x250xf32>
    %c0_48 = arith.constant 0 : index
    %c0_49 = arith.constant 0 : index
    %104 = vector.load %arg28[%c0_48, %c0_49] : memref<250x125xbf16, #tpu.memory_space<vmem>>, vector<250x125xbf16>
    %105 = arith.truncf %103 : vector<24x250xf32> to vector<24x250xbf16>
    %cst_50 = arith.constant dense<0.000000e+00> : vector<24x125xf32>
    %106 = tpu.matmul %105, %104, %cst_50 {dimension_numbers = #tpu.dot_dimension_numbers<[1], [0], [0], [1], [0, 0, 1, 1], [], []>} : vector<24x250xbf16>, vector<250x125xbf16>, vector<24x125xf32> -> vector<24x125xf32>
    %107 = arith.truncf %106 : vector<24x125xf32> to vector<24x125xbf16>
    %cst_51 = arith.constant 0.000000e+00 : bf16
    %108 = vector.broadcast %cst_51 : bf16 to vector<24x3xbf16>
    %109 = tpu.concatenate %108, %107, %108 in 1 : vector<24x3xbf16>, vector<24x125xbf16>, vector<24x3xbf16> -> vector<24x131xbf16>
    %110 = vector.extract_strided_slice %109 {offsets = [0, 0], sizes = [24, 125], strides = [1, 1]} : vector<24x131xbf16> to vector<24x125xbf16>
    %111 = vector.extract_strided_slice %109 {offsets = [0, 1], sizes = [24, 125], strides = [1, 1]} : vector<24x131xbf16> to vector<24x125xbf16>
    %112 = vector.extract_strided_slice %109 {offsets = [0, 2], sizes = [24, 125], strides = [1, 1]} : vector<24x131xbf16> to vector<24x125xbf16>
    %113 = vector.extract_strided_slice %109 {offsets = [0, 3], sizes = [24, 125], strides = [1, 1]} : vector<24x131xbf16> to vector<24x125xbf16>
    %114 = vector.extract_strided_slice %109 {offsets = [0, 4], sizes = [24, 125], strides = [1, 1]} : vector<24x131xbf16> to vector<24x125xbf16>
    %115 = vector.extract_strided_slice %109 {offsets = [0, 5], sizes = [24, 125], strides = [1, 1]} : vector<24x131xbf16> to vector<24x125xbf16>
    %116 = vector.extract_strided_slice %109 {offsets = [0, 6], sizes = [24, 125], strides = [1, 1]} : vector<24x131xbf16> to vector<24x125xbf16>
    %117 = tpu.concatenate %110, %111, %112, %113, %114, %115, %116 in 0 : vector<24x125xbf16>, vector<24x125xbf16>, vector<24x125xbf16>, vector<24x125xbf16>, vector<24x125xbf16>, vector<24x125xbf16>, vector<24x125xbf16> -> vector<168x125xbf16>
    %c0_52 = arith.constant 0 : index
    %c0_53 = arith.constant 0 : index
    %118 = vector.load %arg13[%c0_52, %c0_53] : memref<24x168xbf16, #tpu.memory_space<vmem>>, vector<24x168xbf16>
    %c0_54 = arith.constant 0 : index
    %c0_55 = arith.constant 0 : index
    %119 = vector.load %arg14[%c0_54, %c0_55] : memref<24x1xf32, #tpu.memory_space<vmem>>, vector<24x1xf32>
    %cst_56 = arith.constant dense<0.000000e+00> : vector<24x125xf32>
    %120 = tpu.matmul %118, %117, %cst_56 {dimension_numbers = #tpu.dot_dimension_numbers<[1], [0], [0], [1], [0, 0, 1, 1], [], []>} : vector<24x168xbf16>, vector<168x125xbf16>, vector<24x125xf32> -> vector<24x125xf32>
    %121 = vector.broadcast %119 : vector<24x1xf32> to vector<24x125xf32>
    %122 = arith.addf %120, %121 : vector<24x125xf32>
    %cst_57 = arith.constant 0.000000e+00 : f32
    %123 = vector.broadcast %cst_57 : f32 to vector<24x125xf32>
    %124 = arith.maximumf %122, %123 : vector<24x125xf32>
    %125 = arith.truncf %124 : vector<24x125xf32> to vector<24x125xbf16>
    %cst_58 = arith.constant 0.000000e+00 : bf16
    %126 = vector.broadcast %cst_58 : bf16 to vector<24x3xbf16>
    %127 = tpu.concatenate %126, %125, %126 in 1 : vector<24x3xbf16>, vector<24x125xbf16>, vector<24x3xbf16> -> vector<24x131xbf16>
    %128 = vector.extract_strided_slice %127 {offsets = [0, 0], sizes = [24, 125], strides = [1, 1]} : vector<24x131xbf16> to vector<24x125xbf16>
    %129 = vector.extract_strided_slice %127 {offsets = [0, 1], sizes = [24, 125], strides = [1, 1]} : vector<24x131xbf16> to vector<24x125xbf16>
    %130 = vector.extract_strided_slice %127 {offsets = [0, 2], sizes = [24, 125], strides = [1, 1]} : vector<24x131xbf16> to vector<24x125xbf16>
    %131 = vector.extract_strided_slice %127 {offsets = [0, 3], sizes = [24, 125], strides = [1, 1]} : vector<24x131xbf16> to vector<24x125xbf16>
    %132 = vector.extract_strided_slice %127 {offsets = [0, 4], sizes = [24, 125], strides = [1, 1]} : vector<24x131xbf16> to vector<24x125xbf16>
    %133 = vector.extract_strided_slice %127 {offsets = [0, 5], sizes = [24, 125], strides = [1, 1]} : vector<24x131xbf16> to vector<24x125xbf16>
    %134 = vector.extract_strided_slice %127 {offsets = [0, 6], sizes = [24, 125], strides = [1, 1]} : vector<24x131xbf16> to vector<24x125xbf16>
    %135 = tpu.concatenate %128, %129, %130, %131, %132, %133, %134 in 0 : vector<24x125xbf16>, vector<24x125xbf16>, vector<24x125xbf16>, vector<24x125xbf16>, vector<24x125xbf16>, vector<24x125xbf16>, vector<24x125xbf16> -> vector<168x125xbf16>
    %c0_59 = arith.constant 0 : index
    %c0_60 = arith.constant 0 : index
    %136 = vector.load %arg15[%c0_59, %c0_60] : memref<24x168xbf16, #tpu.memory_space<vmem>>, vector<24x168xbf16>
    %c0_61 = arith.constant 0 : index
    %c0_62 = arith.constant 0 : index
    %137 = vector.load %arg16[%c0_61, %c0_62] : memref<24x168xbf16, #tpu.memory_space<vmem>>, vector<24x168xbf16>
    %c0_63 = arith.constant 0 : index
    %c0_64 = arith.constant 0 : index
    %138 = vector.load %arg17[%c0_63, %c0_64] : memref<24x1xf32, #tpu.memory_space<vmem>>, vector<24x1xf32>
    %cst_65 = arith.constant dense<0.000000e+00> : vector<24x125xf32>
    %139 = tpu.matmul %136, %117, %cst_65 {dimension_numbers = #tpu.dot_dimension_numbers<[1], [0], [0], [1], [0, 0, 1, 1], [], []>} : vector<24x168xbf16>, vector<168x125xbf16>, vector<24x125xf32> -> vector<24x125xf32>
    %cst_66 = arith.constant dense<0.000000e+00> : vector<24x125xf32>
    %140 = tpu.matmul %137, %135, %cst_66 {dimension_numbers = #tpu.dot_dimension_numbers<[1], [0], [0], [1], [0, 0, 1, 1], [], []>} : vector<24x168xbf16>, vector<168x125xbf16>, vector<24x125xf32> -> vector<24x125xf32>
    %141 = arith.addf %139, %140 : vector<24x125xf32>
    %142 = vector.broadcast %138 : vector<24x1xf32> to vector<24x125xf32>
    %143 = arith.addf %141, %142 : vector<24x125xf32>
    %cst_67 = arith.constant 0.000000e+00 : f32
    %144 = vector.broadcast %cst_67 : f32 to vector<24x125xf32>
    %145 = arith.maximumf %143, %144 : vector<24x125xf32>
    %146 = arith.truncf %145 : vector<24x125xf32> to vector<24x125xbf16>
    %cst_68 = arith.constant 0.000000e+00 : bf16
    %147 = vector.broadcast %cst_68 : bf16 to vector<24x3xbf16>
    %148 = tpu.concatenate %147, %146, %147 in 1 : vector<24x3xbf16>, vector<24x125xbf16>, vector<24x3xbf16> -> vector<24x131xbf16>
    %149 = vector.extract_strided_slice %148 {offsets = [0, 0], sizes = [24, 125], strides = [1, 1]} : vector<24x131xbf16> to vector<24x125xbf16>
    %150 = vector.extract_strided_slice %148 {offsets = [0, 1], sizes = [24, 125], strides = [1, 1]} : vector<24x131xbf16> to vector<24x125xbf16>
    %151 = vector.extract_strided_slice %148 {offsets = [0, 2], sizes = [24, 125], strides = [1, 1]} : vector<24x131xbf16> to vector<24x125xbf16>
    %152 = vector.extract_strided_slice %148 {offsets = [0, 3], sizes = [24, 125], strides = [1, 1]} : vector<24x131xbf16> to vector<24x125xbf16>
    %153 = vector.extract_strided_slice %148 {offsets = [0, 4], sizes = [24, 125], strides = [1, 1]} : vector<24x131xbf16> to vector<24x125xbf16>
    %154 = vector.extract_strided_slice %148 {offsets = [0, 5], sizes = [24, 125], strides = [1, 1]} : vector<24x131xbf16> to vector<24x125xbf16>
    %155 = vector.extract_strided_slice %148 {offsets = [0, 6], sizes = [24, 125], strides = [1, 1]} : vector<24x131xbf16> to vector<24x125xbf16>
    %156 = tpu.concatenate %149, %150, %151, %152, %153, %154, %155 in 0 : vector<24x125xbf16>, vector<24x125xbf16>, vector<24x125xbf16>, vector<24x125xbf16>, vector<24x125xbf16>, vector<24x125xbf16>, vector<24x125xbf16> -> vector<168x125xbf16>
    %c0_69 = arith.constant 0 : index
    %c0_70 = arith.constant 0 : index
    %157 = vector.load %arg18[%c0_69, %c0_70] : memref<16x168xbf16, #tpu.memory_space<vmem>>, vector<16x168xbf16>
    %c0_71 = arith.constant 0 : index
    %c0_72 = arith.constant 0 : index
    %158 = vector.load %arg19[%c0_71, %c0_72] : memref<16x168xbf16, #tpu.memory_space<vmem>>, vector<16x168xbf16>
    %c0_73 = arith.constant 0 : index
    %c0_74 = arith.constant 0 : index
    %159 = vector.load %arg20[%c0_73, %c0_74] : memref<16x168xbf16, #tpu.memory_space<vmem>>, vector<16x168xbf16>
    %c0_75 = arith.constant 0 : index
    %c0_76 = arith.constant 0 : index
    %160 = vector.load %arg21[%c0_75, %c0_76] : memref<16x1xf32, #tpu.memory_space<vmem>>, vector<16x1xf32>
    %cst_77 = arith.constant dense<0.000000e+00> : vector<16x125xf32>
    %161 = tpu.matmul %157, %117, %cst_77 {dimension_numbers = #tpu.dot_dimension_numbers<[1], [0], [0], [1], [0, 0, 1, 1], [], []>} : vector<16x168xbf16>, vector<168x125xbf16>, vector<16x125xf32> -> vector<16x125xf32>
    %cst_78 = arith.constant dense<0.000000e+00> : vector<16x125xf32>
    %162 = tpu.matmul %158, %135, %cst_78 {dimension_numbers = #tpu.dot_dimension_numbers<[1], [0], [0], [1], [0, 0, 1, 1], [], []>} : vector<16x168xbf16>, vector<168x125xbf16>, vector<16x125xf32> -> vector<16x125xf32>
    %163 = arith.addf %161, %162 : vector<16x125xf32>
    %cst_79 = arith.constant dense<0.000000e+00> : vector<16x125xf32>
    %164 = tpu.matmul %159, %156, %cst_79 {dimension_numbers = #tpu.dot_dimension_numbers<[1], [0], [0], [1], [0, 0, 1, 1], [], []>} : vector<16x168xbf16>, vector<168x125xbf16>, vector<16x125xf32> -> vector<16x125xf32>
    %165 = arith.addf %163, %164 : vector<16x125xf32>
    %166 = vector.broadcast %160 : vector<16x1xf32> to vector<16x125xf32>
    %167 = arith.addf %165, %166 : vector<16x125xf32>
    %cst_80 = arith.constant 0.000000e+00 : f32
    %168 = vector.broadcast %cst_80 : f32 to vector<16x125xf32>
    %169 = arith.maximumf %167, %168 : vector<16x125xf32>
    %c0_81 = arith.constant 0 : index
    %c0_82 = arith.constant 0 : index
    %170 = vector.load %arg29[%c0_81, %c0_82] : memref<125x62xbf16, #tpu.memory_space<vmem>>, vector<125x62xbf16>
    %171 = arith.truncf %169 : vector<16x125xf32> to vector<16x125xbf16>
    %cst_83 = arith.constant dense<0.000000e+00> : vector<16x62xf32>
    %172 = tpu.matmul %171, %170, %cst_83 {dimension_numbers = #tpu.dot_dimension_numbers<[1], [0], [0], [1], [0, 0, 1, 1], [], []>} : vector<16x125xbf16>, vector<125x62xbf16>, vector<16x62xf32> -> vector<16x62xf32>
    %173 = arith.truncf %172 : vector<16x62xf32> to vector<16x62xbf16>
    %cst_84 = arith.constant 0.000000e+00 : bf16
    %174 = vector.broadcast %cst_84 : bf16 to vector<16x3xbf16>
    %175 = tpu.concatenate %174, %173, %174 in 1 : vector<16x3xbf16>, vector<16x62xbf16>, vector<16x3xbf16> -> vector<16x68xbf16>
    %176 = vector.extract_strided_slice %175 {offsets = [0, 0], sizes = [16, 62], strides = [1, 1]} : vector<16x68xbf16> to vector<16x62xbf16>
    %177 = vector.extract_strided_slice %175 {offsets = [0, 1], sizes = [16, 62], strides = [1, 1]} : vector<16x68xbf16> to vector<16x62xbf16>
    %178 = vector.extract_strided_slice %175 {offsets = [0, 2], sizes = [16, 62], strides = [1, 1]} : vector<16x68xbf16> to vector<16x62xbf16>
    %179 = vector.extract_strided_slice %175 {offsets = [0, 3], sizes = [16, 62], strides = [1, 1]} : vector<16x68xbf16> to vector<16x62xbf16>
    %180 = vector.extract_strided_slice %175 {offsets = [0, 4], sizes = [16, 62], strides = [1, 1]} : vector<16x68xbf16> to vector<16x62xbf16>
    %181 = vector.extract_strided_slice %175 {offsets = [0, 5], sizes = [16, 62], strides = [1, 1]} : vector<16x68xbf16> to vector<16x62xbf16>
    %182 = vector.extract_strided_slice %175 {offsets = [0, 6], sizes = [16, 62], strides = [1, 1]} : vector<16x68xbf16> to vector<16x62xbf16>
    %183 = tpu.concatenate %176, %177, %178, %179, %180, %181, %182 in 0 : vector<16x62xbf16>, vector<16x62xbf16>, vector<16x62xbf16>, vector<16x62xbf16>, vector<16x62xbf16>, vector<16x62xbf16>, vector<16x62xbf16> -> vector<112x62xbf16>
    %c0_85 = arith.constant 0 : index
    %c0_86 = arith.constant 0 : index
    %184 = vector.load %arg22[%c0_85, %c0_86] : memref<16x112xbf16, #tpu.memory_space<vmem>>, vector<16x112xbf16>
    %c0_87 = arith.constant 0 : index
    %c0_88 = arith.constant 0 : index
    %185 = vector.load %arg23[%c0_87, %c0_88] : memref<16x1xf32, #tpu.memory_space<vmem>>, vector<16x1xf32>
    %cst_89 = arith.constant dense<0.000000e+00> : vector<16x62xf32>
    %186 = tpu.matmul %184, %183, %cst_89 {dimension_numbers = #tpu.dot_dimension_numbers<[1], [0], [0], [1], [0, 0, 1, 1], [], []>} : vector<16x112xbf16>, vector<112x62xbf16>, vector<16x62xf32> -> vector<16x62xf32>
    %187 = vector.broadcast %185 : vector<16x1xf32> to vector<16x62xf32>
    %188 = arith.addf %186, %187 : vector<16x62xf32>
    %cst_90 = arith.constant 0.000000e+00 : f32
    %189 = vector.broadcast %cst_90 : f32 to vector<16x62xf32>
    %190 = arith.maximumf %188, %189 : vector<16x62xf32>
    %191 = arith.truncf %190 : vector<16x62xf32> to vector<16x62xbf16>
    %cst_91 = arith.constant 0.000000e+00 : bf16
    %192 = vector.broadcast %cst_91 : bf16 to vector<16x3xbf16>
    %193 = tpu.concatenate %192, %191, %192 in 1 : vector<16x3xbf16>, vector<16x62xbf16>, vector<16x3xbf16> -> vector<16x68xbf16>
    %194 = vector.extract_strided_slice %193 {offsets = [0, 0], sizes = [16, 62], strides = [1, 1]} : vector<16x68xbf16> to vector<16x62xbf16>
    %195 = vector.extract_strided_slice %193 {offsets = [0, 1], sizes = [16, 62], strides = [1, 1]} : vector<16x68xbf16> to vector<16x62xbf16>
    %196 = vector.extract_strided_slice %193 {offsets = [0, 2], sizes = [16, 62], strides = [1, 1]} : vector<16x68xbf16> to vector<16x62xbf16>
    %197 = vector.extract_strided_slice %193 {offsets = [0, 3], sizes = [16, 62], strides = [1, 1]} : vector<16x68xbf16> to vector<16x62xbf16>
    %198 = vector.extract_strided_slice %193 {offsets = [0, 4], sizes = [16, 62], strides = [1, 1]} : vector<16x68xbf16> to vector<16x62xbf16>
    %199 = vector.extract_strided_slice %193 {offsets = [0, 5], sizes = [16, 62], strides = [1, 1]} : vector<16x68xbf16> to vector<16x62xbf16>
    %200 = vector.extract_strided_slice %193 {offsets = [0, 6], sizes = [16, 62], strides = [1, 1]} : vector<16x68xbf16> to vector<16x62xbf16>
    %201 = tpu.concatenate %194, %195, %196, %197, %198, %199, %200 in 0 : vector<16x62xbf16>, vector<16x62xbf16>, vector<16x62xbf16>, vector<16x62xbf16>, vector<16x62xbf16>, vector<16x62xbf16>, vector<16x62xbf16> -> vector<112x62xbf16>
    %c0_92 = arith.constant 0 : index
    %c0_93 = arith.constant 0 : index
    %202 = vector.load %arg24[%c0_92, %c0_93] : memref<16x112xbf16, #tpu.memory_space<vmem>>, vector<16x112xbf16>
    %c0_94 = arith.constant 0 : index
    %c0_95 = arith.constant 0 : index
    %203 = vector.load %arg25[%c0_94, %c0_95] : memref<16x112xbf16, #tpu.memory_space<vmem>>, vector<16x112xbf16>
    %c0_96 = arith.constant 0 : index
    %c0_97 = arith.constant 0 : index
    %204 = vector.load %arg26[%c0_96, %c0_97] : memref<16x1xf32, #tpu.memory_space<vmem>>, vector<16x1xf32>
    %cst_98 = arith.constant dense<0.000000e+00> : vector<16x62xf32>
    %205 = tpu.matmul %202, %183, %cst_98 {dimension_numbers = #tpu.dot_dimension_numbers<[1], [0], [0], [1], [0, 0, 1, 1], [], []>} : vector<16x112xbf16>, vector<112x62xbf16>, vector<16x62xf32> -> vector<16x62xf32>
    %cst_99 = arith.constant dense<0.000000e+00> : vector<16x62xf32>
    %206 = tpu.matmul %203, %201, %cst_99 {dimension_numbers = #tpu.dot_dimension_numbers<[1], [0], [0], [1], [0, 0, 1, 1], [], []>} : vector<16x112xbf16>, vector<112x62xbf16>, vector<16x62xf32> -> vector<16x62xf32>
    %207 = arith.addf %205, %206 : vector<16x62xf32>
    %208 = vector.broadcast %204 : vector<16x1xf32> to vector<16x62xf32>
    %209 = arith.addf %207, %208 : vector<16x62xf32>
    %cst_100 = arith.constant 0.000000e+00 : f32
    %210 = vector.broadcast %cst_100 : f32 to vector<16x62xf32>
    %211 = arith.maximumf %209, %210 : vector<16x62xf32>
    %212 = tpu.concatenate %172, %190, %211 in 0 : vector<16x62xf32>, vector<16x62xf32>, vector<16x62xf32> -> vector<48x62xf32>
    %c0_101 = arith.constant 0 : index
    %c0_102 = arith.constant 0 : index
    %c0_103 = arith.constant 0 : index
    %213 = vector.load %arg30[%c0_101, %c0_102, %c0_103] : memref<16x48x62xf32, #tpu.memory_space<vmem>>, vector<16x48x62xf32>
    %214 = vector.shape_cast %212 : vector<48x62xf32> to vector<1x48x62xf32>
    %215 = vector.broadcast %214 : vector<1x48x62xf32> to vector<16x48x62xf32>
    %216 = arith.mulf %213, %215 : vector<16x48x62xf32>
    %cst_104 = arith.constant dense<0.000000e+00> : vector<16x48xf32>
    %217 = vector.multi_reduction <add>, %216, %cst_104 [2] : vector<16x48x62xf32> to vector<16x48xf32>
    %cst_105 = arith.constant dense<0.000000e+00> : vector<16xf32>
    %218 = vector.multi_reduction <add>, %217, %cst_105 [1] : vector<16x48xf32> to vector<16xf32>
    %219 = vector.shape_cast %218 : vector<16xf32> to vector<16x1xf32>
    %c0_106 = arith.constant 0 : index
    %c0_107 = arith.constant 0 : index
    %220 = vector.load %arg31[%c0_106, %c0_107] : memref<16x1xf32, #tpu.memory_space<vmem>>, vector<16x1xf32>
    %221 = arith.addf %219, %220 : vector<16x1xf32>
    %cst_108 = arith.constant 0.000000e+00 : f32
    %222 = vector.broadcast %cst_108 : f32 to vector<16x1xf32>
    %223 = arith.maximumf %221, %222 : vector<16x1xf32>
    %c0_109 = arith.constant 0 : index
    %c0_110 = arith.constant 0 : index
    %224 = vector.load %arg32[%c0_109, %c0_110] : memref<16x64xf32, #tpu.memory_space<vmem>>, vector<16x64xf32>
    %225 = vector.broadcast %223 : vector<16x1xf32> to vector<16x64xf32>
    %226 = arith.mulf %224, %225 : vector<16x64xf32>
    %cst_111 = arith.constant dense<0.000000e+00> : vector<64xf32>
    %227 = vector.multi_reduction <add>, %226, %cst_111 [0] : vector<16x64xf32> to vector<64xf32>
    %228 = vector.shape_cast %227 : vector<64xf32> to vector<1x64xf32>
    %c0_112 = arith.constant 0 : index
    %c0_113 = arith.constant 0 : index
    %229 = vector.load %arg33[%c0_112, %c0_113] : memref<1x64xf32, #tpu.memory_space<vmem>>, vector<1x64xf32>
    %230 = arith.addf %228, %229 : vector<1x64xf32>
    %cst_114 = arith.constant 0.000000e+00 : f32
    %231 = vector.broadcast %cst_114 : f32 to vector<1x64xf32>
    %232 = arith.maximumf %230, %231 : vector<1x64xf32>
    %c0_115 = arith.constant 0 : index
    %c0_116 = arith.constant 0 : index
    %233 = vector.load %arg34[%c0_115, %c0_116] : memref<1x64xf32, #tpu.memory_space<vmem>>, vector<1x64xf32>
    %234 = arith.mulf %233, %232 : vector<1x64xf32>
    %cst_117 = arith.constant dense<0.000000e+00> : vector<1xf32>
    %235 = vector.multi_reduction <add>, %234, %cst_117 [1] : vector<1x64xf32> to vector<1xf32>
    %236 = vector.shape_cast %235 : vector<1xf32> to vector<1x1xf32>
    %c0_118 = arith.constant 0 : index
    %c0_119 = arith.constant 0 : index
    %237 = vector.load %arg35[%c0_118, %c0_119] : memref<1x1xf32, #tpu.memory_space<vmem>>, vector<1x1xf32>
    %238 = arith.addf %236, %237 : vector<1x1xf32>
    %239 = vector.shape_cast %238 : vector<1x1xf32> to vector<1x1x1xf32>
    %c0_120 = arith.constant 0 : index
    %c0_121 = arith.constant 0 : index
    %c0_122 = arith.constant 0 : index
    %240 = vector.load %arg36[%c0_120, %c0_121, %c0_122] : memref<1x1x1xf32, #tpu.memory_space<vmem>>, vector<1x1x1xf32>
    tpu.vector_store %arg36[%c0_120, %c0_121, %c0_122], %239 {strides = array<i32>} : memref<1x1x1xf32, #tpu.memory_space<vmem>>, vector<1x1x1xf32>,
    return
  }
  func.func @transform_0(%arg0: i32) -> (i32, i32, i32) {
    %c0_i32 = arith.constant 0 : i32
    %c0_i32_0 = arith.constant 0 : i32
    %c0_i32_1 = arith.constant 0 : i32
    return %arg0, %c0_i32, %c0_i32_0 : i32, i32, i32
  }
  func.func @transform_1(%arg0: i32) -> (i32, i32) {
    %c0_i32 = arith.constant 0 : i32
    %c0_i32_0 = arith.constant 0 : i32
    %c0_i32_1 = arith.constant 0 : i32
    return %c0_i32, %c0_i32_0 : i32, i32
  }
  func.func @transform_2(%arg0: i32) -> (i32, i32) {
    %c0_i32 = arith.constant 0 : i32
    %c0_i32_0 = arith.constant 0 : i32
    %c0_i32_1 = arith.constant 0 : i32
    return %c0_i32, %c0_i32_0 : i32, i32
  }
  func.func @transform_3(%arg0: i32) -> (i32, i32) {
    %c0_i32 = arith.constant 0 : i32
    %c0_i32_0 = arith.constant 0 : i32
    %c0_i32_1 = arith.constant 0 : i32
    return %c0_i32, %c0_i32_0 : i32, i32
  }
  func.func @transform_4(%arg0: i32) -> (i32, i32) {
    %c0_i32 = arith.constant 0 : i32
    %c0_i32_0 = arith.constant 0 : i32
    %c0_i32_1 = arith.constant 0 : i32
    return %c0_i32, %c0_i32_0 : i32, i32
  }
  func.func @transform_5(%arg0: i32) -> (i32, i32) {
    %c0_i32 = arith.constant 0 : i32
    %c0_i32_0 = arith.constant 0 : i32
    %c0_i32_1 = arith.constant 0 : i32
    return %c0_i32, %c0_i32_0 : i32, i32
  }
  func.func @transform_6(%arg0: i32) -> (i32, i32) {
    %c0_i32 = arith.constant 0 : i32
    %c0_i32_0 = arith.constant 0 : i32
    %c0_i32_1 = arith.constant 0 : i32
    return %c0_i32, %c0_i32_0 : i32, i32
  }
  func.func @transform_7(%arg0: i32) -> (i32, i32) {
    %c0_i32 = arith.constant 0 : i32
    %c0_i32_0 = arith.constant 0 : i32
    %c0_i32_1 = arith.constant 0 : i32
    return %c0_i32, %c0_i32_0 : i32, i32
  }
  func.func @transform_8(%arg0: i32) -> (i32, i32) {
    %c0_i32 = arith.constant 0 : i32
    %c0_i32_0 = arith.constant 0 : i32
    %c0_i32_1 = arith.constant 0 : i32
    return %c0_i32, %c0_i32_0 : i32, i32
  }
  func.func @transform_9(%arg0: i32) -> (i32, i32) {
    %c0_i32 = arith.constant 0 : i32
    %c0_i32_0 = arith.constant 0 : i32
    %c0_i32_1 = arith.constant 0 : i32
    return %c0_i32, %c0_i32_0 : i32, i32
  }
  func.func @transform_10(%arg0: i32) -> (i32, i32) {
    %c0_i32 = arith.constant 0 : i32
    %c0_i32_0 = arith.constant 0 : i32
    %c0_i32_1 = arith.constant 0 : i32
    return %c0_i32, %c0_i32_0 : i32, i32
  }
  func.func @transform_11(%arg0: i32) -> (i32, i32) {
    %c0_i32 = arith.constant 0 : i32
    %c0_i32_0 = arith.constant 0 : i32
    %c0_i32_1 = arith.constant 0 : i32
    return %c0_i32, %c0_i32_0 : i32, i32
  }
  func.func @transform_12(%arg0: i32) -> (i32, i32) {
    %c0_i32 = arith.constant 0 : i32
    %c0_i32_0 = arith.constant 0 : i32
    %c0_i32_1 = arith.constant 0 : i32
    return %c0_i32, %c0_i32_0 : i32, i32
  }
  func.func @transform_13(%arg0: i32) -> (i32, i32) {
    %c0_i32 = arith.constant 0 : i32
    %c0_i32_0 = arith.constant 0 : i32
    %c0_i32_1 = arith.constant 0 : i32
    return %c0_i32, %c0_i32_0 : i32, i32
  }
  func.func @transform_14(%arg0: i32) -> (i32, i32) {
    %c0_i32 = arith.constant 0 : i32
    %c0_i32_0 = arith.constant 0 : i32
    %c0_i32_1 = arith.constant 0 : i32
    return %c0_i32, %c0_i32_0 : i32, i32
  }
  func.func @transform_15(%arg0: i32) -> (i32, i32) {
    %c0_i32 = arith.constant 0 : i32
    %c0_i32_0 = arith.constant 0 : i32
    %c0_i32_1 = arith.constant 0 : i32
    return %c0_i32, %c0_i32_0 : i32, i32
  }
  func.func @transform_16(%arg0: i32) -> (i32, i32) {
    %c0_i32 = arith.constant 0 : i32
    %c0_i32_0 = arith.constant 0 : i32
    %c0_i32_1 = arith.constant 0 : i32
    return %c0_i32, %c0_i32_0 : i32, i32
  }
  func.func @transform_17(%arg0: i32) -> (i32, i32) {
    %c0_i32 = arith.constant 0 : i32
    %c0_i32_0 = arith.constant 0 : i32
    %c0_i32_1 = arith.constant 0 : i32
    return %c0_i32, %c0_i32_0 : i32, i32
  }
  func.func @transform_18(%arg0: i32) -> (i32, i32) {
    %c0_i32 = arith.constant 0 : i32
    %c0_i32_0 = arith.constant 0 : i32
    %c0_i32_1 = arith.constant 0 : i32
    return %c0_i32, %c0_i32_0 : i32, i32
  }
  func.func @transform_19(%arg0: i32) -> (i32, i32) {
    %c0_i32 = arith.constant 0 : i32
    %c0_i32_0 = arith.constant 0 : i32
    %c0_i32_1 = arith.constant 0 : i32
    return %c0_i32, %c0_i32_0 : i32, i32
  }
  func.func @transform_20(%arg0: i32) -> (i32, i32) {
    %c0_i32 = arith.constant 0 : i32
    %c0_i32_0 = arith.constant 0 : i32
    %c0_i32_1 = arith.constant 0 : i32
    return %c0_i32, %c0_i32_0 : i32, i32
  }
  func.func @transform_21(%arg0: i32) -> (i32, i32) {
    %c0_i32 = arith.constant 0 : i32
    %c0_i32_0 = arith.constant 0 : i32
    %c0_i32_1 = arith.constant 0 : i32
    return %c0_i32, %c0_i32_0 : i32, i32
  }
  func.func @transform_22(%arg0: i32) -> (i32, i32) {
    %c0_i32 = arith.constant 0 : i32
    %c0_i32_0 = arith.constant 0 : i32
    %c0_i32_1 = arith.constant 0 : i32
    return %c0_i32, %c0_i32_0 : i32, i32
  }
  func.func @transform_23(%arg0: i32) -> (i32, i32) {
    %c0_i32 = arith.constant 0 : i32
    %c0_i32_0 = arith.constant 0 : i32
    %c0_i32_1 = arith.constant 0 : i32
    return %c0_i32, %c0_i32_0 : i32, i32
  }
  func.func @transform_24(%arg0: i32) -> (i32, i32) {
    %c0_i32 = arith.constant 0 : i32
    %c0_i32_0 = arith.constant 0 : i32
    %c0_i32_1 = arith.constant 0 : i32
    return %c0_i32, %c0_i32_0 : i32, i32
  }
  func.func @transform_25(%arg0: i32) -> (i32, i32) {
    %c0_i32 = arith.constant 0 : i32
    %c0_i32_0 = arith.constant 0 : i32
    %c0_i32_1 = arith.constant 0 : i32
    return %c0_i32, %c0_i32_0 : i32, i32
  }
  func.func @transform_26(%arg0: i32) -> (i32, i32) {
    %c0_i32 = arith.constant 0 : i32
    %c0_i32_0 = arith.constant 0 : i32
    %c0_i32_1 = arith.constant 0 : i32
    return %c0_i32, %c0_i32_0 : i32, i32
  }
  func.func @transform_27(%arg0: i32) -> (i32, i32) {
    %c0_i32 = arith.constant 0 : i32
    %c0_i32_0 = arith.constant 0 : i32
    %c0_i32_1 = arith.constant 0 : i32
    return %c0_i32, %c0_i32_0 : i32, i32
  }
  func.func @transform_28(%arg0: i32) -> (i32, i32) {
    %c0_i32 = arith.constant 0 : i32
    %c0_i32_0 = arith.constant 0 : i32
    %c0_i32_1 = arith.constant 0 : i32
    return %c0_i32, %c0_i32_0 : i32, i32
  }
  func.func @transform_29(%arg0: i32) -> (i32, i32, i32) {
    %c0_i32 = arith.constant 0 : i32
    %c0_i32_0 = arith.constant 0 : i32
    %c0_i32_1 = arith.constant 0 : i32
    %c0_i32_2 = arith.constant 0 : i32
    return %c0_i32, %c0_i32_0, %c0_i32_1 : i32, i32, i32
  }
  func.func @transform_30(%arg0: i32) -> (i32, i32) {
    %c0_i32 = arith.constant 0 : i32
    %c0_i32_0 = arith.constant 0 : i32
    %c0_i32_1 = arith.constant 0 : i32
    return %c0_i32, %c0_i32_0 : i32, i32
  }
  func.func @transform_31(%arg0: i32) -> (i32, i32) {
    %c0_i32 = arith.constant 0 : i32
    %c0_i32_0 = arith.constant 0 : i32
    %c0_i32_1 = arith.constant 0 : i32
    return %c0_i32, %c0_i32_0 : i32, i32
  }
  func.func @transform_32(%arg0: i32) -> (i32, i32) {
    %c0_i32 = arith.constant 0 : i32
    %c0_i32_0 = arith.constant 0 : i32
    %c0_i32_1 = arith.constant 0 : i32
    return %c0_i32, %c0_i32_0 : i32, i32
  }
  func.func @transform_33(%arg0: i32) -> (i32, i32) {
    %c0_i32 = arith.constant 0 : i32
    %c0_i32_0 = arith.constant 0 : i32
    %c0_i32_1 = arith.constant 0 : i32
    return %c0_i32, %c0_i32_0 : i32, i32
  }
  func.func @transform_34(%arg0: i32) -> (i32, i32) {
    %c0_i32 = arith.constant 0 : i32
    %c0_i32_0 = arith.constant 0 : i32
    %c0_i32_1 = arith.constant 0 : i32
    return %c0_i32, %c0_i32_0 : i32, i32
  }
  func.func @transform_35(%arg0: i32) -> (i32, i32, i32) {
    %c0_i32 = arith.constant 0 : i32
    %c0_i32_0 = arith.constant 0 : i32
    %c0_i32_1 = arith.constant 0 : i32
    return %arg0, %c0_i32, %c0_i32_0 : i32, i32, i32
  }
}

</mosaic_0001>

<llo_original>
// kernel: ml4cvd_forward.1
$region0: #{ml4cvd_forward.1}
  #allocation0 [shape = 'u32[]', space=smem, size = 0x4, offset = 0x4, fixed_abs, tag = 'smem constant byte address 0x4 - core index']
  #allocation1 [shape = 'u32[144,128]{1,0:T(1,128)}', space=vmem, size = 0x12000, scoped, tag = 'internal scratch']
  #allocation2 [shape = 'f32[1,1]{1,0:T(1,128)S(1)}', space=vmem, size = 0x200, scoped, tag = 'scoped memory for ml4cvd_forward.1']
  %s0 = inlined_call_operand.smem [shape: u32[36], index: -1, kind: input, shape index: {}]
  %s1 = sld [smem:[%s0]]
  %s2 = scalar_lea.smem %s0, 1
  %s3 = sld [smem:[%s2]]
  %s4 = scalar_lea.smem %s0, 2
  %s5 = sld [smem:[%s4]]
  %s6 = scalar_lea.smem %s0, 3
  %s7 = sld [smem:[%s6]]
  %s8 = scalar_lea.smem %s0, 4
  %s9 = sld [smem:[%s8]]
  %s10 = scalar_lea.smem %s0, 5
  %s11 = sld [smem:[%s10]]
  %s12 = scalar_lea.smem %s0, 6
  %s13 = sld [smem:[%s12]]
  %s14 = scalar_lea.smem %s0, 7
  %s15 = sld [smem:[%s14]]
  %s16 = scalar_lea.smem %s0, 8
  %s17 = sld [smem:[%s16]]
  %s18 = scalar_lea.smem %s0, 9
  %s19 = sld [smem:[%s18]]
  %s20 = scalar_lea.smem %s0, 10
  %s21 = sld [smem:[%s20]]
  %s22 = scalar_lea.smem %s0, 11
  %s23 = sld [smem:[%s22]]
  %s24 = scalar_lea.smem %s0, 12
  %s25 = sld [smem:[%s24]]
  %s26 = scalar_lea.smem %s0, 13
  %s27 = sld [smem:[%s26]]
  %s28 = scalar_lea.smem %s0, 14
  %s29 = sld [smem:[%s28]]
  %s30 = scalar_lea.smem %s0, 15
  %s31 = sld [smem:[%s30]]
  %s32 = scalar_lea.smem %s0, 16
  %s33 = sld [smem:[%s32]]
  %s34 = scalar_lea.smem %s0, 17
  %s35 = sld [smem:[%s34]]
  %s36 = scalar_lea.smem %s0, 18
  %s37 = sld [smem:[%s36]]
  %s38 = scalar_lea.smem %s0, 19
  %s39 = sld [smem:[%s38]]
  %s40 = scalar_lea.smem %s0, 20
  %s41 = sld [smem:[%s40]]
  %s42 = scalar_lea.smem %s0, 21
  %s43 = sld [smem:[%s42]]
  %s44 = scalar_lea.smem %s0, 22
  %s45 = sld [smem:[%s44]]
  %s46 = scalar_lea.smem %s0, 23
  %s47 = sld [smem:[%s46]]
  %s48 = scalar_lea.smem %s0, 24
  %s49 = sld [smem:[%s48]]
  %s50 = scalar_lea.smem %s0, 25
  %s51 = sld [smem:[%s50]]
  %s52 = scalar_lea.smem %s0, 26
  %s53 = sld [smem:[%s52]]
  %s54 = scalar_lea.smem %s0, 27
  %s55 = sld [smem:[%s54]]
  %s56 = scalar_lea.smem %s0, 28
  %s57 = sld [smem:[%s56]]
  %s58 = scalar_lea.smem %s0, 29
  %s59 = sld [smem:[%s58]]
  %s60 = scalar_lea.smem %s0, 30
  %s61 = sld [smem:[%s60]]
  %s62 = scalar_lea.smem %s0, 31
  %s63 = sld [smem:[%s62]]
  %s64 = scalar_lea.smem %s0, 32
  %s65 = sld [smem:[%s64]]
  %s66 = scalar_lea.smem %s0, 33
  %s67 = sld [smem:[%s66]]
  %s68 = scalar_lea.smem %s0, 34
  %s69 = sld [smem:[%s68]]
  %s70 = scalar_lea.smem %s0, 35
  %s71 = sld [smem:[%s70]]
  %s72 = sld [smem:[#allocation0]]
  $region173: #{ml4cvd_forward.1} parent=0
    _
  %s74 = ssub.s32 1, %s72
  %s75 = scalar_select 0, %s74, %s72
  %v76 = vstv %s69
  %77 = vst [vmem:[#allocation2] sm:$0x1] %v76
  loop: start=0, step=1, limit=4
  $region2: #{ml4cvd_forward.1} parent=0 // loop_pre_header
    _
  $region3: #{ml4cvd_forward.1} parent=0 // loop_header
    %s79 = sphi 0, %s83
    %p80 = scmp.ge.s32.totalorder %s79, 4
    %s89 = sphi 0, %s91
    %s92 = sphi 0, %s89
    %s93 = sphi 0, %s92
    %s109 = sphi 0, %s93
    %s113 = sphi 0, %s113
    %s115 = sphi 0, %s113
    %s116 = sphi 0, %s115
    %s130 = sphi 0, %s116
    %s134 = sphi 0, %s134
    %s136 = sphi 0, %s134
    %s137 = sphi 0, %s136
    %s151 = sphi 0, %s137
    %s155 = sphi 0, %s155
    %s157 = sphi 0, %s155
    %s158 = sphi 0, %s157
    %s172 = sphi 0, %s158
    %s176 = sphi 0, %s176
    %s178 = sphi 0, %s176
    %s179 = sphi 0, %s178
    %s193 = sphi 0, %s179
    %s197 = sphi 0, %s197
    %s199 = sphi 0, %s197
    %s200 = sphi 0, %s199
    %s214 = sphi 0, %s200
    %s218 = sphi 0, %s218
    %s220 = sphi 0, %s218
    %s221 = sphi 0, %s220
    %s235 = sphi 0, %s221
    %s239 = sphi 0, %s239
    %s241 = sphi 0, %s239
    %s242 = sphi 0, %s241
    %s256 = sphi 0, %s242
    %s260 = sphi 0, %s260
    %s262 = sphi 0, %s260
    %s263 = sphi 0, %s262
    %s277 = sphi 0, %s263
    %s281 = sphi 0, %s281
    %s283 = sphi 0, %s281
    %s284 = sphi 0, %s283
    %s298 = sphi 0, %s284
    %s302 = sphi 0, %s302
    %s304 = sphi 0, %s302
    %s305 = sphi 0, %s304
    %s319 = sphi 0, %s305
    %s323 = sphi 0, %s323
    %s325 = sphi 0, %s323
    %s326 = sphi 0, %s325
    %s340 = sphi 0, %s326
    %s344 = sphi 0, %s344
    %s346 = sphi 0, %s344
    %s347 = sphi 0, %s346
    %s361 = sphi 0, %s347
    %s365 = sphi 0, %s365
    %s367 = sphi 0, %s365
    %s368 = sphi 0, %s367
    %s382 = sphi 0, %s368
    %s386 = sphi 0, %s386
    %s388 = sphi 0, %s386
    %s389 = sphi 0, %s388
    %s403 = sphi 0, %s389
    %s407 = sphi 0, %s407
    %s409 = sphi 0, %s407
    %s410 = sphi 0, %s409
    %s424 = sphi 0, %s410
    %s428 = sphi 0, %s428
    %s430 = sphi 0, %s428
    %s431 = sphi 0, %s430
    %s445 = sphi 0, %s431
    %s449 = sphi 0, %s449
    %s451 = sphi 0, %s449
    %s452 = sphi 0, %s451
    %s466 = sphi 0, %s452
    %s470 = sphi 0, %s470
    %s472 = sphi 0, %s470
    %s473 = sphi 0, %s472
    %s487 = sphi 0, %s473
    %s491 = sphi 0, %s491
    %s493 = sphi 0, %s491
    %s494 = sphi 0, %s493
    %s508 = sphi 0, %s494
    %s512 = sphi 0, %s512
    %s514 = sphi 0, %s512
    %s515 = sphi 0, %s514
    %s529 = sphi 0, %s515
    %s533 = sphi 0, %s533
    %s535 = sphi 0, %s533
    %s536 = sphi 0, %s535
    %s550 = sphi 0, %s536
    %s554 = sphi 0, %s554
    %s556 = sphi 0, %s554
    %s557 = sphi 0, %s556
    %s571 = sphi 0, %s557
    %s575 = sphi 0, %s575
    %s577 = sphi 0, %s575
    %s578 = sphi 0, %s577
    %s592 = sphi 0, %s578
    %s596 = sphi 0, %s596
    %s598 = sphi 0, %s596
    %s599 = sphi 0, %s598
    %s613 = sphi 0, %s599
    %s617 = sphi 0, %s617
    %s619 = sphi 0, %s617
    %s620 = sphi 0, %s619
    %s634 = sphi 0, %s620
    %s638 = sphi 0, %s638
    %s640 = sphi 0, %s638
    %s641 = sphi 0, %s640
    %s655 = sphi 0, %s641
    %s659 = sphi 0, %s659
    %s661 = sphi 0, %s659
    %s662 = sphi 0, %s661
    %s676 = sphi 0, %s662
    %s680 = sphi 0, %s680
    %s682 = sphi 0, %s680
    %s683 = sphi 0, %s682
    %s697 = sphi 0, %s683
    %s701 = sphi 0, %s701
    %s703 = sphi 0, %s701
    %s704 = sphi 0, %s703
    %s718 = sphi 0, %s704
    %s722 = sphi 0, %s722
    %s724 = sphi 0, %s722
    %s725 = sphi 0, %s724
    %s739 = sphi 0, %s725
    %s743 = sphi 0, %s743
    %s745 = sphi 0, %s743
    %s746 = sphi 0, %s745
    %s760 = sphi 0, %s746
    %s764 = sphi 0, %s764
    %s766 = sphi 0, %s764
    %s767 = sphi 0, %s766
    %s781 = sphi 0, %s767
    %s785 = sphi 0, %s785
    %s787 = sphi 0, %s785
    %s788 = sphi 0, %s787
    %s802 = sphi 0, %s788
    %s806 = sphi 0, %s806
    %s808 = sphi 0, %s806
    %s809 = sphi 0, %s808
    %s823 = sphi 0, %s809
    %s829 = sphi 0, %s831
    %s832 = sphi 0, %s829
    %s833 = sphi 0, %s832
    %s849 = sphi 0, %s833
  $region4: #{ml4cvd_forward.1} parent=0 // loop_header_branch
    %82 = sbr.rel (%p80) target = $region8
  $region5: #{ml4cvd_forward.1} parent=0 // loop_body
    %s84 = ssub.s32 %s79, 1
    %s85 = ssub.s32 %s79, 2
    %s86 = sadd.s32 %s79, 1
    %s87 = ssub.s32 %s79, %s86
    %p88 = scmp.eq.s32.totalorder %s87, 0
    %s90 = sadd.s32 %s89, 1
    %s91 = scalar_select %p88, %s89, %s90
    %p94 = pneg %p88
    %p95 = scmp.eq.s32.totalorder %s79, 1
    %p96 = por %p94, %p95
    %p97 = scmp.ne.s32.totalorder %s89, %s92
    %p98 = scmp.eq.s32.totalorder %s79, 0
    %p99 = por %p97, %p98
    %p100 = scmp.ne.s32.totalorder %s89, %s92
    %p101 = scmp.eq.s32.totalorder %s84, 1
    %p102 = por %p100, %p101
    %p103 = scmp.ne.s32.totalorder %s92, %s93
    %p104 = scmp.eq.s32.totalorder %s84, 0
    %p105 = por %p103, %p104
    %p106 = scmp.ne.s32.totalorder %s92, %s93
    %p107 = scmp.eq.s32.totalorder %s85, 1
    %p108 = por %p106, %p107
    %p110 = scmp.ne.s32.totalorder %s93, %s109
    %p111 = scmp.eq.s32.totalorder %s85, 0
    %p112 = por %p110, %p111
    %s114 = sadd.s32 %s113, 1
    %p117 = scmp.eq.s32.totalorder %s79, 1
    %p118 = scmp.ne.s32.totalorder %s113, %s115
    %p119 = scmp.eq.s32.totalorder %s79, 0
    %p120 = por %p118, %p119
    %p121 = scmp.ne.s32.totalorder %s113, %s115
    %p122 = scmp.eq.s32.totalorder %s84, 1
    %p123 = por %p121, %p122
    %p124 = scmp.ne.s32.totalorder %s115, %s116
    %p125 = scmp.eq.s32.totalorder %s84, 0
    %p126 = por %p124, %p125
    %p127 = scmp.ne.s32.totalorder %s115, %s116
    %p128 = scmp.eq.s32.totalorder %s85, 1
    %p129 = por %p127, %p128
    %p131 = scmp.ne.s32.totalorder %s116, %s130
    %p132 = scmp.eq.s32.totalorder %s85, 0
    %p133 = por %p131, %p132
    %s135 = sadd.s32 %s134, 1
    %p138 = scmp.eq.s32.totalorder %s79, 1
    %p139 = scmp.ne.s32.totalorder %s134, %s136
    %p140 = scmp.eq.s32.totalorder %s79, 0
    %p141 = por %p139, %p140
    %p142 = scmp.ne.s32.totalorder %s134, %s136
    %p143 = scmp.eq.s32.totalorder %s84, 1
    %p144 = por %p142, %p143
    %p145 = scmp.ne.s32.totalorder %s136, %s137
    %p146 = scmp.eq.s32.totalorder %s84, 0
    %p147 = por %p145, %p146
    %p148 = scmp.ne.s32.totalorder %s136, %s137
    %p149 = scmp.eq.s32.totalorder %s85, 1
    %p150 = por %p148, %p149
    %p152 = scmp.ne.s32.totalorder %s137, %s151
    %p153 = scmp.eq.s32.totalorder %s85, 0
    %p154 = por %p152, %p153
    %s156 = sadd.s32 %s155, 1
    %p159 = scmp.eq.s32.totalorder %s79, 1
    %p160 = scmp.ne.s32.totalorder %s155, %s157
    %p161 = scmp.eq.s32.totalorder %s79, 0
    %p162 = por %p160, %p161
    %p163 = scmp.ne.s32.totalorder %s155, %s157
    %p164 = scmp.eq.s32.totalorder %s84, 1
    %p165 = por %p163, %p164
    %p166 = scmp.ne.s32.totalorder %s157, %s158
    %p167 = scmp.eq.s32.totalorder %s84, 0
    %p168 = por %p166, %p167
    %p169 = scmp.ne.s32.totalorder %s157, %s158
    %p170 = scmp.eq.s32.totalorder %s85, 1
    %p171 = por %p169, %p170
    %p173 = scmp.ne.s32.totalorder %s158, %s172
    %p174 = scmp.eq.s32.totalorder %s85, 0
    %p175 = por %p173, %p174
    %s177 = sadd.s32 %s176, 1
    %p180 = scmp.eq.s32.totalorder %s79, 1
    %p181 = scmp.ne.s32.totalorder %s176, %s178
    %p182 = scmp.eq.s32.totalorder %s79, 0
    %p183 = por %p181, %p182
    %p184 = scmp.ne.s32.totalorder %s176, %s178
    %p185 = scmp.eq.s32.totalorder %s84, 1
    %p186 = por %p184, %p185
    %p187 = scmp.ne.s32.totalorder %s178, %s179
    %p188 = scmp.eq.s32.totalorder %s84, 0
    %p189 = por %p187, %p188
    %p190 = scmp.ne.s32.totalorder %s178, %s179
    %p191 = scmp.eq.s32.totalorder %s85, 1
    %p192 = por %p190, %p191
    %p194 = scmp.ne.s32.totalorder %s179, %s193
    %p195 = scmp.eq.s32.totalorder %s85, 0
    %p196 = por %p194, %p195
    %s198 = sadd.s32 %s197, 1
    %p201 = scmp.eq.s32.totalorder %s79, 1
    %p202 = scmp.ne.s32.totalorder %s197, %s199
    %p203 = scmp.eq.s32.totalorder %s79, 0
    %p204 = por %p202, %p203
    %p205 = scmp.ne.s32.totalorder %s197, %s199
    %p206 = scmp.eq.s32.totalorder %s84, 1
    %p207 = por %p205, %p206
    %p208 = scmp.ne.s32.totalorder %s199, %s200
    %p209 = scmp.eq.s32.totalorder %s84, 0
    %p210 = por %p208, %p209
    %p211 = scmp.ne.s32.totalorder %s199, %s200
    %p212 = scmp.eq.s32.totalorder %s85, 1
    %p213 = por %p211, %p212
    %p215 = scmp.ne.s32.totalorder %s200, %s214
    %p216 = scmp.eq.s32.totalorder %s85, 0
    %p217 = por %p215, %p216
    %s219 = sadd.s32 %s218, 1
    %p222 = scmp.eq.s32.totalorder %s79, 1
    %p223 = scmp.ne.s32.totalorder %s218, %s220
    %p224 = scmp.eq.s32.totalorder %s79, 0
    %p225 = por %p223, %p224
    %p226 = scmp.ne.s32.totalorder %s218, %s220
    %p227 = scmp.eq.s32.totalorder %s84, 1
    %p228 = por %p226, %p227
    %p229 = scmp.ne.s32.totalorder %s220, %s221
    %p230 = scmp.eq.s32.totalorder %s84, 0
    %p231 = por %p229, %p230
    %p232 = scmp.ne.s32.totalorder %s220, %s221
    %p233 = scmp.eq.s32.totalorder %s85, 1
    %p234 = por %p232, %p233
    %p236 = scmp.ne.s32.totalorder %s221, %s235
    %p237 = scmp.eq.s32.totalorder %s85, 0
    %p238 = por %p236, %p237
    %s240 = sadd.s32 %s239, 1
    %p243 = scmp.eq.s32.totalorder %s79, 1
    %p244 = scmp.ne.s32.totalorder %s239, %s241
    %p245 = scmp.eq.s32.totalorder %s79, 0
    %p246 = por %p244, %p245
    %p247 = scmp.ne.s32.totalorder %s239, %s241
    %p248 = scmp.eq.s32.totalorder %s84, 1
    %p249 = por %p247, %p248
    %p250 = scmp.ne.s32.totalorder %s241, %s242
    %p251 = scmp.eq.s32.totalorder %s84, 0
    %p252 = por %p250, %p251
    %p253 = scmp.ne.s32.totalorder %s241, %s242
    %p254 = scmp.eq.s32.totalorder %s85, 1
    %p255 = por %p253, %p254
    %p257 = scmp.ne.s32.totalorder %s242, %s256
    %p258 = scmp.eq.s32.totalorder %s85, 0
    %p259 = por %p257, %p258
    %s261 = sadd.s32 %s260, 1
    %p264 = scmp.eq.s32.totalorder %s79, 1
    %p265 = scmp.ne.s32.totalorder %s260, %s262
    %p266 = scmp.eq.s32.totalorder %s79, 0
    %p267 = por %p265, %p266
    %p268 = scmp.ne.s32.totalorder %s260, %s262
    %p269 = scmp.eq.s32.totalorder %s84, 1
    %p270 = por %p268, %p269
    %p271 = scmp.ne.s32.totalorder %s262, %s263
    %p272 = scmp.eq.s32.totalorder %s84, 0
    %p273 = por %p271, %p272
    %p274 = scmp.ne.s32.totalorder %s262, %s263
    %p275 = scmp.eq.s32.totalorder %s85, 1
    %p276 = por %p274, %p275
    %p278 = scmp.ne.s32.totalorder %s263, %s277
    %p279 = scmp.eq.s32.totalorder %s85, 0
    %p280 = por %p278, %p279
    %s282 = sadd.s32 %s281, 1
    %p285 = scmp.eq.s32.totalorder %s79, 1
    %p286 = scmp.ne.s32.totalorder %s281, %s283
    %p287 = scmp.eq.s32.totalorder %s79, 0
    %p288 = por %p286, %p287
    %p289 = scmp.ne.s32.totalorder %s281, %s283
    %p290 = scmp.eq.s32.totalorder %s84, 1
    %p291 = por %p289, %p290
    %p292 = scmp.ne.s32.totalorder %s283, %s284
    %p293 = scmp.eq.s32.totalorder %s84, 0
    %p294 = por %p292, %p293
    %p295 = scmp.ne.s32.totalorder %s283, %s284
    %p296 = scmp.eq.s32.totalorder %s85, 1
    %p297 = por %p295, %p296
    %p299 = scmp.ne.s32.totalorder %s284, %s298
    %p300 = scmp.eq.s32.totalorder %s85, 0
    %p301 = por %p299, %p300
    %s303 = sadd.s32 %s302, 1
    %p306 = scmp.eq.s32.totalorder %s79, 1
    %p307 = scmp.ne.s32.totalorder %s302, %s304
    %p308 = scmp.eq.s32.totalorder %s79, 0
    %p309 = por %p307, %p308
    %p310 = scmp.ne.s32.totalorder %s302, %s304
    %p311 = scmp.eq.s32.totalorder %s84, 1
    %p312 = por %p310, %p311
    %p313 = scmp.ne.s32.totalorder %s304, %s305
    %p314 = scmp.eq.s32.totalorder %s84, 0
    %p315 = por %p313, %p314
    %p316 = scmp.ne.s32.totalorder %s304, %s305
    %p317 = scmp.eq.s32.totalorder %s85, 1
    %p318 = por %p316, %p317
    %p320 = scmp.ne.s32.totalorder %s305, %s319
    %p321 = scmp.eq.s32.totalorder %s85, 0
    %p322 = por %p320, %p321
    %s324 = sadd.s32 %s323, 1
    %p327 = scmp.eq.s32.totalorder %s79, 1
    %p328 = scmp.ne.s32.totalorder %s323, %s325
    %p329 = scmp.eq.s32.totalorder %s79, 0
    %p330 = por %p328, %p329
    %p331 = scmp.ne.s32.totalorder %s323, %s325
    %p332 = scmp.eq.s32.totalorder %s84, 1
    %p333 = por %p331, %p332
    %p334 = scmp.ne.s32.totalorder %s325, %s326
    %p335 = scmp.eq.s32.totalorder %s84, 0
    %p336 = por %p334, %p335
    %p337 = scmp.ne.s32.totalorder %s325, %s326
    %p338 = scmp.eq.s32.totalorder %s85, 1
    %p339 = por %p337, %p338
    %p341 = scmp.ne.s32.totalorder %s326, %s340
    %p342 = scmp.eq.s32.totalorder %s85, 0
    %p343 = por %p341, %p342
    %s345 = sadd.s32 %s344, 1
    %p348 = scmp.eq.s32.totalorder %s79, 1
    %p349 = scmp.ne.s32.totalorder %s344, %s346
    %p350 = scmp.eq.s32.totalorder %s79, 0
    %p351 = por %p349, %p350
    %p352 = scmp.ne.s32.totalorder %s344, %s346
    %p353 = scmp.eq.s32.totalorder %s84, 1
    %p354 = por %p352, %p353
    %p355 = scmp.ne.s32.totalorder %s346, %s347
    %p356 = scmp.eq.s32.totalorder %s84, 0
    %p357 = por %p355, %p356
    %p358 = scmp.ne.s32.totalorder %s346, %s347
    %p359 = scmp.eq.s32.totalorder %s85, 1
    %p360 = por %p358, %p359
    %p362 = scmp.ne.s32.totalorder %s347, %s361
    %p363 = scmp.eq.s32.totalorder %s85, 0
    %p364 = por %p362, %p363
    %s366 = sadd.s32 %s365, 1
    %p369 = scmp.eq.s32.totalorder %s79, 1
    %p370 = scmp.ne.s32.totalorder %s365, %s367
    %p371 = scmp.eq.s32.totalorder %s79, 0
    %p372 = por %p370, %p371
    %p373 = scmp.ne.s32.totalorder %s365, %s367
    %p374 = scmp.eq.s32.totalorder %s84, 1
    %p375 = por %p373, %p374
    %p376 = scmp.ne.s32.totalorder %s367, %s368
    %p377 = scmp.eq.s32.totalorder %s84, 0
    %p378 = por %p376, %p377
    %p379 = scmp.ne.s32.totalorder %s367, %s368
    %p380 = scmp.eq.s32.totalorder %s85, 1
    %p381 = por %p379, %p380
    %p383 = scmp.ne.s32.totalorder %s368, %s382
    %p384 = scmp.eq.s32.totalorder %s85, 0
    %p385 = por %p383, %p384
    %s387 = sadd.s32 %s386, 1
    %p390 = scmp.eq.s32.totalorder %s79, 1
    %p391 = scmp.ne.s32.totalorder %s386, %s388
    %p392 = scmp.eq.s32.totalorder %s79, 0
    %p393 = por %p391, %p392
    %p394 = scmp.ne.s32.totalorder %s386, %s388
    %p395 = scmp.eq.s32.totalorder %s84, 1
    %p396 = por %p394, %p395
    %p397 = scmp.ne.s32.totalorder %s388, %s389
    %p398 = scmp.eq.s32.totalorder %s84, 0
    %p399 = por %p397, %p398
    %p400 = scmp.ne.s32.totalorder %s388, %s389
    %p401 = scmp.eq.s32.totalorder %s85, 1
    %p402 = por %p400, %p401
    %p404 = scmp.ne.s32.totalorder %s389, %s403
    %p405 = scmp.eq.s32.totalorder %s85, 0
    %p406 = por %p404, %p405
    %s408 = sadd.s32 %s407, 1
    %p411 = scmp.eq.s32.totalorder %s79, 1
    %p412 = scmp.ne.s32.totalorder %s407, %s409
    %p413 = scmp.eq.s32.totalorder %s79, 0
    %p414 = por %p412, %p413
    %p415 = scmp.ne.s32.totalorder %s407, %s409
    %p416 = scmp.eq.s32.totalorder %s84, 1
    %p417 = por %p415, %p416
    %p418 = scmp.ne.s32.totalorder %s409, %s410
    %p419 = scmp.eq.s32.totalorder %s84, 0
    %p420 = por %p418, %p419
    %p421 = scmp.ne.s32.totalorder %s409, %s410
    %p422 = scmp.eq.s32.totalorder %s85, 1
    %p423 = por %p421, %p422
    %p425 = scmp.ne.s32.totalorder %s410, %s424
    %p426 = scmp.eq.s32.totalorder %s85, 0
    %p427 = por %p425, %p426
    %s429 = sadd.s32 %s428, 1
    %p432 = scmp.eq.s32.totalorder %s79, 1
    %p433 = scmp.ne.s32.totalorder %s428, %s430
    %p434 = scmp.eq.s32.totalorder %s79, 0
    %p435 = por %p433, %p434
    %p436 = scmp.ne.s32.totalorder %s428, %s430
    %p437 = scmp.eq.s32.totalorder %s84, 1
    %p438 = por %p436, %p437
    %p439 = scmp.ne.s32.totalorder %s430, %s431
    %p440 = scmp.eq.s32.totalorder %s84, 0
    %p441 = por %p439, %p440
    %p442 = scmp.ne.s32.totalorder %s430, %s431
    %p443 = scmp.eq.s32.totalorder %s85, 1
    %p444 = por %p442, %p443
    %p446 = scmp.ne.s32.totalorder %s431, %s445
    %p447 = scmp.eq.s32.totalorder %s85, 0
    %p448 = por %p446, %p447
    %s450 = sadd.s32 %s449, 1
    %p453 = scmp.eq.s32.totalorder %s79, 1
    %p454 = scmp.ne.s32.totalorder %s449, %s451
    %p455 = scmp.eq.s32.totalorder %s79, 0
    %p456 = por %p454, %p455
    %p457 = scmp.ne.s32.totalorder %s449, %s451
    %p458 = scmp.eq.s32.totalorder %s84, 1
    %p459 = por %p457, %p458
    %p460 = scmp.ne.s32.totalorder %s451, %s452
    %p461 = scmp.eq.s32.totalorder %s84, 0
    %p462 = por %p460, %p461
    %p463 = scmp.ne.s32.totalorder %s451, %s452
    %p464 = scmp.eq.s32.totalorder %s85, 1
    %p465 = por %p463, %p464
    %p467 = scmp.ne.s32.totalorder %s452, %s466
    %p468 = scmp.eq.s32.totalorder %s85, 0
    %p469 = por %p467, %p468
    %s471 = sadd.s32 %s470, 1
    %p474 = scmp.eq.s32.totalorder %s79, 1
    %p475 = scmp.ne.s32.totalorder %s470, %s472
    %p476 = scmp.eq.s32.totalorder %s79, 0
    %p477 = por %p475, %p476
    %p478 = scmp.ne.s32.totalorder %s470, %s472
    %p479 = scmp.eq.s32.totalorder %s84, 1
    %p480 = por %p478, %p479
    %p481 = scmp.ne.s32.totalorder %s472, %s473
    %p482 = scmp.eq.s32.totalorder %s84, 0
    %p483 = por %p481, %p482
    %p484 = scmp.ne.s32.totalorder %s472, %s473
    %p485 = scmp.eq.s32.totalorder %s85, 1
    %p486 = por %p484, %p485
    %p488 = scmp.ne.s32.totalorder %s473, %s487
    %p489 = scmp.eq.s32.totalorder %s85, 0
    %p490 = por %p488, %p489
    %s492 = sadd.s32 %s491, 1
    %p495 = scmp.eq.s32.totalorder %s79, 1
    %p496 = scmp.ne.s32.totalorder %s491, %s493
    %p497 = scmp.eq.s32.totalorder %s79, 0
    %p498 = por %p496, %p497
    %p499 = scmp.ne.s32.totalorder %s491, %s493
    %p500 = scmp.eq.s32.totalorder %s84, 1
    %p501 = por %p499, %p500
    %p502 = scmp.ne.s32.totalorder %s493, %s494
    %p503 = scmp.eq.s32.totalorder %s84, 0
    %p504 = por %p502, %p503
    %p505 = scmp.ne.s32.totalorder %s493, %s494
    %p506 = scmp.eq.s32.totalorder %s85, 1
    %p507 = por %p505, %p506
    %p509 = scmp.ne.s32.totalorder %s494, %s508
    %p510 = scmp.eq.s32.totalorder %s85, 0
    %p511 = por %p509, %p510
    %s513 = sadd.s32 %s512, 1
    %p516 = scmp.eq.s32.totalorder %s79, 1
    %p517 = scmp.ne.s32.totalorder %s512, %s514
    %p518 = scmp.eq.s32.totalorder %s79, 0
    %p519 = por %p517, %p518
    %p520 = scmp.ne.s32.totalorder %s512, %s514
    %p521 = scmp.eq.s32.totalorder %s84, 1
    %p522 = por %p520, %p521
    %p523 = scmp.ne.s32.totalorder %s514, %s515
    %p524 = scmp.eq.s32.totalorder %s84, 0
    %p525 = por %p523, %p524
    %p526 = scmp.ne.s32.totalorder %s514, %s515
    %p527 = scmp.eq.s32.totalorder %s85, 1
    %p528 = por %p526, %p527
    %p530 = scmp.ne.s32.totalorder %s515, %s529
    %p531 = scmp.eq.s32.totalorder %s85, 0
    %p532 = por %p530, %p531
    %s534 = sadd.s32 %s533, 1
    %p537 = scmp.eq.s32.totalorder %s79, 1
    %p538 = scmp.ne.s32.totalorder %s533, %s535
    %p539 = scmp.eq.s32.totalorder %s79, 0
    %p540 = por %p538, %p539
    %p541 = scmp.ne.s32.totalorder %s533, %s535
    %p542 = scmp.eq.s32.totalorder %s84, 1
    %p543 = por %p541, %p542
    %p544 = scmp.ne.s32.totalorder %s535, %s536
    %p545 = scmp.eq.s32.totalorder %s84, 0
    %p546 = por %p544, %p545
    %p547 = scmp.ne.s32.totalorder %s535, %s536
    %p548 = scmp.eq.s32.totalorder %s85, 1
    %p549 = por %p547, %p548
    %p551 = scmp.ne.s32.totalorder %s536, %s550
    %p552 = scmp.eq.s32.totalorder %s85, 0
    %p553 = por %p551, %p552
    %s555 = sadd.s32 %s554, 1
    %p558 = scmp.eq.s32.totalorder %s79, 1
    %p559 = scmp.ne.s32.totalorder %s554, %s556
    %p560 = scmp.eq.s32.totalorder %s79, 0
    %p561 = por %p559, %p560
    %p562 = scmp.ne.s32.totalorder %s554, %s556
    %p563 = scmp.eq.s32.totalorder %s84, 1
    %p564 = por %p562, %p563
    %p565 = scmp.ne.s32.totalorder %s556, %s557
    %p566 = scmp.eq.s32.totalorder %s84, 0
    %p567 = por %p565, %p566
    %p568 = scmp.ne.s32.totalorder %s556, %s557
    %p569 = scmp.eq.s32.totalorder %s85, 1
    %p570 = por %p568, %p569
    %p572 = scmp.ne.s32.totalorder %s557, %s571
    %p573 = scmp.eq.s32.totalorder %s85, 0
    %p574 = por %p572, %p573
    %s576 = sadd.s32 %s575, 1
    %p579 = scmp.eq.s32.totalorder %s79, 1
    %p580 = scmp.ne.s32.totalorder %s575, %s577
    %p581 = scmp.eq.s32.totalorder %s79, 0
    %p582 = por %p580, %p581
    %p583 = scmp.ne.s32.totalorder %s575, %s577
    %p584 = scmp.eq.s32.totalorder %s84, 1
    %p585 = por %p583, %p584
    %p586 = scmp.ne.s32.totalorder %s577, %s578
    %p587 = scmp.eq.s32.totalorder %s84, 0
    %p588 = por %p586, %p587
    %p589 = scmp.ne.s32.totalorder %s577, %s578
    %p590 = scmp.eq.s32.totalorder %s85, 1
    %p591 = por %p589, %p590
    %p593 = scmp.ne.s32.totalorder %s578, %s592
    %p594 = scmp.eq.s32.totalorder %s85, 0
    %p595 = por %p593, %p594
    %s597 = sadd.s32 %s596, 1
    %p600 = scmp.eq.s32.totalorder %s79, 1
    %p601 = scmp.ne.s32.totalorder %s596, %s598
    %p602 = scmp.eq.s32.totalorder %s79, 0
    %p603 = por %p601, %p602
    %p604 = scmp.ne.s32.totalorder %s596, %s598
    %p605 = scmp.eq.s32.totalorder %s84, 1
    %p606 = por %p604, %p605
    %p607 = scmp.ne.s32.totalorder %s598, %s599
    %p608 = scmp.eq.s32.totalorder %s84, 0
    %p609 = por %p607, %p608
    %p610 = scmp.ne.s32.totalorder %s598, %s599
    %p611 = scmp.eq.s32.totalorder %s85, 1
    %p612 = por %p610, %p611
    %p614 = scmp.ne.s32.totalorder %s599, %s613
    %p615 = scmp.eq.s32.totalorder %s85, 0
    %p616 = por %p614, %p615
    %s618 = sadd.s32 %s617, 1
    %p621 = scmp.eq.s32.totalorder %s79, 1
    %p622 = scmp.ne.s32.totalorder %s617, %s619
    %p623 = scmp.eq.s32.totalorder %s79, 0
    %p624 = por %p622, %p623
    %p625 = scmp.ne.s32.totalorder %s617, %s619
    %p626 = scmp.eq.s32.totalorder %s84, 1
    %p627 = por %p625, %p626
    %p628 = scmp.ne.s32.totalorder %s619, %s620
    %p629 = scmp.eq.s32.totalorder %s84, 0
    %p630 = por %p628, %p629
    %p631 = scmp.ne.s32.totalorder %s619, %s620
    %p632 = scmp.eq.s32.totalorder %s85, 1
    %p633 = por %p631, %p632
    %p635 = scmp.ne.s32.totalorder %s620, %s634
    %p636 = scmp.eq.s32.totalorder %s85, 0
    %p637 = por %p635, %p636
    %s639 = sadd.s32 %s638, 1
    %p642 = scmp.eq.s32.totalorder %s79, 1
    %p643 = scmp.ne.s32.totalorder %s638, %s640
    %p644 = scmp.eq.s32.totalorder %s79, 0
    %p645 = por %p643, %p644
    %p646 = scmp.ne.s32.totalorder %s638, %s640
    %p647 = scmp.eq.s32.totalorder %s84, 1
    %p648 = por %p646, %p647
    %p649 = scmp.ne.s32.totalorder %s640, %s641
    %p650 = scmp.eq.s32.totalorder %s84, 0
    %p651 = por %p649, %p650
    %p652 = scmp.ne.s32.totalorder %s640, %s641
    %p653 = scmp.eq.s32.totalorder %s85, 1
    %p654 = por %p652, %p653
    %p656 = scmp.ne.s32.totalorder %s641, %s655
    %p657 = scmp.eq.s32.totalorder %s85, 0
    %p658 = por %p656, %p657
    %s660 = sadd.s32 %s659, 1
    %p663 = scmp.eq.s32.totalorder %s79, 1
    %p664 = scmp.ne.s32.totalorder %s659, %s661
    %p665 = scmp.eq.s32.totalorder %s79, 0
    %p666 = por %p664, %p665
    %p667 = scmp.ne.s32.totalorder %s659, %s661
    %p668 = scmp.eq.s32.totalorder %s84, 1
    %p669 = por %p667, %p668
    %p670 = scmp.ne.s32.totalorder %s661, %s662
    %p671 = scmp.eq.s32.totalorder %s84, 0
    %p672 = por %p670, %p671
    %p673 = scmp.ne.s32.totalorder %s661, %s662
    %p674 = scmp.eq.s32.totalorder %s85, 1
    %p675 = por %p673, %p674
    %p677 = scmp.ne.s32.totalorder %s662, %s676
    %p678 = scmp.eq.s32.totalorder %s85, 0
    %p679 = por %p677, %p678
    %s681 = sadd.s32 %s680, 1
    %p684 = scmp.eq.s32.totalorder %s79, 1
    %p685 = scmp.ne.s32.totalorder %s680, %s682
    %p686 = scmp.eq.s32.totalorder %s79, 0
    %p687 = por %p685, %p686
    %p688 = scmp.ne.s32.totalorder %s680, %s682
    %p689 = scmp.eq.s32.totalorder %s84, 1
    %p690 = por %p688, %p689
    %p691 = scmp.ne.s32.totalorder %s682, %s683
    %p692 = scmp.eq.s32.totalorder %s84, 0
    %p693 = por %p691, %p692
    %p694 = scmp.ne.s32.totalorder %s682, %s683
    %p695 = scmp.eq.s32.totalorder %s85, 1
    %p696 = por %p694, %p695
    %p698 = scmp.ne.s32.totalorder %s683, %s697
    %p699 = scmp.eq.s32.totalorder %s85, 0
    %p700 = por %p698, %p699
    %s702 = sadd.s32 %s701, 1
    %p705 = scmp.eq.s32.totalorder %s79, 1
    %p706 = scmp.ne.s32.totalorder %s701, %s703
    %p707 = scmp.eq.s32.totalorder %s79, 0
    %p708 = por %p706, %p707
    %p709 = scmp.ne.s32.totalorder %s701, %s703
    %p710 = scmp.eq.s32.totalorder %s84, 1
    %p711 = por %p709, %p710
    %p712 = scmp.ne.s32.totalorder %s703, %s704
    %p713 = scmp.eq.s32.totalorder %s84, 0
    %p714 = por %p712, %p713
    %p715 = scmp.ne.s32.totalorder %s703, %s704
    %p716 = scmp.eq.s32.totalorder %s85, 1
    %p717 = por %p715, %p716
    %p719 = scmp.ne.s32.totalorder %s704, %s718
    %p720 = scmp.eq.s32.totalorder %s85, 0
    %p721 = por %p719, %p720
    %s723 = sadd.s32 %s722, 1
    %p726 = scmp.eq.s32.totalorder %s79, 1
    %p727 = scmp.ne.s32.totalorder %s722, %s724
    %p728 = scmp.eq.s32.totalorder %s79, 0
    %p729 = por %p727, %p728
    %p730 = scmp.ne.s32.totalorder %s722, %s724
    %p731 = scmp.eq.s32.totalorder %s84, 1
    %p732 = por %p730, %p731
    %p733 = scmp.ne.s32.totalorder %s724, %s725
    %p734 = scmp.eq.s32.totalorder %s84, 0
    %p735 = por %p733, %p734
    %p736 = scmp.ne.s32.totalorder %s724, %s725
    %p737 = scmp.eq.s32.totalorder %s85, 1
    %p738 = por %p736, %p737
    %p740 = scmp.ne.s32.totalorder %s725, %s739
    %p741 = scmp.eq.s32.totalorder %s85, 0
    %p742 = por %p740, %p741
    %s744 = sadd.s32 %s743, 1
    %p747 = scmp.eq.s32.totalorder %s79, 1
    %p748 = scmp.ne.s32.totalorder %s743, %s745
    %p749 = scmp.eq.s32.totalorder %s79, 0
    %p750 = por %p748, %p749
    %p751 = scmp.ne.s32.totalorder %s743, %s745
    %p752 = scmp.eq.s32.totalorder %s84, 1
    %p753 = por %p751, %p752
    %p754 = scmp.ne.s32.totalorder %s745, %s746
    %p755 = scmp.eq.s32.totalorder %s84, 0
    %p756 = por %p754, %p755
    %p757 = scmp.ne.s32.totalorder %s745, %s746
    %p758 = scmp.eq.s32.totalorder %s85, 1
    %p759 = por %p757, %p758
    %p761 = scmp.ne.s32.totalorder %s746, %s760
    %p762 = scmp.eq.s32.totalorder %s85, 0
    %p763 = por %p761, %p762
    %s765 = sadd.s32 %s764, 1
    %p768 = scmp.eq.s32.totalorder %s79, 1
    %p769 = scmp.ne.s32.totalorder %s764, %s766
    %p770 = scmp.eq.s32.totalorder %s79, 0
    %p771 = por %p769, %p770
    %p772 = scmp.ne.s32.totalorder %s764, %s766
    %p773 = scmp.eq.s32.totalorder %s84, 1
    %p774 = por %p772, %p773
    %p775 = scmp.ne.s32.totalorder %s766, %s767
    %p776 = scmp.eq.s32.totalorder %s84, 0
    %p777 = por %p775, %p776
    %p778 = scmp.ne.s32.totalorder %s766, %s767
    %p779 = scmp.eq.s32.totalorder %s85, 1
    %p780 = por %p778, %p779
    %p782 = scmp.ne.s32.totalorder %s767, %s781
    %p783 = scmp.eq.s32.totalorder %s85, 0
    %p784 = por %p782, %p783
    %s786 = sadd.s32 %s785, 1
    %p789 = scmp.eq.s32.totalorder %s79, 1
    %p790 = scmp.ne.s32.totalorder %s785, %s787
    %p791 = scmp.eq.s32.totalorder %s79, 0
    %p792 = por %p790, %p791
    %p793 = scmp.ne.s32.totalorder %s785, %s787
    %p794 = scmp.eq.s32.totalorder %s84, 1
    %p795 = por %p793, %p794
    %p796 = scmp.ne.s32.totalorder %s787, %s788
    %p797 = scmp.eq.s32.totalorder %s84, 0
    %p798 = por %p796, %p797
    %p799 = scmp.ne.s32.totalorder %s787, %s788
    %p800 = scmp.eq.s32.totalorder %s85, 1
    %p801 = por %p799, %p800
    %p803 = scmp.ne.s32.totalorder %s788, %s802
    %p804 = scmp.eq.s32.totalorder %s85, 0
    %p805 = por %p803, %p804
    %s807 = sadd.s32 %s806, 1
    %p810 = scmp.eq.s32.totalorder %s79, 1
    %p811 = scmp.ne.s32.totalorder %s806, %s808
    %p812 = scmp.eq.s32.totalorder %s79, 0
    %p813 = por %p811, %p812
    %p814 = scmp.ne.s32.totalorder %s806, %s808
    %p815 = scmp.eq.s32.totalorder %s84, 1
    %p816 = por %p814, %p815
    %p817 = scmp.ne.s32.totalorder %s808, %s809
    %p818 = scmp.eq.s32.totalorder %s84, 0
    %p819 = por %p817, %p818
    %p820 = scmp.ne.s32.totalorder %s808, %s809
    %p821 = scmp.eq.s32.totalorder %s85, 1
    %p822 = por %p820, %p821
    %p824 = scmp.ne.s32.totalorder %s809, %s823
    %p825 = scmp.eq.s32.totalorder %s85, 0
    %p826 = por %p824, %p825
    %s827 = ssub.s32 %s79, %s86
    %p828 = scmp.eq.s32.totalorder %s827, 0
    %s830 = sadd.s32 %s829, 1
    %s831 = scalar_select %p828, %s829, %s830
    %p834 = pneg %p828
    %p835 = scmp.eq.s32.totalorder %s79, 1
    %p836 = por %p834, %p835
    %p837 = scmp.ne.s32.totalorder %s829, %s832
    %p838 = scmp.eq.s32.totalorder %s79, 0
    %p839 = por %p837, %p838
    %p840 = scmp.ne.s32.totalorder %s829, %s832
    %p841 = scmp.eq.s32.totalorder %s84, 1
    %p842 = por %p840, %p841
    %p843 = scmp.ne.s32.totalorder %s832, %s833
    %p844 = scmp.eq.s32.totalorder %s84, 0
    %p845 = por %p843, %p844
    %p846 = scmp.ne.s32.totalorder %s832, %s833
    %p847 = scmp.eq.s32.totalorder %s85, 1
    %p848 = por %p846, %p847
    %p850 = scmp.ne.s32.totalorder %s833, %s849
    %p851 = scmp.eq.s32.totalorder %s85, 0
    %p852 = por %p850, %p851
    %p853 = scmp.le.s32.totalorder 1, %s79
    %p854 = scmp.lt.s32.totalorder %s79, 3
    %p855 = pnand %p853, %p854
    %p856 = pneg %p855
    // Predicated region
    $region9: #{ml4cvd_forward.1} parent=5 // pred_check
      _
    $region10: #{ml4cvd_forward.1} parent=5 // pred_check_branch
      %858 = sbr.rel (%p855) target = $region12
    $region11: #{ml4cvd_forward.1} parent=5 // pred_region
      %s859 = ssub.s32 %s79, 1
      // Predicated region
      $region13: #{ml4cvd_forward.1} parent=11 // pred_check
        %p860 = pneg %p126
      $region14: #{ml4cvd_forward.1} parent=11 // pred_check_branch
        %862 = sbr.rel (%p860) target = $region16
      $region15: #{ml4cvd_forward.1} parent=11 // pred_region
        _
      $region16: #{ml4cvd_forward.1} parent=11 // pred_fallthru
        _
      // Predicated region
      $region17: #{ml4cvd_forward.1} parent=11 // pred_check
        %p863 = pneg %p147
      $region18: #{ml4cvd_forward.1} parent=11 // pred_check_branch
        %865 = sbr.rel (%p863) target = $region20
      $region19: #{ml4cvd_forward.1} parent=11 // pred_region
        _
      $region20: #{ml4cvd_forward.1} parent=11 // pred_fallthru
        _
      // Predicated region
      $region21: #{ml4cvd_forward.1} parent=11 // pred_check
        %p866 = pneg %p168
      $region22: #{ml4cvd_forward.1} parent=11 // pred_check_branch
        %868 = sbr.rel (%p866) target = $region24
      $region23: #{ml4cvd_forward.1} parent=11 // pred_region
        _
      $region24: #{ml4cvd_forward.1} parent=11 // pred_fallthru
        _
      // Predicated region
      $region25: #{ml4cvd_forward.1} parent=11 // pred_check
        %p869 = pneg %p189
      $region26: #{ml4cvd_forward.1} parent=11 // pred_check_branch
        %871 = sbr.rel (%p869) target = $region28
      $region27: #{ml4cvd_forward.1} parent=11 // pred_region
        _
      $region28: #{ml4cvd_forward.1} parent=11 // pred_fallthru
        _
      // Predicated region
      $region29: #{ml4cvd_forward.1} parent=11 // pred_check
        %p872 = pneg %p210
      $region30: #{ml4cvd_forward.1} parent=11 // pred_check_branch
        %874 = sbr.rel (%p872) target = $region32
      $region31: #{ml4cvd_forward.1} parent=11 // pred_region
        _
      $region32: #{ml4cvd_forward.1} parent=11 // pred_fallthru
        _
      // Predicated region
      $region33: #{ml4cvd_forward.1} parent=11 // pred_check
        %p875 = pneg %p231
      $region34: #{ml4cvd_forward.1} parent=11 // pred_check_branch
        %877 = sbr.rel (%p875) target = $region36
      $region35: #{ml4cvd_forward.1} parent=11 // pred_region
        _
      $region36: #{ml4cvd_forward.1} parent=11 // pred_fallthru
        _
      // Predicated region
      $region37: #{ml4cvd_forward.1} parent=11 // pred_check
        %p878 = pneg %p252
      $region38: #{ml4cvd_forward.1} parent=11 // pred_check_branch
        %880 = sbr.rel (%p878) target = $region40
      $region39: #{ml4cvd_forward.1} parent=11 // pred_region
        _
      $region40: #{ml4cvd_forward.1} parent=11 // pred_fallthru
        _
      // Predicated region
      $region41: #{ml4cvd_forward.1} parent=11 // pred_check
        %p881 = pneg %p273
      $region42: #{ml4cvd_forward.1} parent=11 // pred_check_branch
        %883 = sbr.rel (%p881) target = $region44
      $region43: #{ml4cvd_forward.1} parent=11 // pred_region
        _
      $region44: #{ml4cvd_forward.1} parent=11 // pred_fallthru
        _
      // Predicated region
      $region45: #{ml4cvd_forward.1} parent=11 // pred_check
        %p884 = pneg %p294
      $region46: #{ml4cvd_forward.1} parent=11 // pred_check_branch
        %886 = sbr.rel (%p884) target = $region48
      $region47: #{ml4cvd_forward.1} parent=11 // pred_region
        _
      $region48: #{ml4cvd_forward.1} parent=11 // pred_fallthru
        _
      // Predicated region
      $region49: #{ml4cvd_forward.1} parent=11 // pred_check
        %p887 = pneg %p315
      $region50: #{ml4cvd_forward.1} parent=11 // pred_check_branch
        %889 = sbr.rel (%p887) target = $region52
      $region51: #{ml4cvd_forward.1} parent=11 // pred_region
        _
      $region52: #{ml4cvd_forward.1} parent=11 // pred_fallthru
        _
      // Predicated region
      $region53: #{ml4cvd_forward.1} parent=11 // pred_check
        %p890 = pneg %p336
      $region54: #{ml4cvd_forward.1} parent=11 // pred_check_branch
        %892 = sbr.rel (%p890) target = $region56
      $region55: #{ml4cvd_forward.1} parent=11 // pred_region
        _
      $region56: #{ml4cvd_forward.1} parent=11 // pred_fallthru
        _
      // Predicated region
      $region57: #{ml4cvd_forward.1} parent=11 // pred_check
        %p893 = pneg %p357
      $region58: #{ml4cvd_forward.1} parent=11 // pred_check_branch
        %895 = sbr.rel (%p893) target = $region60
      $region59: #{ml4cvd_forward.1} parent=11 // pred_region
        _
      $region60: #{ml4cvd_forward.1} parent=11 // pred_fallthru
        _
      // Predicated region
      $region61: #{ml4cvd_forward.1} parent=11 // pred_check
        %p896 = pneg %p378
      $region62: #{ml4cvd_forward.1} parent=11 // pred_check_branch
        %898 = sbr.rel (%p896) target = $region64
      $region63: #{ml4cvd_forward.1} parent=11 // pred_region
        _
      $region64: #{ml4cvd_forward.1} parent=11 // pred_fallthru
        _
      // Predicated region
      $region65: #{ml4cvd_forward.1} parent=11 // pred_check
        %p899 = pneg %p399
      $region66: #{ml4cvd_forward.1} parent=11 // pred_check_branch
        %901 = sbr.rel (%p899) target = $region68
      $region67: #{ml4cvd_forward.1} parent=11 // pred_region
        _
      $region68: #{ml4cvd_forward.1} parent=11 // pred_fallthru
        _
      // Predicated region
      $region69: #{ml4cvd_forward.1} parent=11 // pred_check
        %p902 = pneg %p420
      $region70: #{ml4cvd_forward.1} parent=11 // pred_check_branch
        %904 = sbr.rel (%p902) target = $region72
      $region71: #{ml4cvd_forward.1} parent=11 // pred_region
        _
      $region72: #{ml4cvd_forward.1} parent=11 // pred_fallthru
        _
      // Predicated region
      $region73: #{ml4cvd_forward.1} parent=11 // pred_check
        %p905 = pneg %p441
      $region74: #{ml4cvd_forward.1} parent=11 // pred_check_branch
        %907 = sbr.rel (%p905) target = $region76
      $region75: #{ml4cvd_forward.1} parent=11 // pred_region
        _
      $region76: #{ml4cvd_forward.1} parent=11 // pred_fallthru
        _
      // Predicated region
      $region77: #{ml4cvd_forward.1} parent=11 // pred_check
        %p908 = pneg %p462
      $region78: #{ml4cvd_forward.1} parent=11 // pred_check_branch
        %910 = sbr.rel (%p908) target = $region80
      $region79: #{ml4cvd_forward.1} parent=11 // pred_region
        _
      $region80: #{ml4cvd_forward.1} parent=11 // pred_fallthru
        _
      // Predicated region
      $region81: #{ml4cvd_forward.1} parent=11 // pred_check
        %p911 = pneg %p483
      $region82: #{ml4cvd_forward.1} parent=11 // pred_check_branch
        %913 = sbr.rel (%p911) target = $region84
      $region83: #{ml4cvd_forward.1} parent=11 // pred_region
        _
      $region84: #{ml4cvd_forward.1} parent=11 // pred_fallthru
        _
      // Predicated region
      $region85: #{ml4cvd_forward.1} parent=11 // pred_check
        %p914 = pneg %p504
      $region86: #{ml4cvd_forward.1} parent=11 // pred_check_branch
        %916 = sbr.rel (%p914) target = $region88
      $region87: #{ml4cvd_forward.1} parent=11 // pred_region
        _
      $region88: #{ml4cvd_forward.1} parent=11 // pred_fallthru
        _
      // Predicated region
      $region89: #{ml4cvd_forward.1} parent=11 // pred_check
        %p917 = pneg %p525
      $region90: #{ml4cvd_forward.1} parent=11 // pred_check_branch
        %919 = sbr.rel (%p917) target = $region92
      $region91: #{ml4cvd_forward.1} parent=11 // pred_region
        _
      $region92: #{ml4cvd_forward.1} parent=11 // pred_fallthru
        _
      // Predicated region
      $region93: #{ml4cvd_forward.1} parent=11 // pred_check
        %p920 = pneg %p546
      $region94: #{ml4cvd_forward.1} parent=11 // pred_check_branch
        %922 = sbr.rel (%p920) target = $region96
      $region95: #{ml4cvd_forward.1} parent=11 // pred_region
        _
      $region96: #{ml4cvd_forward.1} parent=11 // pred_fallthru
        _
      // Predicated region
      $region97: #{ml4cvd_forward.1} parent=11 // pred_check
        %p923 = pneg %p567
      $region98: #{ml4cvd_forward.1} parent=11 // pred_check_branch
        %925 = sbr.rel (%p923) target = $region100
      $region99: #{ml4cvd_forward.1} parent=11 // pred_region
        _
      $region100: #{ml4cvd_forward.1} parent=11 // pred_fallthru
        _
      // Predicated region
      $region101: #{ml4cvd_forward.1} parent=11 // pred_check
        %p926 = pneg %p588
      $region102: #{ml4cvd_forward.1} parent=11 // pred_check_branch
        %928 = sbr.rel (%p926) target = $region104
      $region103: #{ml4cvd_forward.1} parent=11 // pred_region
        _
      $region104: #{ml4cvd_forward.1} parent=11 // pred_fallthru
        _
      // Predicated region
      $region105: #{ml4cvd_forward.1} parent=11 // pred_check
        %p929 = pneg %p609
      $region106: #{ml4cvd_forward.1} parent=11 // pred_check_branch
        %931 = sbr.rel (%p929) target = $region108
      $region107: #{ml4cvd_forward.1} parent=11 // pred_region
        _
      $region108: #{ml4cvd_forward.1} parent=11 // pred_fallthru
        _
      // Predicated region
      $region109: #{ml4cvd_forward.1} parent=11 // pred_check
        %p932 = pneg %p630
      $region110: #{ml4cvd_forward.1} parent=11 // pred_check_branch
        %934 = sbr.rel (%p932) target = $region112
      $region111: #{ml4cvd_forward.1} parent=11 // pred_region
        _
      $region112: #{ml4cvd_forward.1} parent=11 // pred_fallthru
        _
      // Predicated region
      $region113: #{ml4cvd_forward.1} parent=11 // pred_check
        %p935 = pneg %p651
      $region114: #{ml4cvd_forward.1} parent=11 // pred_check_branch
        %937 = sbr.rel (%p935) target = $region116
      $region115: #{ml4cvd_forward.1} parent=11 // pred_region
        _
      $region116: #{ml4cvd_forward.1} parent=11 // pred_fallthru
        _
      // Predicated region
      $region117: #{ml4cvd_forward.1} parent=11 // pred_check
        %p938 = pneg %p672
      $region118: #{ml4cvd_forward.1} parent=11 // pred_check_branch
        %940 = sbr.rel (%p938) target = $region120
      $region119: #{ml4cvd_forward.1} parent=11 // pred_region
        _
      $region120: #{ml4cvd_forward.1} parent=11 // pred_fallthru
        _
      // Predicated region
      $region121: #{ml4cvd_forward.1} parent=11 // pred_check
        %p941 = pneg %p693
      $region122: #{ml4cvd_forward.1} parent=11 // pred_check_branch
        %943 = sbr.rel (%p941) target = $region124
      $region123: #{ml4cvd_forward.1} parent=11 // pred_region
        _
      $region124: #{ml4cvd_forward.1} parent=11 // pred_fallthru
        _
      // Predicated region
      $region125: #{ml4cvd_forward.1} parent=11 // pred_check
        %p944 = pneg %p714
      $region126: #{ml4cvd_forward.1} parent=11 // pred_check_branch
        %946 = sbr.rel (%p944) target = $region128
      $region127: #{ml4cvd_forward.1} parent=11 // pred_region
        _
      $region128: #{ml4cvd_forward.1} parent=11 // pred_fallthru
        _
      // Predicated region
      $region129: #{ml4cvd_forward.1} parent=11 // pred_check
        %p947 = pneg %p735
      $region130: #{ml4cvd_forward.1} parent=11 // pred_check_branch
        %949 = sbr.rel (%p947) target = $region132
      $region131: #{ml4cvd_forward.1} parent=11 // pred_region
        _
      $region132: #{ml4cvd_forward.1} parent=11 // pred_fallthru
        _
      // Predicated region
      $region133: #{ml4cvd_forward.1} parent=11 // pred_check
        %p950 = pneg %p756
      $region134: #{ml4cvd_forward.1} parent=11 // pred_check_branch
        %952 = sbr.rel (%p950) target = $region136
      $region135: #{ml4cvd_forward.1} parent=11 // pred_region
        _
      $region136: #{ml4cvd_forward.1} parent=11 // pred_fallthru
        _
      // Predicated region
      $region137: #{ml4cvd_forward.1} parent=11 // pred_check
        %p953 = pneg %p777
      $region138: #{ml4cvd_forward.1} parent=11 // pred_check_branch
        %955 = sbr.rel (%p953) target = $region140
      $region139: #{ml4cvd_forward.1} parent=11 // pred_region
        _
      $region140: #{ml4cvd_forward.1} parent=11 // pred_fallthru
        _
      // Predicated region
      $region141: #{ml4cvd_forward.1} parent=11 // pred_check
        %p956 = pneg %p798
      $region142: #{ml4cvd_forward.1} parent=11 // pred_check_branch
        %958 = sbr.rel (%p956) target = $region144
      $region143: #{ml4cvd_forward.1} parent=11 // pred_region
        _
      $region144: #{ml4cvd_forward.1} parent=11 // pred_fallthru
        _
      // Predicated region
      $region145: #{ml4cvd_forward.1} parent=11 // pred_check
        %p959 = pneg %p819
      $region146: #{ml4cvd_forward.1} parent=11 // pred_check_branch
        %961 = sbr.rel (%p959) target = $region148
      $region147: #{ml4cvd_forward.1} parent=11 // pred_region
        _
      $region148: #{ml4cvd_forward.1} parent=11 // pred_fallthru
        _
    $region12: #{ml4cvd_forward.1} parent=5 // pred_fallthru
      _
    %p962 = scmp.lt.s32.totalorder %s79, 2
    // Predicated region
    $region149: #{ml4cvd_forward.1} parent=5 // pred_check
      %p963 = pneg %p962
    $region150: #{ml4cvd_forward.1} parent=5 // pred_check_branch
      %965 = sbr.rel (%p963) target = $region152
    $region151: #{ml4cvd_forward.1} parent=5 // pred_region
      // Predicated region
      $region153: #{ml4cvd_forward.1} parent=151 // pred_check
        %p966 = pneg %p99
      $region154: #{ml4cvd_forward.1} parent=151 // pred_check_branch
        %968 = sbr.rel (%p966) target = $region156
      $region155: #{ml4cvd_forward.1} parent=151 // pred_region
        %p969 = scmp.lt.s32.totalorder %s79, 1
        %s970 = scalar_select %p969, %s79, 1
        %s971 = smul.addr %s970, 8
        %s972 = smul.addr %s971, 8
        %s973 = scalar_lea.vmem %s1, %s972
      $region156: #{ml4cvd_forward.1} parent=151 // pred_fallthru
        _
    $region152: #{ml4cvd_forward.1} parent=5 // pred_fallthru
      _
    %p974 = scmp.le.s32.totalorder 1, %s79
    %p975 = scmp.lt.s32.totalorder %s79, 3
    %p976 = pnand %p974, %p975
    %p977 = pneg %p976
    // Predicated region
    $region157: #{ml4cvd_forward.1} parent=5 // pred_check
      _
    $region158: #{ml4cvd_forward.1} parent=5 // pred_check_branch
      %979 = sbr.rel (%p976) target = $region160
    $region159: #{ml4cvd_forward.1} parent=5 // pred_region
      %s980 = ssub.s32 %s79, 1
      %p981 = scmp.lt.s32.totalorder %s84, 1
      %s982 = scalar_select %p981, %s84, 1
      %s983 = smul.addr %s982, 8
      %s984 = smul.addr %s983, 8
      %s985 = scalar_lea.vmem %s1, %s984
      %p986 = pneg %p105
      %p987 = pneg %p102
      %p988 = pneg %p126
      %p989 = pneg %p123
      %p990 = pneg %p147
      %p991 = pneg %p144
      %p992 = pneg %p168
      %p993 = pneg %p165
      %p994 = pneg %p189
      %p995 = pneg %p186
      %p996 = pneg %p210
      %p997 = pneg %p207
      %p998 = pneg %p231
      %p999 = pneg %p228
      %p1000 = pneg %p252
      %p1001 = pneg %p249
      %p1002 = pneg %p273
      %p1003 = pneg %p270
      %p1004 = pneg %p294
      %p1005 = pneg %p291
      %p1006 = pneg %p315
      %p1007 = pneg %p312
      %p1008 = pneg %p336
      %p1009 = pneg %p333
      %p1010 = pneg %p357
      %p1011 = pneg %p354
      %p1012 = pneg %p378
      %p1013 = pneg %p375
      %p1014 = pneg %p399
      %p1015 = pneg %p396
      %p1016 = pneg %p420
      %p1017 = pneg %p417
      %p1018 = pneg %p441
      %p1019 = pneg %p438
      %p1020 = pneg %p462
      %p1021 = pneg %p459
      %p1022 = pneg %p483
      %p1023 = pneg %p480
      %p1024 = pneg %p504
      %p1025 = pneg %p501
      %p1026 = pneg %p525
      %p1027 = pneg %p522
      %p1028 = pneg %p546
      %p1029 = pneg %p543
      %p1030 = pneg %p567
      %p1031 = pneg %p564
      %p1032 = pneg %p588
      %p1033 = pneg %p585
      %p1034 = pneg %p609
      %p1035 = pneg %p606
      %p1036 = pneg %p630
      %p1037 = pneg %p627
      %p1038 = pneg %p651
      %p1039 = pneg %p648
      %p1040 = pneg %p672
      %p1041 = pneg %p669
      %p1042 = pneg %p693
      %p1043 = pneg %p690
      %p1044 = pneg %p714
      %p1045 = pneg %p711
      %p1046 = pneg %p735
      %p1047 = pneg %p732
      %p1048 = pneg %p756
      %p1049 = pneg %p753
      %p1050 = pneg %p777
      %p1051 = pneg %p774
      %p1052 = pneg %p798
      %p1053 = pneg %p795
      %p1054 = pneg %p819
      %p1055 = pneg %p816
      %p1056 = pneg %p845
      %p1057 = pneg %p842
      %p1058 = scmp.lt.s32.totalorder %s84, 1
      %s1059 = scalar_select %p1058, %s84, 1
      %s1060 = scalar_lea.vmem %s71, %s1059
      %p1061 = scmp.lt.s32.totalorder %s84, 1
      %s1062 = scalar_select %p1061, %s84, 1
      %s1063 = smul.addr %s1062, 8
      %s1064 = smul.addr %s1063, 8
      %s1065 = scalar_lea.vmem %s1, %s1064
      %p1066 = scmp.lt.s32.totalorder %s84, 1
      %s1067 = scalar_select %p1066, %s84, 1
      %s1068 = scalar_lea.vmem %s71, %s1067
      %v1070 = vld [vmem:[%s1065] sm:$0xff]
      %v1071 = vld [vmem:[%s1065 + $0x8] sm:$0xff]
      %v1072 = vld [vmem:[%s1065 + $0x10] sm:$0xff]
      %v1073 = vld [vmem:[%s1065 + $0x18] sm:$0xff]
      %v1074 = vld [vmem:[%s1065 + $0x20] sm:$0xf]
      %v1075 = vld [vmem:[%s1065 + $0x28] sm:$0xf]
      %v1076 = vld [vmem:[%s1065 + $0x30] sm:$0xf]
      %v1077 = vld [vmem:[%s1065 + $0x38] sm:$0xf]
      %v1078 = vpack.c.bf16 %v1074, %v1070
      %v1079 = vpack.c.bf16 %v1075, %v1071
      %v1080 = vpack.c.bf16 %v1076, %v1072
      %v1081 = vpack.c.bf16 %v1077, %v1073
      %1086 = vrot.lane.b32.xlu0 %v1078, 3
      %v1087 = vpop.permute.xlu0 %1086
      %1088 = vrot.lane.b32.xlu0 %v1079, 3
      %v1089 = vpop.permute.xlu0 %1088
      %1090 = vrot.lane.b32.xlu0 %v1080, 3
      %v1091 = vpop.permute.xlu0 %1090
      %1092 = vrot.lane.b32.xlu0 %v1081, 3
      %v1093 = vpop.permute.xlu0 %1092
      %vm1094 = vcmask 23552
      %v1095 = vsel %vm1094, %v1087, %v1089
      %v1096 = vsel %vm1094, %v1089, %v1091
      %v1097 = vsel %vm1094, %v1091, %v1093
      %vm1098 = vcmask 23552
      %v1101 = vsel %vm1098, 0, %v1087
      %vm1102 = vcmask 973824
      %v1104 = vsel %vm1102, %v1097, 0
      %v1107 = vrot.slane %v1101, 2
      %v1108 = vrot.slane %v1095, 2
      %v1109 = vrot.slane %v1096, 2
      %v1110 = vrot.slane %v1104, 2
      %1111 = vrot.lane.b32.xlu0 %v1107, 127
      %v1112 = vpop.permute.xlu0 %1111
      %1113 = vrot.lane.b32.xlu0 %v1108, 127
      %v1114 = vpop.permute.xlu0 %1113
      %1115 = vrot.lane.b32.xlu0 %v1109, 127
      %v1116 = vpop.permute.xlu0 %1115
      %1117 = vrot.lane.b32.xlu0 %v1110, 127
      %v1118 = vpop.permute.xlu0 %1117
      %vm1119 = vcmask 1039360
      %v1120 = vsel %vm1119, %v1112, %v1114
      %v1121 = vsel %vm1119, %v1114, %v1116
      %v1122 = vsel %vm1119, %v1116, %v1118
      %v1123 = vrot.slane %v1101, 4
      %v1124 = vrot.slane %v1095, 4
      %v1125 = vrot.slane %v1096, 4
      %v1126 = vrot.slane %v1104, 4
      %1127 = vrot.lane.b32.xlu0 %v1123, 126
      %v1128 = vpop.permute.xlu0 %1127
      %1129 = vrot.lane.b32.xlu0 %v1124, 126
      %v1130 = vpop.permute.xlu0 %1129
      %1131 = vrot.lane.b32.xlu0 %v1125, 126
      %v1132 = vpop.permute.xlu0 %1131
      %1133 = vrot.lane.b32.xlu0 %v1126, 126
      %v1134 = vpop.permute.xlu0 %1133
      %vm1135 = vcmask 1031168
      %v1136 = vsel %vm1135, %v1128, %v1130
      %v1137 = vsel %vm1135, %v1130, %v1132
      %v1138 = vsel %vm1135, %v1132, %v1134
      %v1139 = vrot.slane %v1101, 6
      %v1140 = vrot.slane %v1095, 6
      %v1141 = vrot.slane %v1096, 6
      %v1142 = vrot.slane %v1104, 6
      %1143 = vrot.lane.b32.xlu0 %v1139, 125
      %v1144 = vpop.permute.xlu0 %1143
      %1145 = vrot.lane.b32.xlu0 %v1140, 125
      %v1146 = vpop.permute.xlu0 %1145
      %1147 = vrot.lane.b32.xlu0 %v1141, 125
      %v1148 = vpop.permute.xlu0 %1147
      %1149 = vrot.lane.b32.xlu0 %v1142, 125
      %v1150 = vpop.permute.xlu0 %1149
      %vm1151 = vcmask 1022976
      %v1152 = vsel %vm1151, %v1144, %v1146
      %v1153 = vsel %vm1151, %v1146, %v1148
      %v1154 = vsel %vm1151, %v1148, %v1150
      %1155 = vrot.lane.b32.xlu0 %v1101, 124
      %v1156 = vpop.permute.xlu0 %1155
      %1157 = vrot.lane.b32.xlu0 %v1095, 124
      %v1158 = vpop.permute.xlu0 %1157
      %1159 = vrot.lane.b32.xlu0 %v1096, 124
      %v1160 = vpop.permute.xlu0 %1159
      %1161 = vrot.lane.b32.xlu0 %v1104, 124
      %v1162 = vpop.permute.xlu0 %1161
      %vm1163 = vcmask 1014784
      %v1164 = vsel %vm1163, %v1156, %v1158
      %v1165 = vsel %vm1163, %v1158, %v1160
      %v1166 = vsel %vm1163, %v1160, %v1162
      %1167 = vrot.lane.b32.xlu0 %v1107, 123
      %v1168 = vpop.permute.xlu0 %1167
      %1169 = vrot.lane.b32.xlu0 %v1108, 123
      %v1170 = vpop.permute.xlu0 %1169
      %1171 = vrot.lane.b32.xlu0 %v1109, 123
      %v1172 = vpop.permute.xlu0 %1171
      %1173 = vrot.lane.b32.xlu0 %v1110, 123
      %v1174 = vpop.permute.xlu0 %1173
      %vm1175 = vcmask 1006592
      %v1176 = vsel %vm1175, %v1168, %v1170
      %v1177 = vsel %vm1175, %v1170, %v1172
      %v1178 = vsel %vm1175, %v1172, %v1174
      %1179 = vrot.lane.b32.xlu0 %v1123, 122
      %v1180 = vpop.permute.xlu0 %1179
      %1181 = vrot.lane.b32.xlu0 %v1124, 122
      %v1182 = vpop.permute.xlu0 %1181
      %1183 = vrot.lane.b32.xlu0 %v1125, 122
      %v1184 = vpop.permute.xlu0 %1183
      %1185 = vrot.lane.b32.xlu0 %v1126, 122
      %v1186 = vpop.permute.xlu0 %1185
      %vm1187 = vcmask 998400
      %v1188 = vsel %vm1187, %v1180, %v1182
      %v1189 = vsel %vm1187, %v1182, %v1184
      %v1190 = vsel %vm1187, %v1184, %v1186
      %vm1191 = vcmask 1045504
      %v1193 = vsel %vm1191, %v1101, %v1120
      %v1197 = vsel %vm1191, %v1095, %v1121
      %v1201 = vsel %vm1191, %v1096, %v1122
      %v1204 = vsel %vm1191, %v1104, %v1118
      %vm1206 = vcmask 1043456
      %v1208 = vsel %vm1206, %v1120, %v1136
      %v1211 = vsel %vm1206, %v1121, %v1137
      %v1214 = vsel %vm1206, %v1122, %v1138
      %v1217 = vsel %vm1206, %v1118, %v1134
      %vm1219 = vcmask 1041408
      %v1221 = vsel %vm1219, %v1136, %v1152
      %v1224 = vsel %vm1219, %v1137, %v1153
      %v1227 = vsel %vm1219, %v1138, %v1154
      %v1230 = vsel %vm1219, %v1134, %v1150
      %v1234 = vsel %vm1191, %v1164, %v1176
      %v1238 = vsel %vm1191, %v1165, %v1177
      %v1242 = vsel %vm1191, %v1166, %v1178
      %v1246 = vsel %vm1191, %v1162, %v1174
      %v1249 = vsel %vm1206, %v1176, %v1188
      %v1252 = vsel %vm1206, %v1177, %v1189
      %v1255 = vsel %vm1206, %v1178, %v1190
      %v1258 = vsel %vm1206, %v1174, %v1186
      %v1260 = vld [vmem:[%s3] sm:$0xf]
      %v1261 = vld [vmem:[%s3 + $0x4] sm:$0xf]
      %v1262 = vld [vmem:[%s3 + $0x8] sm:$0xf]
      %v1263 = vld [vmem:[%s3 + $0xc] sm:$0xf]
      %v1264 = vld [vmem:[%s5] sm:$0xff]
      %v1265 = vld [vmem:[%s5 + $0x8] sm:$0xff]
      %v1266 = vld [vmem:[%s5 + $0x10] sm:$0xff]
      %v1267 = vld [vmem:[%s5 + $0x18] sm:$0xff]
      %1269 = vset.pattern.permute.xlu0 0
      %1270 = vperm.xlu0 %1269, %v1264
      %v1271 = vpop.permute.xlu0 %1270
      %1274 = vset.pattern.permute.xlu0 0
      %1275 = vperm.xlu0 %1274, %v1265
      %v1276 = vpop.permute.xlu0 %1275
      %1279 = vset.pattern.permute.xlu0 0
      %1280 = vperm.xlu0 %1279, %v1266
      %v1281 = vpop.permute.xlu0 %1280
      %1284 = vset.pattern.permute.xlu0 0
      %1285 = vperm.xlu0 %1284, %v1267
      %v1286 = vpop.permute.xlu0 %1285
      %v1292 = vunpack.c.l.b16 %v1260
      %v1293 = vunpack.c.l.b16 %v1261
      %v1294 = vunpack.c.l.b16 %v1262
      %v1295 = vunpack.c.l.b16 %v1263
      %v1296 = vpack.c.b16 %v1293, %v1292
      %v1297 = vpack.c.b16 %v1295, %v1294
      %vm1298 = vcmask 687104
      %v1300 = vsel %vm1298, %v1296, 0
      %v1303 = vsel %vm1298, %v1297, 0
      %v1305 = vsel %vm1219, %v1188, 0
      %v1307 = vsel %vm1219, %v1189, 0
      %v1309 = vsel %vm1219, %v1190, 0
      %v1311 = vsel %vm1219, %v1186, 0
      %1313 = vmatprep.subr.bf16.mxu0 %v1197
      %1314 = vmatpush1.bf16.msra.mxu0 %v1193
      %1315 = vmatprep.subr.bf16.mxu0 %v1211
      %1316 = vmatpush1.bf16.msra.mxu0 %v1208
      %1317 = vmatprep.subr.bf16.mxu0 %v1224
      %1318 = vmatpush1.bf16.msra.mxu0 %v1221
      %1319 = vmatprep.subr.bf16.mxu0 %v1238
      %1320 = vmatpush1.bf16.msra.mxu0 %v1234
      %1321 = vmatprep.subr.bf16.mxu0 %v1252
      %1322 = vmatpush1.bf16.msra.mxu0 %v1249
      %1323 = vmatprep.subr.bf16.mxu0 %v1307
      %1324 = vmatpush1.bf16.msra.mxu0 %v1305
      %1325 = vmatprep.subr.bf16.mxu0 0
      %1326 = vmatpush1.bf16.msra.mxu0 0
      %1327 = vmatprep.subr.bf16.mxu0 0
      %1328 = vmatpush1.bf16.msra.mxu0 0
      %1329 = vmatprep.subr.bf16.mxu0 0
      %1330 = vmatpush1.bf16.msra.mxu0 0
      %1331 = vmatprep.subr.bf16.mxu0 0
      %1332 = vmatpush1.bf16.msra.mxu0 0
      %1333 = vmatprep.subr.bf16.mxu0 0
      %1334 = vmatpush1.bf16.msra.mxu0 0
      %1335 = vmatprep.subr.bf16.mxu0 0
      %1336 = vmatpush1.bf16.msra.mxu0 0
      %1337 = vmatprep.subr.bf16.mxu0 0
      %1338 = vmatpush1.bf16.msra.mxu0 0
      %1339 = vmatprep.subr.bf16.mxu0 0
      %1340 = vmatpush1.bf16.msra.mxu0 0
      %1341 = vmatprep.subr.bf16.mxu0 0
      %1342 = vmatpush1.bf16.msra.mxu0 0
      %1343 = vmatprep.subr.bf16.mxu0 0
      %1344 = vmatpush1.bf16.msra.mxu0 0
      %1345 = vmatprep.mubr.bf16.mxu0 0
      %1346 = vmatmul.mubr.bf16.gmra.mrb[0].mxu0 %v1300
      %v1347 = vpop.f32.mrb[0].mxu0
      %v1348 = vadd.f32 %v1271, %v1347
      %v1349 = vpop.f32.mrb[0].mxu0
      %v1350 = vadd.f32 %v1271, %v1349
      %v1351 = vpop.f32.mrb[0].mxu0
      %v1352 = vadd.f32 %v1276, %v1351
      %v1353 = vpop.f32.mrb[0].mxu0
      %v1354 = vadd.f32 %v1276, %v1353
      %1355 = vmatprep.mubr.bf16.mxu0 0
      %1356 = vmatmul.mubr.bf16.gmra.mrb[0].mxu0 %v1303
      %v1357 = vpop.f32.mrb[0].mxu0
      %v1358 = vadd.f32 %v1281, %v1357
      %v1359 = vpop.f32.mrb[0].mxu0
      %v1360 = vadd.f32 %v1281, %v1359
      %v1361 = vpop.f32.mrb[0].mxu0
      %v1362 = vadd.f32 %v1286, %v1361
      %v1363 = vpop.f32.mrb[0].mxu0
      %v1364 = vadd.f32 %v1286, %v1363
      %1365 = vdwg.mxu0
      %1366 = vmatprep.subr.bf16.mxu0 %v1204
      %1367 = vmatpush1.bf16.msra.mxu0 %v1201
      %1368 = vmatprep.subr.bf16.mxu0 %v1217
      %1369 = vmatpush1.bf16.msra.mxu0 %v1214
      %1370 = vmatprep.subr.bf16.mxu0 %v1230
      %1371 = vmatpush1.bf16.msra.mxu0 %v1227
      %1372 = vmatprep.subr.bf16.mxu0 %v1246
      %1373 = vmatpush1.bf16.msra.mxu0 %v1242
      %1374 = vmatprep.subr.bf16.mxu0 %v1258
      %1375 = vmatpush1.bf16.msra.mxu0 %v1255
      %1376 = vmatprep.subr.bf16.mxu0 %v1311
      %1377 = vmatpush1.bf16.msra.mxu0 %v1309
      %1378 = vmatprep.subr.bf16.mxu0 0
      %1379 = vmatpush1.bf16.msra.mxu0 0
      %1380 = vmatprep.subr.bf16.mxu0 0
      %1381 = vmatpush1.bf16.msra.mxu0 0
      %1382 = vmatprep.subr.bf16.mxu0 0
      %1383 = vmatpush1.bf16.msra.mxu0 0
      %1384 = vmatprep.subr.bf16.mxu0 0
      %1385 = vmatpush1.bf16.msra.mxu0 0
      %1386 = vmatprep.subr.bf16.mxu0 0
      %1387 = vmatpush1.bf16.msra.mxu0 0
      %1388 = vmatprep.subr.bf16.mxu0 0
      %1389 = vmatpush1.bf16.msra.mxu0 0
      %1390 = vmatprep.subr.bf16.mxu0 0
      %1391 = vmatpush1.bf16.msra.mxu0 0
      %1392 = vmatprep.subr.bf16.mxu0 0
      %1393 = vmatpush1.bf16.msra.mxu0 0
      %1394 = vmatprep.subr.bf16.mxu0 0
      %1395 = vmatpush1.bf16.msra.mxu0 0
      %1396 = vmatprep.subr.bf16.mxu0 0
      %1397 = vmatpush1.bf16.msra.mxu0 0
      %1398 = vmatprep.mubr.bf16.mxu0 0
      %1399 = vmatmul.mubr.bf16.gmra.mrb[0].mxu0 %v1300
      %v1400 = vpop.f32.mrb[0].mxu0
      %v1401 = vadd.f32 %v1271, %v1400
      %v1402 = vpop.f32.mrb[0].mxu0
      %v1403 = vadd.f32 %v1271, %v1402
      %v1404 = vpop.f32.mrb[0].mxu0
      %v1405 = vadd.f32 %v1276, %v1404
      %v1406 = vpop.f32.mrb[0].mxu0
      %v1407 = vadd.f32 %v1276, %v1406
      %1408 = vmatprep.mubr.bf16.mxu0 0
      %1409 = vmatmul.mubr.bf16.gmra.mrb[0].mxu0 %v1303
      %v1410 = vpop.f32.mrb[0].mxu0
      %v1411 = vadd.f32 %v1281, %v1410
      %v1412 = vpop.f32.mrb[0].mxu0
      %v1413 = vadd.f32 %v1281, %v1412
      %v1414 = vpop.f32.mrb[0].mxu0
      %v1415 = vadd.f32 %v1286, %v1414
      %v1416 = vpop.f32.mrb[0].mxu0
      %v1417 = vadd.f32 %v1286, %v1416
      %1418 = vdwg.mxu0
      %v1419 = vmax.f32 %v1348, 0.0
      %v1420 = vmax.f32 %v1350, 0.0
      %v1421 = vmax.f32 %v1401, 0.0
      %v1422 = vmax.f32 %v1403, 0.0
      %v1423 = vmax.f32 %v1352, 0.0
      %v1424 = vmax.f32 %v1354, 0.0
      %v1425 = vmax.f32 %v1405, 0.0
      %v1426 = vmax.f32 %v1407, 0.0
      %v1427 = vmax.f32 %v1358, 0.0
      %v1428 = vmax.f32 %v1360, 0.0
      %v1429 = vmax.f32 %v1411, 0.0
      %v1430 = vmax.f32 %v1413, 0.0
      %v1431 = vmax.f32 %v1362, 0.0
      %v1432 = vmax.f32 %v1364, 0.0
      %v1433 = vmax.f32 %v1415, 0.0
      %v1434 = vmax.f32 %v1417, 0.0
      %v1435 = vpack.c.bf16 %v1423, %v1419
      %v1436 = vpack.c.bf16 %v1424, %v1420
      %v1437 = vpack.c.bf16 %v1425, %v1421
      %v1438 = vpack.c.bf16 %v1426, %v1422
      %v1439 = vpack.c.bf16 %v1431, %v1427
      %v1440 = vpack.c.bf16 %v1432, %v1428
      %v1441 = vpack.c.bf16 %v1433, %v1429
      %v1442 = vpack.c.bf16 %v1434, %v1430
      %1451 = vrot.lane.b32.xlu0 %v1435, 3
      %v1452 = vpop.permute.xlu0 %1451
      %1453 = vrot.lane.b32.xlu0 %v1436, 3
      %v1454 = vpop.permute.xlu0 %1453
      %1455 = vrot.lane.b32.xlu0 %v1437, 3
      %v1456 = vpop.permute.xlu0 %1455
      %1457 = vrot.lane.b32.xlu0 %v1438, 3
      %v1458 = vpop.permute.xlu0 %1457
      %1459 = vrot.lane.b32.xlu0 %v1439, 3
      %v1460 = vpop.permute.xlu0 %1459
      %1461 = vrot.lane.b32.xlu0 %v1440, 3
      %v1462 = vpop.permute.xlu0 %1461
      %1463 = vrot.lane.b32.xlu0 %v1441, 3
      %v1464 = vpop.permute.xlu0 %1463
      %1465 = vrot.lane.b32.xlu0 %v1442, 3
      %v1466 = vpop.permute.xlu0 %1465
      %v1467 = vsel %vm1094, %v1452, %v1454
      %v1468 = vsel %vm1094, %v1454, %v1456
      %v1469 = vsel %vm1094, %v1456, %v1458
      %v1470 = vsel %vm1094, %v1460, %v1462
      %v1471 = vsel %vm1094, %v1462, %v1464
      %v1472 = vsel %vm1094, %v1464, %v1466
      %v1478 = vsel %vm1098, 0, %v1452
      %v1481 = vsel %vm1098, 0, %v1460
      %v1484 = vsel %vm1102, %v1469, 0
      %v1487 = vsel %vm1102, %v1472, 0
      %1493 = vrot.lane.b32.xlu0 %v1478, 127
      %v1494 = vpop.permute.xlu0 %1493
      %1495 = vrot.lane.b32.xlu0 %v1467, 127
      %v1496 = vpop.permute.xlu0 %1495
      %1497 = vrot.lane.b32.xlu0 %v1468, 127
      %v1498 = vpop.permute.xlu0 %1497
      %1499 = vrot.lane.b32.xlu0 %v1484, 127
      %v1500 = vpop.permute.xlu0 %1499
      %1501 = vrot.lane.b32.xlu0 %v1481, 127
      %v1502 = vpop.permute.xlu0 %1501
      %1503 = vrot.lane.b32.xlu0 %v1470, 127
      %v1504 = vpop.permute.xlu0 %1503
      %1505 = vrot.lane.b32.xlu0 %v1471, 127
      %v1506 = vpop.permute.xlu0 %1505
      %1507 = vrot.lane.b32.xlu0 %v1487, 127
      %v1508 = vpop.permute.xlu0 %1507
      %v1509 = vsel %vm1119, %v1494, %v1496
      %v1510 = vsel %vm1119, %v1496, %v1498
      %v1511 = vsel %vm1119, %v1498, %v1500
      %v1512 = vsel %vm1119, %v1502, %v1504
      %v1513 = vsel %vm1119, %v1504, %v1506
      %v1514 = vsel %vm1119, %v1506, %v1508
      %1523 = vrot.lane.b32.xlu0 %v1478, 126
      %v1524 = vpop.permute.xlu0 %1523
      %1525 = vrot.lane.b32.xlu0 %v1467, 126
      %v1526 = vpop.permute.xlu0 %1525
      %1527 = vrot.lane.b32.xlu0 %v1468, 126
      %v1528 = vpop.permute.xlu0 %1527
      %1529 = vrot.lane.b32.xlu0 %v1484, 126
      %v1530 = vpop.permute.xlu0 %1529
      %1531 = vrot.lane.b32.xlu0 %v1481, 126
      %v1532 = vpop.permute.xlu0 %1531
      %1533 = vrot.lane.b32.xlu0 %v1470, 126
      %v1534 = vpop.permute.xlu0 %1533
      %1535 = vrot.lane.b32.xlu0 %v1471, 126
      %v1536 = vpop.permute.xlu0 %1535
      %1537 = vrot.lane.b32.xlu0 %v1487, 126
      %v1538 = vpop.permute.xlu0 %1537
      %v1539 = vsel %vm1135, %v1524, %v1526
      %v1540 = vsel %vm1135, %v1526, %v1528
      %v1541 = vsel %vm1135, %v1528, %v1530
      %v1542 = vsel %vm1135, %v1532, %v1534
      %v1543 = vsel %vm1135, %v1534, %v1536
      %v1544 = vsel %vm1135, %v1536, %v1538
      %1553 = vrot.lane.b32.xlu0 %v1478, 125
      %v1554 = vpop.permute.xlu0 %1553
      %1555 = vrot.lane.b32.xlu0 %v1467, 125
      %v1556 = vpop.permute.xlu0 %1555
      %1557 = vrot.lane.b32.xlu0 %v1468, 125
      %v1558 = vpop.permute.xlu0 %1557
      %1559 = vrot.lane.b32.xlu0 %v1484, 125
      %v1560 = vpop.permute.xlu0 %1559
      %1561 = vrot.lane.b32.xlu0 %v1481, 125
      %v1562 = vpop.permute.xlu0 %1561
      %1563 = vrot.lane.b32.xlu0 %v1470, 125
      %v1564 = vpop.permute.xlu0 %1563
      %1565 = vrot.lane.b32.xlu0 %v1471, 125
      %v1566 = vpop.permute.xlu0 %1565
      %1567 = vrot.lane.b32.xlu0 %v1487, 125
      %v1568 = vpop.permute.xlu0 %1567
      %v1569 = vsel %vm1151, %v1554, %v1556
      %v1570 = vsel %vm1151, %v1556, %v1558
      %v1571 = vsel %vm1151, %v1558, %v1560
      %v1572 = vsel %vm1151, %v1562, %v1564
      %v1573 = vsel %vm1151, %v1564, %v1566
      %v1574 = vsel %vm1151, %v1566, %v1568
      %1583 = vrot.lane.b32.xlu0 %v1478, 124
      %v1584 = vpop.permute.xlu0 %1583
      %1585 = vrot.lane.b32.xlu0 %v1467, 124
      %v1586 = vpop.permute.xlu0 %1585
      %1587 = vrot.lane.b32.xlu0 %v1468, 124
      %v1588 = vpop.permute.xlu0 %1587
      %1589 = vrot.lane.b32.xlu0 %v1484, 124
      %v1590 = vpop.permute.xlu0 %1589
      %1591 = vrot.lane.b32.xlu0 %v1481, 124
      %v1592 = vpop.permute.xlu0 %1591
      %1593 = vrot.lane.b32.xlu0 %v1470, 124
      %v1594 = vpop.permute.xlu0 %1593
      %1595 = vrot.lane.b32.xlu0 %v1471, 124
      %v1596 = vpop.permute.xlu0 %1595
      %1597 = vrot.lane.b32.xlu0 %v1487, 124
      %v1598 = vpop.permute.xlu0 %1597
      %v1599 = vsel %vm1163, %v1584, %v1586
      %v1600 = vsel %vm1163, %v1586, %v1588
      %v1601 = vsel %vm1163, %v1588, %v1590
      %v1602 = vsel %vm1163, %v1592, %v1594
      %v1603 = vsel %vm1163, %v1594, %v1596
      %v1604 = vsel %vm1163, %v1596, %v1598
      %1613 = vrot.lane.b32.xlu0 %v1478, 123
      %v1614 = vpop.permute.xlu0 %1613
      %1615 = vrot.lane.b32.xlu0 %v1467, 123
      %v1616 = vpop.permute.xlu0 %1615
      %1617 = vrot.lane.b32.xlu0 %v1468, 123
      %v1618 = vpop.permute.xlu0 %1617
      %1619 = vrot.lane.b32.xlu0 %v1484, 123
      %v1620 = vpop.permute.xlu0 %1619
      %1621 = vrot.lane.b32.xlu0 %v1481, 123
      %v1622 = vpop.permute.xlu0 %1621
      %1623 = vrot.lane.b32.xlu0 %v1470, 123
      %v1624 = vpop.permute.xlu0 %1623
      %1625 = vrot.lane.b32.xlu0 %v1471, 123
      %v1626 = vpop.permute.xlu0 %1625
      %1627 = vrot.lane.b32.xlu0 %v1487, 123
      %v1628 = vpop.permute.xlu0 %1627
      %v1629 = vsel %vm1175, %v1614, %v1616
      %v1630 = vsel %vm1175, %v1616, %v1618
      %v1631 = vsel %vm1175, %v1618, %v1620
      %v1632 = vsel %vm1175, %v1622, %v1624
      %v1633 = vsel %vm1175, %v1624, %v1626
      %v1634 = vsel %vm1175, %v1626, %v1628
      %1643 = vrot.lane.b32.xlu0 %v1478, 122
      %v1644 = vpop.permute.xlu0 %1643
      %1645 = vrot.lane.b32.xlu0 %v1467, 122
      %v1646 = vpop.permute.xlu0 %1645
      %1647 = vrot.lane.b32.xlu0 %v1468, 122
      %v1648 = vpop.permute.xlu0 %1647
      %1649 = vrot.lane.b32.xlu0 %v1484, 122
      %v1650 = vpop.permute.xlu0 %1649
      %1651 = vrot.lane.b32.xlu0 %v1481, 122
      %v1652 = vpop.permute.xlu0 %1651
      %1653 = vrot.lane.b32.xlu0 %v1470, 122
      %v1654 = vpop.permute.xlu0 %1653
      %1655 = vrot.lane.b32.xlu0 %v1471, 122
      %v1656 = vpop.permute.xlu0 %1655
      %1657 = vrot.lane.b32.xlu0 %v1487, 122
      %v1658 = vpop.permute.xlu0 %1657
      %v1659 = vsel %vm1187, %v1644, %v1646
      %v1660 = vsel %vm1187, %v1646, %v1648
      %v1661 = vsel %vm1187, %v1648, %v1650
      %v1662 = vsel %vm1187, %v1652, %v1654
      %v1663 = vsel %vm1187, %v1654, %v1656
      %v1664 = vsel %vm1187, %v1656, %v1658
      %v1673 = vld [vmem:[%s7] sm:$0xff]
      %v1674 = vld [vmem:[%s7 + $0x8] sm:$0xff]
      %v1675 = vld [vmem:[%s7 + $0x10] sm:$0xff]
      %v1676 = vld [vmem:[%s7 + $0x18] sm:$0xff]
      %v1677 = vld [vmem:[%s9] sm:$0xff]
      %v1678 = vld [vmem:[%s9 + $0x8] sm:$0xff]
      %v1679 = vld [vmem:[%s9 + $0x10] sm:$0xff]
      %v1680 = vld [vmem:[%s9 + $0x18] sm:$0xff]
      %1682 = vset.pattern.permute.xlu0 0
      %1683 = vperm.xlu0 %1682, %v1677
      %v1684 = vpop.permute.xlu0 %1683
      %1687 = vset.pattern.permute.xlu0 0
      %1688 = vperm.xlu0 %1687, %v1678
      %v1689 = vpop.permute.xlu0 %1688
      %1692 = vset.pattern.permute.xlu0 0
      %1693 = vperm.xlu0 %1692, %v1679
      %v1694 = vpop.permute.xlu0 %1693
      %1697 = vset.pattern.permute.xlu0 0
      %1698 = vperm.xlu0 %1697, %v1680
      %v1699 = vpop.permute.xlu0 %1698
      %v1705 = vunpack.c.l.b16 %v1673
      %v1706 = vunpack.c.h.b16 %v1673
      %v1707 = vunpack.c.l.b16 %v1674
      %v1708 = vunpack.c.h.b16 %v1674
      %v1709 = vunpack.c.l.b16 %v1675
      %v1710 = vunpack.c.h.b16 %v1675
      %v1711 = vunpack.c.l.b16 %v1676
      %v1712 = vunpack.c.h.b16 %v1676
      %v1713 = vpack.c.b16 %v1707, %v1705
      %v1714 = vpack.c.b16 %v1708, %v1706
      %v1715 = vpack.c.b16 %v1711, %v1709
      %v1716 = vpack.c.b16 %v1712, %v1710
      %vm1719 = vcmask 785408
      %v1721 = vsel %vm1719, %v1714, 0
      %v1724 = vsel %vm1719, %v1716, 0
      %1726 = vmatprep.subr.bf16.mxu0 %v1467
      %1727 = vmatpush1.bf16.msra.mxu0 %v1478
      %1728 = vmatprep.subr.bf16.mxu0 %v1470
      %1729 = vmatpush1.bf16.msra.mxu0 %v1481
      %1730 = vmatprep.subr.bf16.mxu0 %v1510
      %1731 = vmatpush1.bf16.msra.mxu0 %v1509
      %1732 = vmatprep.subr.bf16.mxu0 %v1513
      %1733 = vmatpush1.bf16.msra.mxu0 %v1512
      %1734 = vmatprep.subr.bf16.mxu0 %v1540
      %1735 = vmatpush1.bf16.msra.mxu0 %v1539
      %1736 = vmatprep.subr.bf16.mxu0 %v1543
      %1737 = vmatpush1.bf16.msra.mxu0 %v1542
      %1738 = vmatprep.subr.bf16.mxu0 %v1570
      %1739 = vmatpush1.bf16.msra.mxu0 %v1569
      %1740 = vmatprep.subr.bf16.mxu0 %v1573
      %1741 = vmatpush1.bf16.msra.mxu0 %v1572
      %1742 = vmatprep.subr.bf16.mxu0 %v1600
      %1743 = vmatpush1.bf16.msra.mxu0 %v1599
      %1744 = vmatprep.subr.bf16.mxu0 %v1603
      %1745 = vmatpush1.bf16.msra.mxu0 %v1602
      %1746 = vmatprep.subr.bf16.mxu0 %v1630
      %1747 = vmatpush1.bf16.msra.mxu0 %v1629
      %1748 = vmatprep.subr.bf16.mxu0 %v1633
      %1749 = vmatpush1.bf16.msra.mxu0 %v1632
      %1750 = vmatprep.subr.bf16.mxu0 %v1660
      %1751 = vmatpush1.bf16.msra.mxu0 %v1659
      %1752 = vmatprep.subr.bf16.mxu0 %v1663
      %1753 = vmatpush1.bf16.msra.mxu0 %v1662
      %1754 = vmatprep.subr.bf16.mxu0 0
      %1755 = vmatpush1.bf16.msra.mxu0 0
      %1756 = vmatprep.subr.bf16.mxu0 0
      %1757 = vmatpush1.bf16.msra.mxu0 0
      %1758 = vmatprep.mubr.bf16.mxu0 %v1721
      %1759 = vmatmul.mubr.bf16.gmra.mrb[0].mxu0 %v1713
      %v1760 = vpop.f32.mrb[0].mxu0
      %v1761 = vadd.f32 %v1684, %v1760
      %v1762 = vpop.f32.mrb[0].mxu0
      %v1763 = vadd.f32 %v1684, %v1762
      %v1764 = vpop.f32.mrb[0].mxu0
      %v1765 = vadd.f32 %v1689, %v1764
      %v1766 = vpop.f32.mrb[0].mxu0
      %v1767 = vadd.f32 %v1689, %v1766
      %1768 = vmatprep.mubr.bf16.mxu0 %v1724
      %1769 = vmatmul.mubr.bf16.gmra.mrb[0].mxu0 %v1715
      %v1770 = vpop.f32.mrb[0].mxu0
      %v1771 = vadd.f32 %v1694, %v1770
      %v1772 = vpop.f32.mrb[0].mxu0
      %v1773 = vadd.f32 %v1694, %v1772
      %v1774 = vpop.f32.mrb[0].mxu0
      %v1775 = vadd.f32 %v1699, %v1774
      %v1776 = vpop.f32.mrb[0].mxu0
      %v1777 = vadd.f32 %v1699, %v1776
      %1778 = vdwg.mxu0
      %1779 = vmatprep.subr.bf16.mxu0 %v1484
      %1780 = vmatpush1.bf16.msra.mxu0 %v1468
      %1781 = vmatprep.subr.bf16.mxu0 %v1487
      %1782 = vmatpush1.bf16.msra.mxu0 %v1471
      %1783 = vmatprep.subr.bf16.mxu0 %v1500
      %1784 = vmatpush1.bf16.msra.mxu0 %v1511
      %1785 = vmatprep.subr.bf16.mxu0 %v1508
      %1786 = vmatpush1.bf16.msra.mxu0 %v1514
      %1787 = vmatprep.subr.bf16.mxu0 %v1530
      %1788 = vmatpush1.bf16.msra.mxu0 %v1541
      %1789 = vmatprep.subr.bf16.mxu0 %v1538
      %1790 = vmatpush1.bf16.msra.mxu0 %v1544
      %1791 = vmatprep.subr.bf16.mxu0 %v1560
      %1792 = vmatpush1.bf16.msra.mxu0 %v1571
      %1793 = vmatprep.subr.bf16.mxu0 %v1568
      %1794 = vmatpush1.bf16.msra.mxu0 %v1574
      %1795 = vmatprep.subr.bf16.mxu0 %v1590
      %1796 = vmatpush1.bf16.msra.mxu0 %v1601
      %1797 = vmatprep.subr.bf16.mxu0 %v1598
      %1798 = vmatpush1.bf16.msra.mxu0 %v1604
      %1799 = vmatprep.subr.bf16.mxu0 %v1620
      %1800 = vmatpush1.bf16.msra.mxu0 %v1631
      %1801 = vmatprep.subr.bf16.mxu0 %v1628
      %1802 = vmatpush1.bf16.msra.mxu0 %v1634
      %1803 = vmatprep.subr.bf16.mxu0 %v1650
      %1804 = vmatpush1.bf16.msra.mxu0 %v1661
      %1805 = vmatprep.subr.bf16.mxu0 %v1658
      %1806 = vmatpush1.bf16.msra.mxu0 %v1664
      %1807 = vmatprep.subr.bf16.mxu0 0
      %1808 = vmatpush1.bf16.msra.mxu0 0
      %1809 = vmatprep.subr.bf16.mxu0 0
      %1810 = vmatpush1.bf16.msra.mxu0 0
      %1811 = vmatprep.mubr.bf16.mxu0 %v1721
      %1812 = vmatmul.mubr.bf16.gmra.mrb[0].mxu0 %v1713
      %v1813 = vpop.f32.mrb[0].mxu0
      %v1814 = vadd.f32 %v1684, %v1813
      %v1815 = vpop.f32.mrb[0].mxu0
      %v1816 = vadd.f32 %v1684, %v1815
      %v1817 = vpop.f32.mrb[0].mxu0
      %v1818 = vadd.f32 %v1689, %v1817
      %v1819 = vpop.f32.mrb[0].mxu0
      %v1820 = vadd.f32 %v1689, %v1819
      %1821 = vmatprep.mubr.bf16.mxu0 %v1724
      %1822 = vmatmul.mubr.bf16.gmra.mrb[0].mxu0 %v1715
      %v1823 = vpop.f32.mrb[0].mxu0
      %v1824 = vadd.f32 %v1694, %v1823
      %v1825 = vpop.f32.mrb[0].mxu0
      %v1826 = vadd.f32 %v1694, %v1825
      %v1827 = vpop.f32.mrb[0].mxu0
      %v1828 = vadd.f32 %v1699, %v1827
      %v1829 = vpop.f32.mrb[0].mxu0
      %v1830 = vadd.f32 %v1699, %v1829
      %1831 = vdwg.mxu0
      %v1832 = vmax.f32 %v1761, 0.0
      %v1833 = vmax.f32 %v1763, 0.0
      %v1834 = vmax.f32 %v1814, 0.0
      %v1835 = vmax.f32 %v1816, 0.0
      %v1836 = vmax.f32 %v1765, 0.0
      %v1837 = vmax.f32 %v1767, 0.0
      %v1838 = vmax.f32 %v1818, 0.0
      %v1839 = vmax.f32 %v1820, 0.0
      %v1840 = vmax.f32 %v1771, 0.0
      %v1841 = vmax.f32 %v1773, 0.0
      %v1842 = vmax.f32 %v1824, 0.0
      %v1843 = vmax.f32 %v1826, 0.0
      %v1844 = vmax.f32 %v1775, 0.0
      %v1845 = vmax.f32 %v1777, 0.0
      %v1846 = vmax.f32 %v1828, 0.0
      %v1847 = vmax.f32 %v1830, 0.0
      %v1848 = vld [vmem:[%s53] sm:$0xff]
      %v1849 = vld [vmem:[%s53 + $0x8] sm:$0xff]
      %v1850 = vld [vmem:[%s53 + $0x10] sm:$0xff]
      %v1851 = vld [vmem:[%s53 + $0x18] sm:$0xff]
      %v1852 = vld [vmem:[%s53 + $0x20] sm:$0xff]
      %v1853 = vld [vmem:[%s53 + $0x28] sm:$0xff]
      %v1854 = vld [vmem:[%s53 + $0x30] sm:$0xff]
      %v1855 = vld [vmem:[%s53 + $0x38] sm:$0xff]
      %v1856 = vld [vmem:[%s53 + $0x40] sm:$0xff]
      %v1857 = vld [vmem:[%s53 + $0x48] sm:$0xff]
      %v1858 = vld [vmem:[%s53 + $0x50] sm:$0xff]
      %v1859 = vld [vmem:[%s53 + $0x58] sm:$0xff]
      %v1860 = vld [vmem:[%s53 + $0x60] sm:$0xff]
      %v1861 = vld [vmem:[%s53 + $0x68] sm:$0xff]
      %v1862 = vld [vmem:[%s53 + $0x70] sm:$0xff]
      %v1863 = vld [vmem:[%s53 + $0x78] sm:$0xff]
      %v1864 = vld [vmem:[%s53 + $0x80] sm:$0xff]
      %v1865 = vld [vmem:[%s53 + $0x88] sm:$0xff]
      %v1866 = vld [vmem:[%s53 + $0x90] sm:$0xff]
      %v1867 = vld [vmem:[%s53 + $0x98] sm:$0xff]
      %v1868 = vld [vmem:[%s53 + $0xa0] sm:$0xff]
      %v1869 = vld [vmem:[%s53 + $0xa8] sm:$0xff]
      %v1870 = vld [vmem:[%s53 + $0xb0] sm:$0xff]
      %v1871 = vld [vmem:[%s53 + $0xb8] sm:$0xff]
      %v1872 = vld [vmem:[%s53 + $0xc0] sm:$0xff]
      %v1873 = vld [vmem:[%s53 + $0xc8] sm:$0xff]
      %v1874 = vld [vmem:[%s53 + $0xd0] sm:$0xff]
      %v1875 = vld [vmem:[%s53 + $0xd8] sm:$0xff]
      %v1876 = vld [vmem:[%s53 + $0xe0] sm:$0xff]
      %v1877 = vld [vmem:[%s53 + $0xe8] sm:$0xff]
      %v1878 = vld [vmem:[%s53 + $0xf0] sm:$0xff]
      %v1879 = vld [vmem:[%s53 + $0xf8] sm:$0xff]
      %v1880 = vld [vmem:[%s53 + $0x100] sm:$0xff]
      %v1881 = vld [vmem:[%s53 + $0x108] sm:$0xff]
      %v1882 = vld [vmem:[%s53 + $0x110] sm:$0xff]
      %v1883 = vld [vmem:[%s53 + $0x118] sm:$0xff]
      %v1884 = vld [vmem:[%s53 + $0x120] sm:$0xff]
      %v1885 = vld [vmem:[%s53 + $0x128] sm:$0xff]
      %v1886 = vld [vmem:[%s53 + $0x130] sm:$0xff]
      %v1887 = vld [vmem:[%s53 + $0x138] sm:$0xff]
      %v1888 = vld [vmem:[%s53 + $0x140] sm:$0xff]
      %v1889 = vld [vmem:[%s53 + $0x148] sm:$0xff]
      %v1890 = vld [vmem:[%s53 + $0x150] sm:$0xff]
      %v1891 = vld [vmem:[%s53 + $0x158] sm:$0xff]
      %v1892 = vld [vmem:[%s53 + $0x160] sm:$0xff]
      %v1893 = vld [vmem:[%s53 + $0x168] sm:$0xff]
      %v1894 = vld [vmem:[%s53 + $0x170] sm:$0xff]
      %v1895 = vld [vmem:[%s53 + $0x178] sm:$0xff]
      %v1896 = vld [vmem:[%s53 + $0x180] sm:$0xff]
      %v1897 = vld [vmem:[%s53 + $0x188] sm:$0xff]
      %v1898 = vld [vmem:[%s53 + $0x190] sm:$0xff]
      %v1899 = vld [vmem:[%s53 + $0x198] sm:$0xff]
      %v1900 = vld [vmem:[%s53 + $0x1a0] sm:$0xff]
      %v1901 = vld [vmem:[%s53 + $0x1a8] sm:$0xff]
      %v1902 = vld [vmem:[%s53 + $0x1b0] sm:$0xff]
      %v1903 = vld [vmem:[%s53 + $0x1b8] sm:$0xff]
      %v1904 = vld [vmem:[%s53 + $0x1c0] sm:$0xff]
      %v1905 = vld [vmem:[%s53 + $0x1c8] sm:$0xff]
      %v1906 = vld [vmem:[%s53 + $0x1d0] sm:$0xff]
      %v1907 = vld [vmem:[%s53 + $0x1d8] sm:$0xff]
      %v1908 = vld [vmem:[%s53 + $0x1e0] sm:$0xff]
      %v1909 = vld [vmem:[%s53 + $0x1e8] sm:$0xff]
      %v1910 = vld [vmem:[%s53 + $0x1f0] sm:$0x33]
      %v1911 = vpack.c.bf16 %v1836, %v1832
      %v1912 = vpack.c.bf16 %v1837, %v1833
      %v1913 = vpack.c.bf16 %v1838, %v1834
      %v1914 = vpack.c.bf16 %v1839, %v1835
      %v1915 = vpack.c.bf16 %v1844, %v1840
      %v1916 = vpack.c.bf16 %v1845, %v1841
      %v1917 = vpack.c.bf16 %v1846, %v1842
      %v1918 = vpack.c.bf16 %v1847, %v1843
      %v1982 = vunpack.c.l.b16 %v1848
      %v1983 = vunpack.c.h.b16 %v1848
      %v1984 = vunpack.c.l.b16 %v1849
      %v1985 = vunpack.c.h.b16 %v1849
      %v1986 = vunpack.c.l.b16 %v1850
      %v1987 = vunpack.c.h.b16 %v1850
      %v1988 = vunpack.c.l.b16 %v1851
      %v1989 = vunpack.c.h.b16 %v1851
      %v1990 = vunpack.c.l.b16 %v1852
      %v1991 = vunpack.c.h.b16 %v1852
      %v1992 = vunpack.c.l.b16 %v1853
      %v1993 = vunpack.c.h.b16 %v1853
      %v1994 = vunpack.c.l.b16 %v1854
      %v1995 = vunpack.c.h.b16 %v1854
      %v1996 = vunpack.c.l.b16 %v1855
      %v1997 = vunpack.c.h.b16 %v1855
      %v1998 = vunpack.c.l.b16 %v1856
      %v1999 = vunpack.c.h.b16 %v1856
      %v2000 = vunpack.c.l.b16 %v1857
      %v2001 = vunpack.c.h.b16 %v1857
      %v2002 = vunpack.c.l.b16 %v1858
      %v2003 = vunpack.c.h.b16 %v1858
      %v2004 = vunpack.c.l.b16 %v1859
      %v2005 = vunpack.c.h.b16 %v1859
      %v2006 = vunpack.c.l.b16 %v1860
      %v2007 = vunpack.c.h.b16 %v1860
      %v2008 = vunpack.c.l.b16 %v1861
      %v2009 = vunpack.c.h.b16 %v1861
      %v2010 = vunpack.c.l.b16 %v1862
      %v2011 = vunpack.c.h.b16 %v1862
      %v2012 = vunpack.c.l.b16 %v1863
      %v2013 = vunpack.c.h.b16 %v1863
      %v2014 = vunpack.c.l.b16 %v1864
      %v2015 = vunpack.c.h.b16 %v1864
      %v2016 = vunpack.c.l.b16 %v1865
      %v2017 = vunpack.c.h.b16 %v1865
      %v2018 = vunpack.c.l.b16 %v1866
      %v2019 = vunpack.c.h.b16 %v1866
      %v2020 = vunpack.c.l.b16 %v1867
      %v2021 = vunpack.c.h.b16 %v1867
      %v2022 = vunpack.c.l.b16 %v1868
      %v2023 = vunpack.c.h.b16 %v1868
      %v2024 = vunpack.c.l.b16 %v1869
      %v2025 = vunpack.c.h.b16 %v1869
      %v2026 = vunpack.c.l.b16 %v1870
      %v2027 = vunpack.c.h.b16 %v1870
      %v2028 = vunpack.c.l.b16 %v1871
      %v2029 = vunpack.c.h.b16 %v1871
      %v2030 = vunpack.c.l.b16 %v1872
      %v2031 = vunpack.c.h.b16 %v1872
      %v2032 = vunpack.c.l.b16 %v1873
      %v2033 = vunpack.c.h.b16 %v1873
      %v2034 = vunpack.c.l.b16 %v1874
      %v2035 = vunpack.c.h.b16 %v1874
      %v2036 = vunpack.c.l.b16 %v1875
      %v2037 = vunpack.c.h.b16 %v1875
      %v2038 = vunpack.c.l.b16 %v1876
      %v2039 = vunpack.c.h.b16 %v1876
      %v2040 = vunpack.c.l.b16 %v1877
      %v2041 = vunpack.c.h.b16 %v1877
      %v2042 = vunpack.c.l.b16 %v1878
      %v2043 = vunpack.c.h.b16 %v1878
      %v2044 = vunpack.c.l.b16 %v1879
      %v2045 = vunpack.c.h.b16 %v1879
      %v2046 = vunpack.c.l.b16 %v1880
      %v2047 = vunpack.c.h.b16 %v1880
      %v2048 = vunpack.c.l.b16 %v1881
      %v2049 = vunpack.c.h.b16 %v1881
      %v2050 = vunpack.c.l.b16 %v1882
      %v2051 = vunpack.c.h.b16 %v1882
      %v2052 = vunpack.c.l.b16 %v1883
      %v2053 = vunpack.c.h.b16 %v1883
      %v2054 = vunpack.c.l.b16 %v1884
      %v2055 = vunpack.c.h.b16 %v1884
      %v2056 = vunpack.c.l.b16 %v1885
      %v2057 = vunpack.c.h.b16 %v1885
      %v2058 = vunpack.c.l.b16 %v1886
      %v2059 = vunpack.c.h.b16 %v1886
      %v2060 = vunpack.c.l.b16 %v1887
      %v2061 = vunpack.c.h.b16 %v1887
      %v2062 = vunpack.c.l.b16 %v1888
      %v2063 = vunpack.c.h.b16 %v1888
      %v2064 = vunpack.c.l.b16 %v1889
      %v2065 = vunpack.c.h.b16 %v1889
      %v2066 = vunpack.c.l.b16 %v1890
      %v2067 = vunpack.c.h.b16 %v1890
      %v2068 = vunpack.c.l.b16 %v1891
      %v2069 = vunpack.c.h.b16 %v1891
      %v2070 = vunpack.c.l.b16 %v1892
      %v2071 = vunpack.c.h.b16 %v1892
      %v2072 = vunpack.c.l.b16 %v1893
      %v2073 = vunpack.c.h.b16 %v1893
      %v2074 = vunpack.c.l.b16 %v1894
      %v2075 = vunpack.c.h.b16 %v1894
      %v2076 = vunpack.c.l.b16 %v1895
      %v2077 = vunpack.c.h.b16 %v1895
      %v2078 = vunpack.c.l.b16 %v1896
      %v2079 = vunpack.c.h.b16 %v1896
      %v2080 = vunpack.c.l.b16 %v1897
      %v2081 = vunpack.c.h.b16 %v1897
      %v2082 = vunpack.c.l.b16 %v1898
      %v2083 = vunpack.c.h.b16 %v1898
      %v2084 = vunpack.c.l.b16 %v1899
      %v2085 = vunpack.c.h.b16 %v1899
      %v2086 = vunpack.c.l.b16 %v1900
      %v2087 = vunpack.c.h.b16 %v1900
      %v2088 = vunpack.c.l.b16 %v1901
      %v2089 = vunpack.c.h.b16 %v1901
      %v2090 = vunpack.c.l.b16 %v1902
      %v2091 = vunpack.c.h.b16 %v1902
      %v2092 = vunpack.c.l.b16 %v1903
      %v2093 = vunpack.c.h.b16 %v1903
      %v2094 = vunpack.c.l.b16 %v1904
      %v2095 = vunpack.c.h.b16 %v1904
      %v2096 = vunpack.c.l.b16 %v1905
      %v2097 = vunpack.c.h.b16 %v1905
      %v2098 = vunpack.c.l.b16 %v1906
      %v2099 = vunpack.c.h.b16 %v1906
      %v2100 = vunpack.c.l.b16 %v1907
      %v2101 = vunpack.c.h.b16 %v1907
      %v2102 = vunpack.c.l.b16 %v1908
      %v2103 = vunpack.c.h.b16 %v1908
      %v2104 = vunpack.c.l.b16 %v1909
      %v2105 = vunpack.c.h.b16 %v1909
      %v2106 = vunpack.c.l.b16 %v1910
      %v2107 = vunpack.c.h.b16 %v1910
      %v2108 = vpack.c.b16 %v1984, %v1982
      %v2109 = vpack.c.b16 %v1985, %v1983
      %v2110 = vpack.c.b16 %v1988, %v1986
      %v2111 = vpack.c.b16 %v1989, %v1987
      %v2112 = vpack.c.b16 %v1992, %v1990
      %v2113 = vpack.c.b16 %v1993, %v1991
      %v2114 = vpack.c.b16 %v1996, %v1994
      %v2115 = vpack.c.b16 %v1997, %v1995
      %v2116 = vpack.c.b16 %v2000, %v1998
      %v2117 = vpack.c.b16 %v2001, %v1999
      %v2118 = vpack.c.b16 %v2004, %v2002
      %v2119 = vpack.c.b16 %v2005, %v2003
      %v2120 = vpack.c.b16 %v2008, %v2006
      %v2121 = vpack.c.b16 %v2009, %v2007
      %v2122 = vpack.c.b16 %v2012, %v2010
      %v2123 = vpack.c.b16 %v2013, %v2011
      %v2124 = vpack.c.b16 %v2016, %v2014
      %v2125 = vpack.c.b16 %v2017, %v2015
      %v2126 = vpack.c.b16 %v2020, %v2018
      %v2127 = vpack.c.b16 %v2021, %v2019
      %v2128 = vpack.c.b16 %v2024, %v2022
      %v2129 = vpack.c.b16 %v2025, %v2023
      %v2130 = vpack.c.b16 %v2028, %v2026
      %v2131 = vpack.c.b16 %v2029, %v2027
      %v2132 = vpack.c.b16 %v2032, %v2030
      %v2133 = vpack.c.b16 %v2033, %v2031
      %v2134 = vpack.c.b16 %v2036, %v2034
      %v2135 = vpack.c.b16 %v2037, %v2035
      %v2136 = vpack.c.b16 %v2040, %v2038
      %v2137 = vpack.c.b16 %v2041, %v2039
      %v2138 = vpack.c.b16 %v2044, %v2042
      %v2139 = vpack.c.b16 %v2045, %v2043
      %v2140 = vpack.c.b16 %v2048, %v2046
      %v2141 = vpack.c.b16 %v2049, %v2047
      %v2142 = vpack.c.b16 %v2052, %v2050
      %v2143 = vpack.c.b16 %v2053, %v2051
      %v2144 = vpack.c.b16 %v2056, %v2054
      %v2145 = vpack.c.b16 %v2057, %v2055
      %v2146 = vpack.c.b16 %v2060, %v2058
      %v2147 = vpack.c.b16 %v2061, %v2059
      %v2148 = vpack.c.b16 %v2064, %v2062
      %v2149 = vpack.c.b16 %v2065, %v2063
      %v2150 = vpack.c.b16 %v2068, %v2066
      %v2151 = vpack.c.b16 %v2069, %v2067
      %v2152 = vpack.c.b16 %v2072, %v2070
      %v2153 = vpack.c.b16 %v2073, %v2071
      %v2154 = vpack.c.b16 %v2076, %v2074
      %v2155 = vpack.c.b16 %v2077, %v2075
      %v2156 = vpack.c.b16 %v2080, %v2078
      %v2157 = vpack.c.b16 %v2081, %v2079
      %v2158 = vpack.c.b16 %v2084, %v2082
      %v2159 = vpack.c.b16 %v2085, %v2083
      %v2160 = vpack.c.b16 %v2088, %v2086
      %v2161 = vpack.c.b16 %v2089, %v2087
      %v2162 = vpack.c.b16 %v2092, %v2090
      %v2163 = vpack.c.b16 %v2093, %v2091
      %v2164 = vpack.c.b16 %v2096, %v2094
      %v2165 = vpack.c.b16 %v2097, %v2095
      %v2166 = vpack.c.b16 %v2100, %v2098
      %v2167 = vpack.c.b16 %v2101, %v2099
      %v2168 = vpack.c.b16 %v2104, %v2102
      %v2169 = vpack.c.b16 %v2105, %v2103
      %v2170 = vpack.c.b16 %v2106, %v2106
      %v2171 = vpack.c.b16 %v2107, %v2107
      %vm2234 = vcmask 949248
      %v2236 = vsel %vm2234, %v1914, 0
      %v2239 = vsel %vm2234, %v1918, 0
      %v2242 = vsel %vm1219, %v2170, 0
      %v2245 = vsel %vm1219, %v2171, 0
      %2247 = vmatprep.subr.bf16.mxu0 %v2109
      %2248 = vmatpush1.bf16.msra.mxu0 %v2108
      %2249 = vmatprep.subr.bf16.mxu0 %v2111
      %2250 = vmatpush1.bf16.msra.mxu0 %v2110
      %2251 = vmatprep.subr.bf16.mxu0 %v2113
      %2252 = vmatpush1.bf16.msra.mxu0 %v2112
      %2253 = vmatprep.subr.bf16.mxu0 %v2115
      %2254 = vmatpush1.bf16.msra.mxu0 %v2114
      %2255 = vmatprep.subr.bf16.mxu0 %v2117
      %2256 = vmatpush1.bf16.msra.mxu0 %v2116
      %2257 = vmatprep.subr.bf16.mxu0 %v2119
      %2258 = vmatpush1.bf16.msra.mxu0 %v2118
      %2259 = vmatprep.subr.bf16.mxu0 %v2121
      %2260 = vmatpush1.bf16.msra.mxu0 %v2120
      %2261 = vmatprep.subr.bf16.mxu0 %v2123
      %2262 = vmatpush1.bf16.msra.mxu0 %v2122
      %2263 = vmatprep.subr.bf16.mxu0 %v2125
      %2264 = vmatpush1.bf16.msra.mxu0 %v2124
      %2265 = vmatprep.subr.bf16.mxu0 %v2127
      %2266 = vmatpush1.bf16.msra.mxu0 %v2126
      %2267 = vmatprep.subr.bf16.mxu0 %v2129
      %2268 = vmatpush1.bf16.msra.mxu0 %v2128
      %2269 = vmatprep.subr.bf16.mxu0 %v2131
      %2270 = vmatpush1.bf16.msra.mxu0 %v2130
      %2271 = vmatprep.subr.bf16.mxu0 %v2133
      %2272 = vmatpush1.bf16.msra.mxu0 %v2132
      %2273 = vmatprep.subr.bf16.mxu0 %v2135
      %2274 = vmatpush1.bf16.msra.mxu0 %v2134
      %2275 = vmatprep.subr.bf16.mxu0 %v2137
      %2276 = vmatpush1.bf16.msra.mxu0 %v2136
      %2277 = vmatprep.subr.bf16.mxu0 %v2139
      %2278 = vmatpush1.bf16.msra.mxu0 %v2138
      %2279 = vmatprep.mubr.bf16.mxu0 %v1912
      %2280 = vmatmul.mubr.bf16.gmra.mrb[0].mxu0 %v1911
      %v2281 = vpop.f32.mrb[0].mxu0
      %v2282 = vadd.f32 0.0, %v2281
      %v2283 = vpop.f32.mrb[0].mxu0
      %v2284 = vadd.f32 0.0, %v2283
      %v2285 = vpop.f32.mrb[0].mxu0
      %v2286 = vadd.f32 0.0, %v2285
      %v2287 = vpop.f32.mrb[0].mxu0
      %v2288 = vadd.f32 0.0, %v2287
      %2289 = vmatprep.mubr.bf16.mxu0 %v1916
      %2290 = vmatmul.mubr.bf16.gmra.mrb[0].mxu0 %v1915
      %v2291 = vpop.f32.mrb[0].mxu0
      %v2292 = vadd.f32 0.0, %v2291
      %v2293 = vpop.f32.mrb[0].mxu0
      %v2294 = vadd.f32 0.0, %v2293
      %v2295 = vpop.f32.mrb[0].mxu0
      %v2296 = vadd.f32 0.0, %v2295
      %v2297 = vpop.f32.mrb[0].mxu0
      %v2298 = vadd.f32 0.0, %v2297
      %2299 = vdwg.mxu0
      %2300 = vmatprep.subr.bf16.mxu0 %v2141
      %2301 = vmatpush1.bf16.msra.mxu0 %v2140
      %2302 = vmatprep.subr.bf16.mxu0 %v2143
      %2303 = vmatpush1.bf16.msra.mxu0 %v2142
      %2304 = vmatprep.subr.bf16.mxu0 %v2145
      %2305 = vmatpush1.bf16.msra.mxu0 %v2144
      %2306 = vmatprep.subr.bf16.mxu0 %v2147
      %2307 = vmatpush1.bf16.msra.mxu0 %v2146
      %2308 = vmatprep.subr.bf16.mxu0 %v2149
      %2309 = vmatpush1.bf16.msra.mxu0 %v2148
      %2310 = vmatprep.subr.bf16.mxu0 %v2151
      %2311 = vmatpush1.bf16.msra.mxu0 %v2150
      %2312 = vmatprep.subr.bf16.mxu0 %v2153
      %2313 = vmatpush1.bf16.msra.mxu0 %v2152
      %2314 = vmatprep.subr.bf16.mxu0 %v2155
      %2315 = vmatpush1.bf16.msra.mxu0 %v2154
      %2316 = vmatprep.subr.bf16.mxu0 %v2157
      %2317 = vmatpush1.bf16.msra.mxu0 %v2156
      %2318 = vmatprep.subr.bf16.mxu0 %v2159
      %2319 = vmatpush1.bf16.msra.mxu0 %v2158
      %2320 = vmatprep.subr.bf16.mxu0 %v2161
      %2321 = vmatpush1.bf16.msra.mxu0 %v2160
      %2322 = vmatprep.subr.bf16.mxu0 %v2163
      %2323 = vmatpush1.bf16.msra.mxu0 %v2162
      %2324 = vmatprep.subr.bf16.mxu0 %v2165
      %2325 = vmatpush1.bf16.msra.mxu0 %v2164
      %2326 = vmatprep.subr.bf16.mxu0 %v2167
      %2327 = vmatpush1.bf16.msra.mxu0 %v2166
      %2328 = vmatprep.subr.bf16.mxu0 %v2169
      %2329 = vmatpush1.bf16.msra.mxu0 %v2168
      %2330 = vmatprep.subr.bf16.mxu0 %v2245
      %2331 = vmatpush1.bf16.msra.mxu0 %v2242
      %2332 = vmatprep.mubr.bf16.mxu0 %v2236
      %2333 = vmatmul.mubr.bf16.gmra.mrb[0].mxu0 %v1913
      %v2334 = vpop.f32.mrb[0].mxu0
      %v2335 = vadd.f32 %v2282, %v2334
      %v2336 = vpop.f32.mrb[0].mxu0
      %v2337 = vadd.f32 %v2284, %v2336
      %v2338 = vpop.f32.mrb[0].mxu0
      %v2339 = vadd.f32 %v2286, %v2338
      %v2340 = vpop.f32.mrb[0].mxu0
      %v2341 = vadd.f32 %v2288, %v2340
      %2342 = vmatprep.mubr.bf16.mxu0 %v2239
      %2343 = vmatmul.mubr.bf16.gmra.mrb[0].mxu0 %v1917
      %v2344 = vpop.f32.mrb[0].mxu0
      %v2345 = vadd.f32 %v2292, %v2344
      %v2346 = vpop.f32.mrb[0].mxu0
      %v2347 = vadd.f32 %v2294, %v2346
      %v2348 = vpop.f32.mrb[0].mxu0
      %v2349 = vadd.f32 %v2296, %v2348
      %v2350 = vpop.f32.mrb[0].mxu0
      %v2351 = vadd.f32 %v2298, %v2350
      %2352 = vdwg.mxu0
      %v2353 = vpack.c.bf16 %v2339, %v2335
      %v2354 = vpack.c.bf16 %v2341, %v2337
      %v2355 = vpack.c.bf16 %v2349, %v2345
      %v2356 = vpack.c.bf16 %v2351, %v2347
      %2361 = vrot.lane.b32.xlu0 %v2353, 3
      %v2362 = vpop.permute.xlu0 %2361
      %2363 = vrot.lane.b32.xlu0 %v2354, 3
      %v2364 = vpop.permute.xlu0 %2363
      %2365 = vrot.lane.b32.xlu0 %v2355, 3
      %v2366 = vpop.permute.xlu0 %2365
      %2367 = vrot.lane.b32.xlu0 %v2356, 3
      %v2368 = vpop.permute.xlu0 %2367
      %v2369 = vsel %vm1094, %v2362, %v2364
      %v2370 = vsel %vm1094, %v2366, %v2368
      %v2372 = vsel %vm1098, 0, %v2362
      %v2375 = vsel %vm1098, 0, %v2366
      %vm2377 = vcmask 1022976
      %v2379 = vsel %vm2377, %v2369, 0
      %v2382 = vsel %vm2377, %v2370, 0
      %2388 = vrot.lane.b32.xlu0 %v2372, 127
      %v2389 = vpop.permute.xlu0 %2388
      %2390 = vrot.lane.b32.xlu0 %v2379, 127
      %v2391 = vpop.permute.xlu0 %2390
      %2392 = vrot.lane.b32.xlu0 %v2375, 127
      %v2393 = vpop.permute.xlu0 %2392
      %2394 = vrot.lane.b32.xlu0 %v2382, 127
      %v2395 = vpop.permute.xlu0 %2394
      %v2396 = vsel %vm1119, %v2389, %v2391
      %v2397 = vsel %vm1119, %v2393, %v2395
      %2402 = vrot.lane.b32.xlu0 %v2372, 126
      %v2403 = vpop.permute.xlu0 %2402
      %2404 = vrot.lane.b32.xlu0 %v2379, 126
      %v2405 = vpop.permute.xlu0 %2404
      %2406 = vrot.lane.b32.xlu0 %v2375, 126
      %v2407 = vpop.permute.xlu0 %2406
      %2408 = vrot.lane.b32.xlu0 %v2382, 126
      %v2409 = vpop.permute.xlu0 %2408
      %v2410 = vsel %vm1135, %v2403, %v2405
      %v2411 = vsel %vm1135, %v2407, %v2409
      %2416 = vrot.lane.b32.xlu0 %v2372, 125
      %v2417 = vpop.permute.xlu0 %2416
      %2418 = vrot.lane.b32.xlu0 %v2379, 125
      %v2419 = vpop.permute.xlu0 %2418
      %2420 = vrot.lane.b32.xlu0 %v2375, 125
      %v2421 = vpop.permute.xlu0 %2420
      %2422 = vrot.lane.b32.xlu0 %v2382, 125
      %v2423 = vpop.permute.xlu0 %2422
      %v2424 = vsel %vm1151, %v2417, %v2419
      %v2425 = vsel %vm1151, %v2421, %v2423
      %2430 = vrot.lane.b32.xlu0 %v2372, 124
      %v2431 = vpop.permute.xlu0 %2430
      %2432 = vrot.lane.b32.xlu0 %v2379, 124
      %v2433 = vpop.permute.xlu0 %2432
      %2434 = vrot.lane.b32.xlu0 %v2375, 124
      %v2435 = vpop.permute.xlu0 %2434
      %2436 = vrot.lane.b32.xlu0 %v2382, 124
      %v2437 = vpop.permute.xlu0 %2436
      %v2438 = vsel %vm1163, %v2431, %v2433
      %v2439 = vsel %vm1163, %v2435, %v2437
      %2444 = vrot.lane.b32.xlu0 %v2372, 123
      %v2445 = vpop.permute.xlu0 %2444
      %2446 = vrot.lane.b32.xlu0 %v2379, 123
      %v2447 = vpop.permute.xlu0 %2446
      %2448 = vrot.lane.b32.xlu0 %v2375, 123
      %v2449 = vpop.permute.xlu0 %2448
      %2450 = vrot.lane.b32.xlu0 %v2382, 123
      %v2451 = vpop.permute.xlu0 %2450
      %v2452 = vsel %vm1175, %v2445, %v2447
      %v2453 = vsel %vm1175, %v2449, %v2451
      %2458 = vrot.lane.b32.xlu0 %v2372, 122
      %v2459 = vpop.permute.xlu0 %2458
      %2460 = vrot.lane.b32.xlu0 %v2379, 122
      %v2461 = vpop.permute.xlu0 %2460
      %2462 = vrot.lane.b32.xlu0 %v2375, 122
      %v2463 = vpop.permute.xlu0 %2462
      %2464 = vrot.lane.b32.xlu0 %v2382, 122
      %v2465 = vpop.permute.xlu0 %2464
      %v2466 = vsel %vm1187, %v2459, %v2461
      %v2467 = vsel %vm1187, %v2463, %v2465
      %2472 = vmatprep.subr.bf16.mxu0 %v2379
      %2473 = vmatpush1.bf16.msra.mxu0 %v2372
      %2474 = vmatprep.subr.bf16.mxu0 %v2382
      %2475 = vmatpush1.bf16.msra.mxu0 %v2375
      %2476 = vmatprep.subr.bf16.mxu0 %v2391
      %2477 = vmatpush1.bf16.msra.mxu0 %v2396
      %2478 = vmatprep.subr.bf16.mxu0 %v2395
      %2479 = vmatpush1.bf16.msra.mxu0 %v2397
      %2480 = vmatprep.subr.bf16.mxu0 %v2405
      %2481 = vmatpush1.bf16.msra.mxu0 %v2410
      %2482 = vmatprep.subr.bf16.mxu0 %v2409
      %2483 = vmatpush1.bf16.msra.mxu0 %v2411
      %2484 = vmatprep.subr.bf16.mxu0 %v2419
      %2485 = vmatpush1.bf16.msra.mxu0 %v2424
      %2486 = vmatprep.subr.bf16.mxu0 %v2423
      %2487 = vmatpush1.bf16.msra.mxu0 %v2425
      %2488 = vmatprep.subr.bf16.mxu0 %v2433
      %2489 = vmatpush1.bf16.msra.mxu0 %v2438
      %2490 = vmatprep.subr.bf16.mxu0 %v2437
      %2491 = vmatpush1.bf16.msra.mxu0 %v2439
      %2492 = vmatprep.subr.bf16.mxu0 %v2447
      %2493 = vmatpush1.bf16.msra.mxu0 %v2452
      %2494 = vmatprep.subr.bf16.mxu0 %v2451
      %2495 = vmatpush1.bf16.msra.mxu0 %v2453
      %2496 = vmatprep.subr.bf16.mxu0 %v2461
      %2497 = vmatpush1.bf16.msra.mxu0 %v2466
      %2498 = vmatprep.subr.bf16.mxu0 %v2465
      %2499 = vmatpush1.bf16.msra.mxu0 %v2467
      %2500 = vmatprep.subr.bf16.mxu0 0
      %2501 = vmatpush1.bf16.msra.mxu0 0
      %2502 = vmatprep.subr.bf16.mxu0 0
      %2503 = vmatpush1.bf16.msra.mxu0 0
      %2504 = vmatprep.mubr.bf16.mxu0 %v1721
      %2505 = vmatmul.mubr.bf16.gmra.mrb[0].mxu0 %v1713
      %v2506 = vpop.f32.mrb[0].mxu0
      %v2507 = vadd.f32 %v1684, %v2506
      %v2508 = vpop.f32.mrb[0].mxu0
      %v2509 = vadd.f32 %v1684, %v2508
      %v2510 = vpop.f32.mrb[0].mxu0
      %v2511 = vadd.f32 %v1689, %v2510
      %v2512 = vpop.f32.mrb[0].mxu0
      %v2513 = vadd.f32 %v1689, %v2512
      %2514 = vmatprep.mubr.bf16.mxu0 %v1724
      %2515 = vmatmul.mubr.bf16.gmra.mrb[0].mxu0 %v1715
      %v2516 = vpop.f32.mrb[0].mxu0
      %v2517 = vadd.f32 %v1694, %v2516
      %v2518 = vpop.f32.mrb[0].mxu0
      %v2519 = vadd.f32 %v1694, %v2518
      %v2520 = vpop.f32.mrb[0].mxu0
      %v2521 = vadd.f32 %v1699, %v2520
      %v2522 = vpop.f32.mrb[0].mxu0
      %v2523 = vadd.f32 %v1699, %v2522
      %2524 = vdwg.mxu0
      %v2525 = vmax.f32 %v2507, 0.0
      %v2526 = vmax.f32 %v2509, 0.0
      %v2527 = vmax.f32 %v2511, 0.0
      %v2528 = vmax.f32 %v2513, 0.0
      %v2529 = vmax.f32 %v2517, 0.0
      %v2530 = vmax.f32 %v2519, 0.0
      %v2531 = vmax.f32 %v2521, 0.0
      %v2532 = vmax.f32 %v2523, 0.0
      %v2533 = vpack.c.bf16 %v2527, %v2525
      %v2534 = vpack.c.bf16 %v2528, %v2526
      %v2535 = vpack.c.bf16 %v2531, %v2529
      %v2536 = vpack.c.bf16 %v2532, %v2530
      %2541 = vrot.lane.b32.xlu0 %v2533, 3
      %v2542 = vpop.permute.xlu0 %2541
      %2543 = vrot.lane.b32.xlu0 %v2534, 3
      %v2544 = vpop.permute.xlu0 %2543
      %2545 = vrot.lane.b32.xlu0 %v2535, 3
      %v2546 = vpop.permute.xlu0 %2545
      %2547 = vrot.lane.b32.xlu0 %v2536, 3
      %v2548 = vpop.permute.xlu0 %2547
      %v2549 = vsel %vm1094, %v2542, %v2544
      %v2550 = vsel %vm1094, %v2546, %v2548
      %v2552 = vsel %vm1098, 0, %v2542
      %v2555 = vsel %vm1098, 0, %v2546
      %v2558 = vsel %vm2377, %v2549, 0
      %v2561 = vsel %vm2377, %v2550, 0
      %2567 = vrot.lane.b32.xlu0 %v2552, 127
      %v2568 = vpop.permute.xlu0 %2567
      %2569 = vrot.lane.b32.xlu0 %v2558, 127
      %v2570 = vpop.permute.xlu0 %2569
      %2571 = vrot.lane.b32.xlu0 %v2555, 127
      %v2572 = vpop.permute.xlu0 %2571
      %2573 = vrot.lane.b32.xlu0 %v2561, 127
      %v2574 = vpop.permute.xlu0 %2573
      %v2575 = vsel %vm1119, %v2568, %v2570
      %v2576 = vsel %vm1119, %v2572, %v2574
      %2581 = vrot.lane.b32.xlu0 %v2552, 126
      %v2582 = vpop.permute.xlu0 %2581
      %2583 = vrot.lane.b32.xlu0 %v2558, 126
      %v2584 = vpop.permute.xlu0 %2583
      %2585 = vrot.lane.b32.xlu0 %v2555, 126
      %v2586 = vpop.permute.xlu0 %2585
      %2587 = vrot.lane.b32.xlu0 %v2561, 126
      %v2588 = vpop.permute.xlu0 %2587
      %v2589 = vsel %vm1135, %v2582, %v2584
      %v2590 = vsel %vm1135, %v2586, %v2588
      %2595 = vrot.lane.b32.xlu0 %v2552, 125
      %v2596 = vpop.permute.xlu0 %2595
      %2597 = vrot.lane.b32.xlu0 %v2558, 125
      %v2598 = vpop.permute.xlu0 %2597
      %2599 = vrot.lane.b32.xlu0 %v2555, 125
      %v2600 = vpop.permute.xlu0 %2599
      %2601 = vrot.lane.b32.xlu0 %v2561, 125
      %v2602 = vpop.permute.xlu0 %2601
      %v2603 = vsel %vm1151, %v2596, %v2598
      %v2604 = vsel %vm1151, %v2600, %v2602
      %2609 = vrot.lane.b32.xlu0 %v2552, 124
      %v2610 = vpop.permute.xlu0 %2609
      %2611 = vrot.lane.b32.xlu0 %v2558, 124
      %v2612 = vpop.permute.xlu0 %2611
      %2613 = vrot.lane.b32.xlu0 %v2555, 124
      %v2614 = vpop.permute.xlu0 %2613
      %2615 = vrot.lane.b32.xlu0 %v2561, 124
      %v2616 = vpop.permute.xlu0 %2615
      %v2617 = vsel %vm1163, %v2610, %v2612
      %v2618 = vsel %vm1163, %v2614, %v2616
      %2623 = vrot.lane.b32.xlu0 %v2552, 123
      %v2624 = vpop.permute.xlu0 %2623
      %2625 = vrot.lane.b32.xlu0 %v2558, 123
      %v2626 = vpop.permute.xlu0 %2625
      %2627 = vrot.lane.b32.xlu0 %v2555, 123
      %v2628 = vpop.permute.xlu0 %2627
      %2629 = vrot.lane.b32.xlu0 %v2561, 123
      %v2630 = vpop.permute.xlu0 %2629
      %v2631 = vsel %vm1175, %v2624, %v2626
      %v2632 = vsel %vm1175, %v2628, %v2630
      %2637 = vrot.lane.b32.xlu0 %v2552, 122
      %v2638 = vpop.permute.xlu0 %2637
      %2639 = vrot.lane.b32.xlu0 %v2558, 122
      %v2640 = vpop.permute.xlu0 %2639
      %2641 = vrot.lane.b32.xlu0 %v2555, 122
      %v2642 = vpop.permute.xlu0 %2641
      %2643 = vrot.lane.b32.xlu0 %v2561, 122
      %v2644 = vpop.permute.xlu0 %2643
      %v2645 = vsel %vm1187, %v2638, %v2640
      %v2646 = vsel %vm1187, %v2642, %v2644
      %v2651 = vld [vmem:[%s11] sm:$0xff]
      %v2652 = vld [vmem:[%s11 + $0x8] sm:$0xff]
      %v2653 = vld [vmem:[%s11 + $0x10] sm:$0xff]
      %v2654 = vld [vmem:[%s11 + $0x18] sm:$0xff]
      %v2655 = vld [vmem:[%s13] sm:$0xff]
      %v2656 = vld [vmem:[%s13 + $0x8] sm:$0xff]
      %v2657 = vld [vmem:[%s13 + $0x10] sm:$0xff]
      %v2658 = vld [vmem:[%s13 + $0x18] sm:$0xff]
      %v2659 = vld [vmem:[%s15] sm:$0xff]
      %v2660 = vld [vmem:[%s15 + $0x8] sm:$0xff]
      %v2661 = vld [vmem:[%s15 + $0x10] sm:$0xff]
      %v2662 = vld [vmem:[%s15 + $0x18] sm:$0xff]
      %v2667 = vunpack.c.l.b16 %v2655
      %v2668 = vunpack.c.h.b16 %v2655
      %v2669 = vunpack.c.l.b16 %v2656
      %v2670 = vunpack.c.h.b16 %v2656
      %v2671 = vunpack.c.l.b16 %v2657
      %v2672 = vunpack.c.h.b16 %v2657
      %v2673 = vunpack.c.l.b16 %v2658
      %v2674 = vunpack.c.h.b16 %v2658
      %v2675 = vpack.c.b16 %v2669, %v2667
      %v2676 = vpack.c.b16 %v2670, %v2668
      %v2677 = vpack.c.b16 %v2673, %v2671
      %v2678 = vpack.c.b16 %v2674, %v2672
      %v2682 = vsel %vm1719, %v2676, 0
      %v2685 = vsel %vm1719, %v2678, 0
      %2687 = vmatprep.subr.bf16.mxu0 %v2558
      %2688 = vmatpush1.bf16.msra.mxu0 %v2552
      %2689 = vmatprep.subr.bf16.mxu0 %v2561
      %2690 = vmatpush1.bf16.msra.mxu0 %v2555
      %2691 = vmatprep.subr.bf16.mxu0 %v2570
      %2692 = vmatpush1.bf16.msra.mxu0 %v2575
      %2693 = vmatprep.subr.bf16.mxu0 %v2574
      %2694 = vmatpush1.bf16.msra.mxu0 %v2576
      %2695 = vmatprep.subr.bf16.mxu0 %v2584
      %2696 = vmatpush1.bf16.msra.mxu0 %v2589
      %2697 = vmatprep.subr.bf16.mxu0 %v2588
      %2698 = vmatpush1.bf16.msra.mxu0 %v2590
      %2699 = vmatprep.subr.bf16.mxu0 %v2598
      %2700 = vmatpush1.bf16.msra.mxu0 %v2603
      %2701 = vmatprep.subr.bf16.mxu0 %v2602
      %2702 = vmatpush1.bf16.msra.mxu0 %v2604
      %2703 = vmatprep.subr.bf16.mxu0 %v2612
      %2704 = vmatpush1.bf16.msra.mxu0 %v2617
      %2705 = vmatprep.subr.bf16.mxu0 %v2616
      %2706 = vmatpush1.bf16.msra.mxu0 %v2618
      %2707 = vmatprep.subr.bf16.mxu0 %v2626
      %2708 = vmatpush1.bf16.msra.mxu0 %v2631
      %2709 = vmatprep.subr.bf16.mxu0 %v2630
      %2710 = vmatpush1.bf16.msra.mxu0 %v2632
      %2711 = vmatprep.subr.bf16.mxu0 %v2640
      %2712 = vmatpush1.bf16.msra.mxu0 %v2645
      %2713 = vmatprep.subr.bf16.mxu0 %v2644
      %2714 = vmatpush1.bf16.msra.mxu0 %v2646
      %2715 = vmatprep.subr.bf16.mxu0 0
      %2716 = vmatpush1.bf16.msra.mxu0 0
      %2717 = vmatprep.subr.bf16.mxu0 0
      %2718 = vmatpush1.bf16.msra.mxu0 0
      %2719 = vmatprep.mubr.bf16.mxu0 %v2682
      %2720 = vmatmul.mubr.bf16.gmra.mrb[0].mxu0 %v2675
      %v2721 = vpop.f32.mrb[0].mxu0
      %v2722 = vadd.f32 0.0, %v2721
      %v2723 = vpop.f32.mrb[0].mxu0
      %v2724 = vadd.f32 0.0, %v2723
      %v2725 = vpop.f32.mrb[0].mxu0
      %v2726 = vadd.f32 0.0, %v2725
      %v2727 = vpop.f32.mrb[0].mxu0
      %v2728 = vadd.f32 0.0, %v2727
      %2729 = vmatprep.mubr.bf16.mxu0 %v2685
      %2730 = vmatmul.mubr.bf16.gmra.mrb[0].mxu0 %v2677
      %v2731 = vpop.f32.mrb[0].mxu0
      %v2732 = vadd.f32 0.0, %v2731
      %v2733 = vpop.f32.mrb[0].mxu0
      %v2734 = vadd.f32 0.0, %v2733
      %v2735 = vpop.f32.mrb[0].mxu0
      %v2736 = vadd.f32 0.0, %v2735
      %v2737 = vpop.f32.mrb[0].mxu0
      %v2738 = vadd.f32 0.0, %v2737
      %2739 = vdwg.mxu0
      %v2744 = vunpack.c.l.b16 %v2651
      %v2745 = vunpack.c.h.b16 %v2651
      %v2746 = vunpack.c.l.b16 %v2652
      %v2747 = vunpack.c.h.b16 %v2652
      %v2748 = vunpack.c.l.b16 %v2653
      %v2749 = vunpack.c.h.b16 %v2653
      %v2750 = vunpack.c.l.b16 %v2654
      %v2751 = vunpack.c.h.b16 %v2654
      %v2752 = vpack.c.b16 %v2746, %v2744
      %v2753 = vpack.c.b16 %v2747, %v2745
      %v2754 = vpack.c.b16 %v2750, %v2748
      %v2755 = vpack.c.b16 %v2751, %v2749
      %v2759 = vsel %vm1719, %v2753, 0
      %v2762 = vsel %vm1719, %v2755, 0
      %2764 = vmatprep.subr.bf16.mxu0 %v2379
      %2765 = vmatpush1.bf16.msra.mxu0 %v2372
      %2766 = vmatprep.subr.bf16.mxu0 %v2382
      %2767 = vmatpush1.bf16.msra.mxu0 %v2375
      %2768 = vmatprep.subr.bf16.mxu0 %v2391
      %2769 = vmatpush1.bf16.msra.mxu0 %v2396
      %2770 = vmatprep.subr.bf16.mxu0 %v2395
      %2771 = vmatpush1.bf16.msra.mxu0 %v2397
      %2772 = vmatprep.subr.bf16.mxu0 %v2405
      %2773 = vmatpush1.bf16.msra.mxu0 %v2410
      %2774 = vmatprep.subr.bf16.mxu0 %v2409
      %2775 = vmatpush1.bf16.msra.mxu0 %v2411
      %2776 = vmatprep.subr.bf16.mxu0 %v2419
      %2777 = vmatpush1.bf16.msra.mxu0 %v2424
      %2778 = vmatprep.subr.bf16.mxu0 %v2423
      %2779 = vmatpush1.bf16.msra.mxu0 %v2425
      %2780 = vmatprep.subr.bf16.mxu0 %v2433
      %2781 = vmatpush1.bf16.msra.mxu0 %v2438
      %2782 = vmatprep.subr.bf16.mxu0 %v2437
      %2783 = vmatpush1.bf16.msra.mxu0 %v2439
      %2784 = vmatprep.subr.bf16.mxu0 %v2447
      %2785 = vmatpush1.bf16.msra.mxu0 %v2452
      %2786 = vmatprep.subr.bf16.mxu0 %v2451
      %2787 = vmatpush1.bf16.msra.mxu0 %v2453
      %2788 = vmatprep.subr.bf16.mxu0 %v2461
      %2789 = vmatpush1.bf16.msra.mxu0 %v2466
      %2790 = vmatprep.subr.bf16.mxu0 %v2465
      %2791 = vmatpush1.bf16.msra.mxu0 %v2467
      %2792 = vmatprep.subr.bf16.mxu0 0
      %2793 = vmatpush1.bf16.msra.mxu0 0
      %2794 = vmatprep.subr.bf16.mxu0 0
      %2795 = vmatpush1.bf16.msra.mxu0 0
      %2796 = vmatprep.mubr.bf16.mxu0 %v2759
      %2797 = vmatmul.mubr.bf16.gmra.mrb[0].mxu0 %v2752
      %v2798 = vpop.f32.mrb[0].mxu0
      %v2799 = vadd.f32 %v2722, %v2798
      %v2800 = vpop.f32.mrb[0].mxu0
      %v2801 = vadd.f32 %v2724, %v2800
      %v2802 = vpop.f32.mrb[0].mxu0
      %v2803 = vadd.f32 %v2726, %v2802
      %v2804 = vpop.f32.mrb[0].mxu0
      %v2805 = vadd.f32 %v2728, %v2804
      %2806 = vmatprep.mubr.bf16.mxu0 %v2762
      %2807 = vmatmul.mubr.bf16.gmra.mrb[0].mxu0 %v2754
      %v2808 = vpop.f32.mrb[0].mxu0
      %v2809 = vadd.f32 %v2732, %v2808
      %v2810 = vpop.f32.mrb[0].mxu0
      %v2811 = vadd.f32 %v2734, %v2810
      %v2812 = vpop.f32.mrb[0].mxu0
      %v2813 = vadd.f32 %v2736, %v2812
      %v2814 = vpop.f32.mrb[0].mxu0
      %v2815 = vadd.f32 %v2738, %v2814
      %2816 = vdwg.mxu0
      %2818 = vset.pattern.permute.xlu0 0
      %2819 = vperm.xlu0 %2818, %v2659
      %v2820 = vpop.permute.xlu0 %2819
      %2823 = vset.pattern.permute.xlu0 0
      %2824 = vperm.xlu0 %2823, %v2660
      %v2825 = vpop.permute.xlu0 %2824
      %2828 = vset.pattern.permute.xlu0 0
      %2829 = vperm.xlu0 %2828, %v2661
      %v2830 = vpop.permute.xlu0 %2829
      %2833 = vset.pattern.permute.xlu0 0
      %2834 = vperm.xlu0 %2833, %v2662
      %v2835 = vpop.permute.xlu0 %2834
      %v2837 = vadd.f32 %v2799, %v2820
      %v2838 = vadd.f32 %v2801, %v2820
      %v2839 = vadd.f32 %v2803, %v2825
      %v2840 = vadd.f32 %v2805, %v2825
      %v2841 = vadd.f32 %v2809, %v2830
      %v2842 = vadd.f32 %v2811, %v2830
      %v2843 = vadd.f32 %v2813, %v2835
      %v2844 = vadd.f32 %v2815, %v2835
      %v2845 = vmax.f32 %v2837, 0.0
      %v2846 = vmax.f32 %v2838, 0.0
      %v2847 = vmax.f32 %v2839, 0.0
      %v2848 = vmax.f32 %v2840, 0.0
      %v2849 = vmax.f32 %v2841, 0.0
      %v2850 = vmax.f32 %v2842, 0.0
      %v2851 = vmax.f32 %v2843, 0.0
      %v2852 = vmax.f32 %v2844, 0.0
      %v2853 = vpack.c.bf16 %v2847, %v2845
      %v2854 = vpack.c.bf16 %v2848, %v2846
      %v2855 = vpack.c.bf16 %v2851, %v2849
      %v2856 = vpack.c.bf16 %v2852, %v2850
      %2861 = vrot.lane.b32.xlu0 %v2853, 3
      %v2862 = vpop.permute.xlu0 %2861
      %2863 = vrot.lane.b32.xlu0 %v2854, 3
      %v2864 = vpop.permute.xlu0 %2863
      %2865 = vrot.lane.b32.xlu0 %v2855, 3
      %v2866 = vpop.permute.xlu0 %2865
      %2867 = vrot.lane.b32.xlu0 %v2856, 3
      %v2868 = vpop.permute.xlu0 %2867
      %v2869 = vsel %vm1094, %v2862, %v2864
      %v2870 = vsel %vm1094, %v2866, %v2868
      %v2872 = vsel %vm1098, 0, %v2862
      %v2875 = vsel %vm1098, 0, %v2866
      %v2878 = vsel %vm2377, %v2869, 0
      %v2881 = vsel %vm2377, %v2870, 0
      %2887 = vrot.lane.b32.xlu0 %v2872, 127
      %v2888 = vpop.permute.xlu0 %2887
      %2889 = vrot.lane.b32.xlu0 %v2878, 127
      %v2890 = vpop.permute.xlu0 %2889
      %2891 = vrot.lane.b32.xlu0 %v2875, 127
      %v2892 = vpop.permute.xlu0 %2891
      %2893 = vrot.lane.b32.xlu0 %v2881, 127
      %v2894 = vpop.permute.xlu0 %2893
      %v2895 = vsel %vm1119, %v2888, %v2890
      %v2896 = vsel %vm1119, %v2892, %v2894
      %2901 = vrot.lane.b32.xlu0 %v2872, 126
      %v2902 = vpop.permute.xlu0 %2901
      %2903 = vrot.lane.b32.xlu0 %v2878, 126
      %v2904 = vpop.permute.xlu0 %2903
      %2905 = vrot.lane.b32.xlu0 %v2875, 126
      %v2906 = vpop.permute.xlu0 %2905
      %2907 = vrot.lane.b32.xlu0 %v2881, 126
      %v2908 = vpop.permute.xlu0 %2907
      %v2909 = vsel %vm1135, %v2902, %v2904
      %v2910 = vsel %vm1135, %v2906, %v2908
      %2915 = vrot.lane.b32.xlu0 %v2872, 125
      %v2916 = vpop.permute.xlu0 %2915
      %2917 = vrot.lane.b32.xlu0 %v2878, 125
      %v2918 = vpop.permute.xlu0 %2917
      %2919 = vrot.lane.b32.xlu0 %v2875, 125
      %v2920 = vpop.permute.xlu0 %2919
      %2921 = vrot.lane.b32.xlu0 %v2881, 125
      %v2922 = vpop.permute.xlu0 %2921
      %v2923 = vsel %vm1151, %v2916, %v2918
      %v2924 = vsel %vm1151, %v2920, %v2922
      %2929 = vrot.lane.b32.xlu0 %v2872, 124
      %v2930 = vpop.permute.xlu0 %2929
      %2931 = vrot.lane.b32.xlu0 %v2878, 124
      %v2932 = vpop.permute.xlu0 %2931
      %2933 = vrot.lane.b32.xlu0 %v2875, 124
      %v2934 = vpop.permute.xlu0 %2933
      %2935 = vrot.lane.b32.xlu0 %v2881, 124
      %v2936 = vpop.permute.xlu0 %2935
      %v2937 = vsel %vm1163, %v2930, %v2932
      %v2938 = vsel %vm1163, %v2934, %v2936
      %2943 = vrot.lane.b32.xlu0 %v2872, 123
      %v2944 = vpop.permute.xlu0 %2943
      %2945 = vrot.lane.b32.xlu0 %v2878, 123
      %v2946 = vpop.permute.xlu0 %2945
      %2947 = vrot.lane.b32.xlu0 %v2875, 123
      %v2948 = vpop.permute.xlu0 %2947
      %2949 = vrot.lane.b32.xlu0 %v2881, 123
      %v2950 = vpop.permute.xlu0 %2949
      %v2951 = vsel %vm1175, %v2944, %v2946
      %v2952 = vsel %vm1175, %v2948, %v2950
      %2957 = vrot.lane.b32.xlu0 %v2872, 122
      %v2958 = vpop.permute.xlu0 %2957
      %2959 = vrot.lane.b32.xlu0 %v2878, 122
      %v2960 = vpop.permute.xlu0 %2959
      %2961 = vrot.lane.b32.xlu0 %v2875, 122
      %v2962 = vpop.permute.xlu0 %2961
      %2963 = vrot.lane.b32.xlu0 %v2881, 122
      %v2964 = vpop.permute.xlu0 %2963
      %v2965 = vsel %vm1187, %v2958, %v2960
      %v2966 = vsel %vm1187, %v2962, %v2964
      %v2971 = vld [vmem:[%s17] sm:$0xff]
      %v2972 = vld [vmem:[%s17 + $0x8] sm:$0xff]
      %v2973 = vld [vmem:[%s17 + $0x10] sm:$0xff]
      %v2974 = vld [vmem:[%s19] sm:$0xff]
      %v2975 = vld [vmem:[%s19 + $0x8] sm:$0xff]
      %v2976 = vld [vmem:[%s19 + $0x10] sm:$0xff]
      %v2977 = vld [vmem:[%s21] sm:$0xff]
      %v2978 = vld [vmem:[%s21 + $0x8] sm:$0xff]
      %v2979 = vld [vmem:[%s21 + $0x10] sm:$0xff]
      %v2980 = vld [vmem:[%s23] sm:$0xff]
      %v2981 = vld [vmem:[%s23 + $0x8] sm:$0xff]
      %v2982 = vld [vmem:[%s23 + $0x10] sm:$0xff]
      %v2986 = vunpack.c.l.b16 %v2974
      %v2987 = vunpack.c.h.b16 %v2974
      %v2988 = vunpack.c.l.b16 %v2975
      %v2989 = vunpack.c.h.b16 %v2975
      %v2990 = vunpack.c.l.b16 %v2976
      %v2991 = vunpack.c.h.b16 %v2976
      %v2992 = vpack.c.b16 %v2988, %v2986
      %v2993 = vpack.c.b16 %v2989, %v2987
      %v2994 = vpack.c.b16 %v2990, %v2990
      %v2995 = vpack.c.b16 %v2991, %v2991
      %v2999 = vsel %vm1719, %v2993, 0
      %v3002 = vsel %vm1719, %v2995, 0
      %3004 = vmatprep.subr.bf16.mxu0 %v2558
      %3005 = vmatpush1.bf16.msra.mxu0 %v2552
      %3006 = vmatprep.subr.bf16.mxu0 %v2561
      %3007 = vmatpush1.bf16.msra.mxu0 %v2555
      %3008 = vmatprep.subr.bf16.mxu0 %v2570
      %3009 = vmatpush1.bf16.msra.mxu0 %v2575
      %3010 = vmatprep.subr.bf16.mxu0 %v2574
      %3011 = vmatpush1.bf16.msra.mxu0 %v2576
      %3012 = vmatprep.subr.bf16.mxu0 %v2584
      %3013 = vmatpush1.bf16.msra.mxu0 %v2589
      %3014 = vmatprep.subr.bf16.mxu0 %v2588
      %3015 = vmatpush1.bf16.msra.mxu0 %v2590
      %3016 = vmatprep.subr.bf16.mxu0 %v2598
      %3017 = vmatpush1.bf16.msra.mxu0 %v2603
      %3018 = vmatprep.subr.bf16.mxu0 %v2602
      %3019 = vmatpush1.bf16.msra.mxu0 %v2604
      %3020 = vmatprep.subr.bf16.mxu0 %v2612
      %3021 = vmatpush1.bf16.msra.mxu0 %v2617
      %3022 = vmatprep.subr.bf16.mxu0 %v2616
      %3023 = vmatpush1.bf16.msra.mxu0 %v2618
      %3024 = vmatprep.subr.bf16.mxu0 %v2626
      %3025 = vmatpush1.bf16.msra.mxu0 %v2631
      %3026 = vmatprep.subr.bf16.mxu0 %v2630
      %3027 = vmatpush1.bf16.msra.mxu0 %v2632
      %3028 = vmatprep.subr.bf16.mxu0 %v2640
      %3029 = vmatpush1.bf16.msra.mxu0 %v2645
      %3030 = vmatprep.subr.bf16.mxu0 %v2644
      %3031 = vmatpush1.bf16.msra.mxu0 %v2646
      %3032 = vmatprep.subr.bf16.mxu0 0
      %3033 = vmatpush1.bf16.msra.mxu0 0
      %3034 = vmatprep.subr.bf16.mxu0 0
      %3035 = vmatpush1.bf16.msra.mxu0 0
      %3036 = vmatprep.mubr.bf16.mxu0 %v2999
      %3037 = vmatmul.mubr.bf16.gmra.mrb[0].mxu0 %v2992
      %v3038 = vpop.f32.mrb[0].mxu0
      %v3039 = vadd.f32 0.0, %v3038
      %v3040 = vpop.f32.mrb[0].mxu0
      %v3041 = vadd.f32 0.0, %v3040
      %v3042 = vpop.f32.mrb[0].mxu0
      %v3043 = vadd.f32 0.0, %v3042
      %v3044 = vpop.f32.mrb[0].mxu0
      %v3045 = vadd.f32 0.0, %v3044
      %3046 = vmatprep.mubr.bf16.mxu0 %v3002
      %3047 = vmatmul.mubr.bf16.gmra.mrb[0].mxu0 %v2994
      %v3048 = vpop.f32.mrb[0].mxu0
      %v3049 = vadd.f32 0.0, %v3048
      %v3050 = vpop.f32.mrb[0].mxu0
      %v3051 = vadd.f32 0.0, %v3050
      %v3052 = vpop.f32.mrb[0].mxu0
      %v3053 = vpop.f32.mrb[0].mxu0
      %3054 = vdwg.mxu0
      %v3058 = vunpack.c.l.b16 %v2971
      %v3059 = vunpack.c.h.b16 %v2971
      %v3060 = vunpack.c.l.b16 %v2972
      %v3061 = vunpack.c.h.b16 %v2972
      %v3062 = vunpack.c.l.b16 %v2973
      %v3063 = vunpack.c.h.b16 %v2973
      %v3064 = vpack.c.b16 %v3060, %v3058
      %v3065 = vpack.c.b16 %v3061, %v3059
      %v3066 = vpack.c.b16 %v3062, %v3062
      %v3067 = vpack.c.b16 %v3063, %v3063
      %v3071 = vsel %vm1719, %v3065, 0
      %v3074 = vsel %vm1719, %v3067, 0
      %3076 = vmatprep.subr.bf16.mxu0 %v2379
      %3077 = vmatpush1.bf16.msra.mxu0 %v2372
      %3078 = vmatprep.subr.bf16.mxu0 %v2382
      %3079 = vmatpush1.bf16.msra.mxu0 %v2375
      %3080 = vmatprep.subr.bf16.mxu0 %v2391
      %3081 = vmatpush1.bf16.msra.mxu0 %v2396
      %3082 = vmatprep.subr.bf16.mxu0 %v2395
      %3083 = vmatpush1.bf16.msra.mxu0 %v2397
      %3084 = vmatprep.subr.bf16.mxu0 %v2405
      %3085 = vmatpush1.bf16.msra.mxu0 %v2410
      %3086 = vmatprep.subr.bf16.mxu0 %v2409
      %3087 = vmatpush1.bf16.msra.mxu0 %v2411
      %3088 = vmatprep.subr.bf16.mxu0 %v2419
      %3089 = vmatpush1.bf16.msra.mxu0 %v2424
      %3090 = vmatprep.subr.bf16.mxu0 %v2423
      %3091 = vmatpush1.bf16.msra.mxu0 %v2425
      %3092 = vmatprep.subr.bf16.mxu0 %v2433
      %3093 = vmatpush1.bf16.msra.mxu0 %v2438
      %3094 = vmatprep.subr.bf16.mxu0 %v2437
      %3095 = vmatpush1.bf16.msra.mxu0 %v2439
      %3096 = vmatprep.subr.bf16.mxu0 %v2447
      %3097 = vmatpush1.bf16.msra.mxu0 %v2452
      %3098 = vmatprep.subr.bf16.mxu0 %v2451
      %3099 = vmatpush1.bf16.msra.mxu0 %v2453
      %3100 = vmatprep.subr.bf16.mxu0 %v2461
      %3101 = vmatpush1.bf16.msra.mxu0 %v2466
      %3102 = vmatprep.subr.bf16.mxu0 %v2465
      %3103 = vmatpush1.bf16.msra.mxu0 %v2467
      %3104 = vmatprep.subr.bf16.mxu0 0
      %3105 = vmatpush1.bf16.msra.mxu0 0
      %3106 = vmatprep.subr.bf16.mxu0 0
      %3107 = vmatpush1.bf16.msra.mxu0 0
      %3108 = vmatprep.mubr.bf16.mxu0 %v3071
      %3109 = vmatmul.mubr.bf16.gmra.mrb[0].mxu0 %v3064
      %v3110 = vpop.f32.mrb[0].mxu0
      %v3111 = vadd.f32 %v3039, %v3110
      %v3112 = vpop.f32.mrb[0].mxu0
      %v3113 = vadd.f32 %v3041, %v3112
      %v3114 = vpop.f32.mrb[0].mxu0
      %v3115 = vadd.f32 %v3043, %v3114
      %v3116 = vpop.f32.mrb[0].mxu0
      %v3117 = vadd.f32 %v3045, %v3116
      %3118 = vmatprep.mubr.bf16.mxu0 %v3074
      %3119 = vmatmul.mubr.bf16.gmra.mrb[0].mxu0 %v3066
      %v3120 = vpop.f32.mrb[0].mxu0
      %v3121 = vadd.f32 %v3049, %v3120
      %v3122 = vpop.f32.mrb[0].mxu0
      %v3123 = vadd.f32 %v3051, %v3122
      %v3124 = vpop.f32.mrb[0].mxu0
      %v3125 = vpop.f32.mrb[0].mxu0
      %3126 = vdwg.mxu0
      %v3130 = vunpack.c.l.b16 %v2977
      %v3131 = vunpack.c.h.b16 %v2977
      %v3132 = vunpack.c.l.b16 %v2978
      %v3133 = vunpack.c.h.b16 %v2978
      %v3134 = vunpack.c.l.b16 %v2979
      %v3135 = vunpack.c.h.b16 %v2979
      %v3136 = vpack.c.b16 %v3132, %v3130
      %v3137 = vpack.c.b16 %v3133, %v3131
      %v3138 = vpack.c.b16 %v3134, %v3134
      %v3139 = vpack.c.b16 %v3135, %v3135
      %v3143 = vsel %vm1719, %v3137, 0
      %v3146 = vsel %vm1719, %v3139, 0
      %3148 = vmatprep.subr.bf16.mxu0 %v2878
      %3149 = vmatpush1.bf16.msra.mxu0 %v2872
      %3150 = vmatprep.subr.bf16.mxu0 %v2881
      %3151 = vmatpush1.bf16.msra.mxu0 %v2875
      %3152 = vmatprep.subr.bf16.mxu0 %v2890
      %3153 = vmatpush1.bf16.msra.mxu0 %v2895
      %3154 = vmatprep.subr.bf16.mxu0 %v2894
      %3155 = vmatpush1.bf16.msra.mxu0 %v2896
      %3156 = vmatprep.subr.bf16.mxu0 %v2904
      %3157 = vmatpush1.bf16.msra.mxu0 %v2909
      %3158 = vmatprep.subr.bf16.mxu0 %v2908
      %3159 = vmatpush1.bf16.msra.mxu0 %v2910
      %3160 = vmatprep.subr.bf16.mxu0 %v2918
      %3161 = vmatpush1.bf16.msra.mxu0 %v2923
      %3162 = vmatprep.subr.bf16.mxu0 %v2922
      %3163 = vmatpush1.bf16.msra.mxu0 %v2924
      %3164 = vmatprep.subr.bf16.mxu0 %v2932
      %3165 = vmatpush1.bf16.msra.mxu0 %v2937
      %3166 = vmatprep.subr.bf16.mxu0 %v2936
      %3167 = vmatpush1.bf16.msra.mxu0 %v2938
      %3168 = vmatprep.subr.bf16.mxu0 %v2946
      %3169 = vmatpush1.bf16.msra.mxu0 %v2951
      %3170 = vmatprep.subr.bf16.mxu0 %v2950
      %3171 = vmatpush1.bf16.msra.mxu0 %v2952
      %3172 = vmatprep.subr.bf16.mxu0 %v2960
      %3173 = vmatpush1.bf16.msra.mxu0 %v2965
      %3174 = vmatprep.subr.bf16.mxu0 %v2964
      %3175 = vmatpush1.bf16.msra.mxu0 %v2966
      %3176 = vmatprep.subr.bf16.mxu0 0
      %3177 = vmatpush1.bf16.msra.mxu0 0
      %3178 = vmatprep.subr.bf16.mxu0 0
      %3179 = vmatpush1.bf16.msra.mxu0 0
      %3180 = vmatprep.mubr.bf16.mxu0 %v3143
      %3181 = vmatmul.mubr.bf16.gmra.mrb[0].mxu0 %v3136
      %v3182 = vpop.f32.mrb[0].mxu0
      %v3183 = vadd.f32 0.0, %v3182
      %v3184 = vpop.f32.mrb[0].mxu0
      %v3185 = vadd.f32 0.0, %v3184
      %v3186 = vpop.f32.mrb[0].mxu0
      %v3187 = vadd.f32 0.0, %v3186
      %v3188 = vpop.f32.mrb[0].mxu0
      %v3189 = vadd.f32 0.0, %v3188
      %3190 = vmatprep.mubr.bf16.mxu0 %v3146
      %3191 = vmatmul.mubr.bf16.gmra.mrb[0].mxu0 %v3138
      %v3192 = vpop.f32.mrb[0].mxu0
      %v3193 = vadd.f32 0.0, %v3192
      %v3194 = vpop.f32.mrb[0].mxu0
      %v3195 = vadd.f32 0.0, %v3194
      %v3196 = vpop.f32.mrb[0].mxu0
      %v3197 = vpop.f32.mrb[0].mxu0
      %3198 = vdwg.mxu0
      %v3199 = vadd.f32 %v3111, %v3183
      %v3200 = vadd.f32 %v3113, %v3185
      %v3201 = vadd.f32 %v3115, %v3187
      %v3202 = vadd.f32 %v3117, %v3189
      %v3203 = vadd.f32 %v3121, %v3193
      %v3204 = vadd.f32 %v3123, %v3195
      %3206 = vset.pattern.permute.xlu0 0
      %3207 = vperm.xlu0 %3206, %v2980
      %v3208 = vpop.permute.xlu0 %3207
      %3211 = vset.pattern.permute.xlu0 0
      %3212 = vperm.xlu0 %3211, %v2981
      %v3213 = vpop.permute.xlu0 %3212
      %3216 = vset.pattern.permute.xlu0 0
      %3217 = vperm.xlu0 %3216, %v2982
      %v3218 = vpop.permute.xlu0 %3217
      %v3220 = vadd.f32 %v3199, %v3208
      %v3221 = vadd.f32 %v3200, %v3208
      %v3222 = vadd.f32 %v3201, %v3213
      %v3223 = vadd.f32 %v3202, %v3213
      %v3224 = vadd.f32 %v3203, %v3218
      %v3225 = vadd.f32 %v3204, %v3218
      %v3226 = vmax.f32 %v3220, 0.0
      %v3227 = vmax.f32 %v3221, 0.0
      %v3228 = vmax.f32 %v3222, 0.0
      %v3229 = vmax.f32 %v3223, 0.0
      %v3230 = vmax.f32 %v3224, 0.0
      %v3231 = vmax.f32 %v3225, 0.0
      %v3232 = vld [vmem:[%s55] sm:$0xf]
      %v3233 = vld [vmem:[%s55 + $0x4] sm:$0xf]
      %v3234 = vld [vmem:[%s55 + $0x8] sm:$0xf]
      %v3235 = vld [vmem:[%s55 + $0xc] sm:$0xf]
      %v3236 = vld [vmem:[%s55 + $0x10] sm:$0xf]
      %v3237 = vld [vmem:[%s55 + $0x14] sm:$0xf]
      %v3238 = vld [vmem:[%s55 + $0x18] sm:$0xf]
      %v3239 = vld [vmem:[%s55 + $0x1c] sm:$0xf]
      %v3240 = vld [vmem:[%s55 + $0x20] sm:$0xf]
      %v3241 = vld [vmem:[%s55 + $0x24] sm:$0xf]
      %v3242 = vld [vmem:[%s55 + $0x28] sm:$0xf]
      %v3243 = vld [vmem:[%s55 + $0x2c] sm:$0xf]
      %v3244 = vld [vmem:[%s55 + $0x30] sm:$0xf]
      %v3245 = vld [vmem:[%s55 + $0x34] sm:$0xf]
      %v3246 = vld [vmem:[%s55 + $0x38] sm:$0xf]
      %v3247 = vld [vmem:[%s55 + $0x3c] sm:$0xf]
      %v3248 = vld [vmem:[%s55 + $0x40] sm:$0xf]
      %v3249 = vld [vmem:[%s55 + $0x44] sm:$0xf]
      %v3250 = vld [vmem:[%s55 + $0x48] sm:$0xf]
      %v3251 = vld [vmem:[%s55 + $0x4c] sm:$0xf]
      %v3252 = vld [vmem:[%s55 + $0x50] sm:$0xf]
      %v3253 = vld [vmem:[%s55 + $0x54] sm:$0xf]
      %v3254 = vld [vmem:[%s55 + $0x58] sm:$0xf]
      %v3255 = vld [vmem:[%s55 + $0x5c] sm:$0xf]
      %v3256 = vld [vmem:[%s55 + $0x60] sm:$0xf]
      %v3257 = vld [vmem:[%s55 + $0x64] sm:$0xf]
      %v3258 = vld [vmem:[%s55 + $0x68] sm:$0xf]
      %v3259 = vld [vmem:[%s55 + $0x6c] sm:$0xf]
      %v3260 = vld [vmem:[%s55 + $0x70] sm:$0xf]
      %v3261 = vld [vmem:[%s55 + $0x74] sm:$0xf]
      %v3262 = vld [vmem:[%s55 + $0x78] sm:$0xf]
      %v3263 = vld [vmem:[%s55 + $0x7c] sm:$0x1]
      %v3264 = vpack.c.bf16 %v3228, %v3226
      %v3265 = vpack.c.bf16 %v3229, %v3227
      %v3266 = vpack.c.bf16 %v3230, %v3230
      %v3267 = vpack.c.bf16 %v3231, %v3231
      %v3300 = vunpack.c.l.b16 %v3232
      %v3301 = vunpack.c.l.b16 %v3233
      %v3302 = vunpack.c.l.b16 %v3234
      %v3303 = vunpack.c.l.b16 %v3235
      %v3304 = vunpack.c.l.b16 %v3236
      %v3305 = vunpack.c.l.b16 %v3237
      %v3306 = vunpack.c.l.b16 %v3238
      %v3307 = vunpack.c.l.b16 %v3239
      %v3308 = vunpack.c.l.b16 %v3240
      %v3309 = vunpack.c.l.b16 %v3241
      %v3310 = vunpack.c.l.b16 %v3242
      %v3311 = vunpack.c.l.b16 %v3243
      %v3312 = vunpack.c.l.b16 %v3244
      %v3313 = vunpack.c.l.b16 %v3245
      %v3314 = vunpack.c.l.b16 %v3246
      %v3315 = vunpack.c.l.b16 %v3247
      %v3316 = vunpack.c.l.b16 %v3248
      %v3317 = vunpack.c.l.b16 %v3249
      %v3318 = vunpack.c.l.b16 %v3250
      %v3319 = vunpack.c.l.b16 %v3251
      %v3320 = vunpack.c.l.b16 %v3252
      %v3321 = vunpack.c.l.b16 %v3253
      %v3322 = vunpack.c.l.b16 %v3254
      %v3323 = vunpack.c.l.b16 %v3255
      %v3324 = vunpack.c.l.b16 %v3256
      %v3325 = vunpack.c.l.b16 %v3257
      %v3326 = vunpack.c.l.b16 %v3258
      %v3327 = vunpack.c.l.b16 %v3259
      %v3328 = vunpack.c.l.b16 %v3260
      %v3329 = vunpack.c.l.b16 %v3261
      %v3330 = vunpack.c.l.b16 %v3262
      %v3331 = vunpack.c.l.b16 %v3263
      %v3332 = vpack.c.b16 %v3301, %v3300
      %v3333 = vpack.c.b16 %v3303, %v3302
      %v3334 = vpack.c.b16 %v3305, %v3304
      %v3335 = vpack.c.b16 %v3307, %v3306
      %v3336 = vpack.c.b16 %v3309, %v3308
      %v3337 = vpack.c.b16 %v3311, %v3310
      %v3338 = vpack.c.b16 %v3313, %v3312
      %v3339 = vpack.c.b16 %v3315, %v3314
      %v3340 = vpack.c.b16 %v3317, %v3316
      %v3341 = vpack.c.b16 %v3319, %v3318
      %v3342 = vpack.c.b16 %v3321, %v3320
      %v3343 = vpack.c.b16 %v3323, %v3322
      %v3344 = vpack.c.b16 %v3325, %v3324
      %v3345 = vpack.c.b16 %v3327, %v3326
      %v3346 = vpack.c.b16 %v3329, %v3328
      %v3347 = vpack.c.b16 %v3331, %v3330
      %vm3363 = vcmask 998400
      %v3365 = vsel %vm3363, %v3265, 0
      %v3368 = vsel %vm3363, %v3267, 0
      %vm3370 = vcmask 1044480
      %v3372 = vsel %vm3370, %v3347, 0
      %3374 = vmatprep.subr.bf16.mxu0 0
      %3375 = vmatpush1.bf16.msra.mxu0 %v3332
      %3376 = vmatprep.subr.bf16.mxu0 0
      %3377 = vmatpush1.bf16.msra.mxu0 %v3333
      %3378 = vmatprep.subr.bf16.mxu0 0
      %3379 = vmatpush1.bf16.msra.mxu0 %v3334
      %3380 = vmatprep.subr.bf16.mxu0 0
      %3381 = vmatpush1.bf16.msra.mxu0 %v3335
      %3382 = vmatprep.subr.bf16.mxu0 0
      %3383 = vmatpush1.bf16.msra.mxu0 %v3336
      %3384 = vmatprep.subr.bf16.mxu0 0
      %3385 = vmatpush1.bf16.msra.mxu0 %v3337
      %3386 = vmatprep.subr.bf16.mxu0 0
      %3387 = vmatpush1.bf16.msra.mxu0 %v3338
      %3388 = vmatprep.subr.bf16.mxu0 0
      %3389 = vmatpush1.bf16.msra.mxu0 %v3339
      %3390 = vmatprep.subr.bf16.mxu0 0
      %3391 = vmatpush1.bf16.msra.mxu0 %v3340
      %3392 = vmatprep.subr.bf16.mxu0 0
      %3393 = vmatpush1.bf16.msra.mxu0 %v3341
      %3394 = vmatprep.subr.bf16.mxu0 0
      %3395 = vmatpush1.bf16.msra.mxu0 %v3342
      %3396 = vmatprep.subr.bf16.mxu0 0
      %3397 = vmatpush1.bf16.msra.mxu0 %v3343
      %3398 = vmatprep.subr.bf16.mxu0 0
      %3399 = vmatpush1.bf16.msra.mxu0 %v3344
      %3400 = vmatprep.subr.bf16.mxu0 0
      %3401 = vmatpush1.bf16.msra.mxu0 %v3345
      %3402 = vmatprep.subr.bf16.mxu0 0
      %3403 = vmatpush1.bf16.msra.mxu0 %v3346
      %3404 = vmatprep.subr.bf16.mxu0 0
      %3405 = vmatpush1.bf16.msra.mxu0 %v3372
      %3406 = vmatprep.mubr.bf16.mxu0 %v3365
      %3407 = vmatmul.mubr.bf16.gmra.mrb[0].mxu0 %v3264
      %v3408 = vpop.f32.mrb[0].mxu0
      %v3409 = vadd.f32 0.0, %v3408
      %v3410 = vpop.f32.mrb[0].mxu0
      %v3411 = vpop.f32.mrb[0].mxu0
      %v3412 = vadd.f32 0.0, %v3411
      %v3413 = vpop.f32.mrb[0].mxu0
      %3414 = vmatprep.mubr.bf16.mxu0 %v3368
      %3415 = vmatmul.mubr.bf16.gmra.mrb[0].mxu0 %v3266
      %v3416 = vpop.f32.mrb[0].mxu0
      %v3417 = vadd.f32 0.0, %v3416
      %v3418 = vpop.f32.mrb[0].mxu0
      %v3419 = vpop.f32.mrb[0].mxu0
      %v3420 = vpop.f32.mrb[0].mxu0
      %3421 = vdwg.mxu0
      %v3422 = vpack.c.bf16 %v3412, %v3409
      %v3423 = vpack.c.bf16 %v3417, %v3417
      %3426 = vrot.lane.b32.xlu0 %v3422, 3
      %v3427 = vpop.permute.xlu0 %3426
      %3428 = vrot.lane.b32.xlu0 %v3423, 3
      %v3429 = vpop.permute.xlu0 %3428
      %v3431 = vsel %vm1098, 0, %v3427
      %v3434 = vsel %vm1098, 0, %v3429
      %vm3437 = vcmask 1043456
      %v3438 = vrot.slane %v3431, 4
      %v3439 = vrot.slane %v3434, 4
      %v3440 = vsel %vm3437, %v3438, %v3439
      %3441 = vrot.lane.b32.xlu0 %v3438, 127
      %v3442 = vpop.permute.xlu0 %3441
      %3443 = vrot.lane.b32.xlu0 %v3440, 127
      %v3444 = vpop.permute.xlu0 %3443
      %3446 = vrot.lane.b32.xlu0 %v3431, 126
      %v3447 = vpop.permute.xlu0 %3446
      %3448 = vrot.lane.b32.xlu0 %v3434, 126
      %v3449 = vpop.permute.xlu0 %3448
      %3451 = vrot.lane.b32.xlu0 %v3438, 125
      %v3452 = vpop.permute.xlu0 %3451
      %3453 = vrot.lane.b32.xlu0 %v3440, 125
      %v3454 = vpop.permute.xlu0 %3453
      %3457 = vrot.lane.b32.xlu0 %v3431, 124
      %v3458 = vpop.permute.xlu0 %3457
      %3459 = vrot.lane.b32.xlu0 0, 124
      %v3460 = vpop.permute.xlu0 %3459
      %3461 = vrot.lane.b32.xlu0 %v3434, 124
      %v3462 = vpop.permute.xlu0 %3461
      %v3463 = vsel %vm1163, %v3458, %v3460
      %v3464 = vsel %vm1163, %v3462, %v3460
      %v3466 = vrot.slane 0, 4
      %v3467 = vsel %vm3437, %v3466, %v3466
      %3468 = vrot.lane.b32.xlu0 %v3438, 123
      %v3469 = vpop.permute.xlu0 %3468
      %3470 = vrot.lane.b32.xlu0 %v3466, 123
      %v3471 = vpop.permute.xlu0 %3470
      %3472 = vrot.lane.b32.xlu0 %v3440, 123
      %v3473 = vpop.permute.xlu0 %3472
      %3474 = vrot.lane.b32.xlu0 %v3467, 123
      %v3475 = vpop.permute.xlu0 %3474
      %v3476 = vsel %vm1175, %v3469, %v3471
      %v3477 = vsel %vm1175, %v3473, %v3475
      %3479 = vrot.lane.b32.xlu0 %v3431, 122
      %v3480 = vpop.permute.xlu0 %3479
      %3481 = vrot.lane.b32.xlu0 0, 122
      %v3482 = vpop.permute.xlu0 %3481
      %3483 = vrot.lane.b32.xlu0 %v3434, 122
      %v3484 = vpop.permute.xlu0 %3483
      %v3485 = vsel %vm1187, %v3480, %v3482
      %v3486 = vsel %vm1187, %v3484, %v3482
      %v3489 = vsel %vm1206, %v3434, %v3442
      %v3493 = vsel %vm1206, %v3449, %v3452
      %v3497 = vsel %vm1206, %v3464, %v3476
      %v3499 = vld [vmem:[%s25] sm:$0xff]
      %v3500 = vld [vmem:[%s25 + $0x8] sm:$0xff]
      %v3501 = vld [vmem:[%s25 + $0x10] sm:$0xff]
      %v3502 = vld [vmem:[%s27] sm:$0xff]
      %v3503 = vld [vmem:[%s27 + $0x8] sm:$0xff]
      %v3504 = vld [vmem:[%s27 + $0x10] sm:$0xff]
      %3506 = vset.pattern.permute.xlu0 0
      %3507 = vperm.xlu0 %3506, %v3502
      %v3508 = vpop.permute.xlu0 %3507
      %3511 = vset.pattern.permute.xlu0 0
      %3512 = vperm.xlu0 %3511, %v3503
      %v3513 = vpop.permute.xlu0 %3512
      %3516 = vset.pattern.permute.xlu0 0
      %3517 = vperm.xlu0 %3516, %v3504
      %v3518 = vpop.permute.xlu0 %3517
      %v3523 = vunpack.c.l.b16 %v3499
      %v3524 = vunpack.c.h.b16 %v3499
      %v3525 = vunpack.c.l.b16 %v3500
      %v3526 = vunpack.c.h.b16 %v3500
      %v3527 = vunpack.c.l.b16 %v3501
      %v3528 = vunpack.c.h.b16 %v3501
      %v3529 = vpack.c.b16 %v3525, %v3523
      %v3530 = vpack.c.b16 %v3526, %v3524
      %v3531 = vpack.c.b16 %v3527, %v3527
      %v3532 = vpack.c.b16 %v3528, %v3528
      %vm3535 = vcmask 326656
      %v3537 = vsel %vm3535, %v3530, 0
      %v3540 = vsel %vm3535, %v3532, 0
      %v3543 = vsel %vm1206, %v3486, 0
      %3545 = vmatprep.subr.bf16.mxu0 0
      %3546 = vmatpush1.bf16.msra.mxu0 %v3431
      %3547 = vmatprep.subr.bf16.mxu0 0
      %3548 = vmatpush1.bf16.msra.mxu0 %v3489
      %3549 = vmatprep.subr.bf16.mxu0 0
      %3550 = vmatpush1.bf16.msra.mxu0 %v3444
      %3551 = vmatprep.subr.bf16.mxu0 0
      %3552 = vmatpush1.bf16.msra.mxu0 %v3447
      %3553 = vmatprep.subr.bf16.mxu0 0
      %3554 = vmatpush1.bf16.msra.mxu0 %v3493
      %3555 = vmatprep.subr.bf16.mxu0 0
      %3556 = vmatpush1.bf16.msra.mxu0 %v3454
      %3557 = vmatprep.subr.bf16.mxu0 0
      %3558 = vmatpush1.bf16.msra.mxu0 %v3463
      %3559 = vmatprep.subr.bf16.mxu0 0
      %3560 = vmatpush1.bf16.msra.mxu0 %v3497
      %3561 = vmatprep.subr.bf16.mxu0 0
      %3562 = vmatpush1.bf16.msra.mxu0 %v3477
      %3563 = vmatprep.subr.bf16.mxu0 0
      %3564 = vmatpush1.bf16.msra.mxu0 %v3485
      %3565 = vmatprep.subr.bf16.mxu0 0
      %3566 = vmatpush1.bf16.msra.mxu0 %v3543
      %3567 = vmatprep.subr.bf16.mxu0 0
      %3568 = vmatpush1.bf16.msra.mxu0 0
      %3569 = vmatprep.subr.bf16.mxu0 0
      %3570 = vmatpush1.bf16.msra.mxu0 0
      %3571 = vmatprep.subr.bf16.mxu0 0
      %3572 = vmatpush1.bf16.msra.mxu0 0
      %3573 = vmatprep.subr.bf16.mxu0 0
      %3574 = vmatpush1.bf16.msra.mxu0 0
      %3575 = vmatprep.subr.bf16.mxu0 0
      %3576 = vmatpush1.bf16.msra.mxu0 0
      %3577 = vmatprep.mubr.bf16.mxu0 %v3537
      %3578 = vmatmul.mubr.bf16.gmra.mrb[0].mxu0 %v3529
      %v3579 = vpop.f32.mrb[0].mxu0
      %v3580 = vadd.f32 %v3508, %v3579
      %v3581 = vpop.f32.mrb[0].mxu0
      %v3582 = vpop.f32.mrb[0].mxu0
      %v3583 = vadd.f32 %v3513, %v3582
      %v3584 = vpop.f32.mrb[0].mxu0
      %3585 = vmatprep.mubr.bf16.mxu0 %v3540
      %3586 = vmatmul.mubr.bf16.gmra.mrb[0].mxu0 %v3531
      %v3587 = vpop.f32.mrb[0].mxu0
      %v3588 = vadd.f32 %v3518, %v3587
      %v3589 = vpop.f32.mrb[0].mxu0
      %v3590 = vpop.f32.mrb[0].mxu0
      %v3591 = vpop.f32.mrb[0].mxu0
      %3592 = vdwg.mxu0
      %v3593 = vmax.f32 %v3580, 0.0
      %v3594 = vmax.f32 %v3583, 0.0
      %v3595 = vmax.f32 %v3588, 0.0
      %v3596 = vpack.c.bf16 %v3594, %v3593
      %v3597 = vpack.c.bf16 %v3595, %v3595
      %3600 = vrot.lane.b32.xlu0 %v3596, 3
      %v3601 = vpop.permute.xlu0 %3600
      %3602 = vrot.lane.b32.xlu0 %v3597, 3
      %v3603 = vpop.permute.xlu0 %3602
      %v3605 = vsel %vm1098, 0, %v3601
      %v3608 = vsel %vm1098, 0, %v3603
      %v3611 = vrot.slane %v3605, 4
      %v3612 = vrot.slane %v3608, 4
      %v3613 = vsel %vm3437, %v3611, %v3612
      %3614 = vrot.lane.b32.xlu0 %v3611, 127
      %v3615 = vpop.permute.xlu0 %3614
      %3616 = vrot.lane.b32.xlu0 %v3613, 127
      %v3617 = vpop.permute.xlu0 %3616
      %3619 = vrot.lane.b32.xlu0 %v3605, 126
      %v3620 = vpop.permute.xlu0 %3619
      %3621 = vrot.lane.b32.xlu0 %v3608, 126
      %v3622 = vpop.permute.xlu0 %3621
      %3624 = vrot.lane.b32.xlu0 %v3611, 125
      %v3625 = vpop.permute.xlu0 %3624
      %3626 = vrot.lane.b32.xlu0 %v3613, 125
      %v3627 = vpop.permute.xlu0 %3626
      %3629 = vrot.lane.b32.xlu0 %v3605, 124
      %v3630 = vpop.permute.xlu0 %3629
      %3631 = vrot.lane.b32.xlu0 %v3608, 124
      %v3632 = vpop.permute.xlu0 %3631
      %v3633 = vsel %vm1163, %v3630, %v3460
      %v3634 = vsel %vm1163, %v3632, %v3460
      %3636 = vrot.lane.b32.xlu0 %v3611, 123
      %v3637 = vpop.permute.xlu0 %3636
      %3638 = vrot.lane.b32.xlu0 %v3613, 123
      %v3639 = vpop.permute.xlu0 %3638
      %v3640 = vsel %vm1175, %v3637, %v3471
      %v3641 = vsel %vm1175, %v3639, %v3475
      %3643 = vrot.lane.b32.xlu0 %v3605, 122
      %v3644 = vpop.permute.xlu0 %3643
      %3645 = vrot.lane.b32.xlu0 %v3608, 122
      %v3646 = vpop.permute.xlu0 %3645
      %v3647 = vsel %vm1187, %v3644, %v3482
      %v3648 = vsel %vm1187, %v3646, %v3482
      %v3651 = vsel %vm1206, %v3608, %v3615
      %v3655 = vsel %vm1206, %v3622, %v3625
      %v3659 = vsel %vm1206, %v3634, %v3640
      %v3661 = vld [vmem:[%s29] sm:$0xff]
      %v3662 = vld [vmem:[%s29 + $0x8] sm:$0xff]
      %v3663 = vld [vmem:[%s29 + $0x10] sm:$0xff]
      %v3664 = vld [vmem:[%s31] sm:$0xff]
      %v3665 = vld [vmem:[%s31 + $0x8] sm:$0xff]
      %v3666 = vld [vmem:[%s31 + $0x10] sm:$0xff]
      %v3667 = vld [vmem:[%s33] sm:$0xff]
      %v3668 = vld [vmem:[%s33 + $0x8] sm:$0xff]
      %v3669 = vld [vmem:[%s33 + $0x10] sm:$0xff]
      %v3673 = vunpack.c.l.b16 %v3664
      %v3674 = vunpack.c.h.b16 %v3664
      %v3675 = vunpack.c.l.b16 %v3665
      %v3676 = vunpack.c.h.b16 %v3665
      %v3677 = vunpack.c.l.b16 %v3666
      %v3678 = vunpack.c.h.b16 %v3666
      %v3679 = vpack.c.b16 %v3675, %v3673
      %v3680 = vpack.c.b16 %v3676, %v3674
      %v3681 = vpack.c.b16 %v3677, %v3677
      %v3682 = vpack.c.b16 %v3678, %v3678
      %v3686 = vsel %vm3535, %v3680, 0
      %v3689 = vsel %vm3535, %v3682, 0
      %v3692 = vsel %vm1206, %v3648, 0
      %3694 = vmatprep.subr.bf16.mxu0 0
      %3695 = vmatpush1.bf16.msra.mxu0 %v3605
      %3696 = vmatprep.subr.bf16.mxu0 0
      %3697 = vmatpush1.bf16.msra.mxu0 %v3651
      %3698 = vmatprep.subr.bf16.mxu0 0
      %3699 = vmatpush1.bf16.msra.mxu0 %v3617
      %3700 = vmatprep.subr.bf16.mxu0 0
      %3701 = vmatpush1.bf16.msra.mxu0 %v3620
      %3702 = vmatprep.subr.bf16.mxu0 0
      %3703 = vmatpush1.bf16.msra.mxu0 %v3655
      %3704 = vmatprep.subr.bf16.mxu0 0
      %3705 = vmatpush1.bf16.msra.mxu0 %v3627
      %3706 = vmatprep.subr.bf16.mxu0 0
      %3707 = vmatpush1.bf16.msra.mxu0 %v3633
      %3708 = vmatprep.subr.bf16.mxu0 0
      %3709 = vmatpush1.bf16.msra.mxu0 %v3659
      %3710 = vmatprep.subr.bf16.mxu0 0
      %3711 = vmatpush1.bf16.msra.mxu0 %v3641
      %3712 = vmatprep.subr.bf16.mxu0 0
      %3713 = vmatpush1.bf16.msra.mxu0 %v3647
      %3714 = vmatprep.subr.bf16.mxu0 0
      %3715 = vmatpush1.bf16.msra.mxu0 %v3692
      %3716 = vmatprep.subr.bf16.mxu0 0
      %3717 = vmatpush1.bf16.msra.mxu0 0
      %3718 = vmatprep.subr.bf16.mxu0 0
      %3719 = vmatpush1.bf16.msra.mxu0 0
      %3720 = vmatprep.subr.bf16.mxu0 0
      %3721 = vmatpush1.bf16.msra.mxu0 0
      %3722 = vmatprep.subr.bf16.mxu0 0
      %3723 = vmatpush1.bf16.msra.mxu0 0
      %3724 = vmatprep.subr.bf16.mxu0 0
      %3725 = vmatpush1.bf16.msra.mxu0 0
      %3726 = vmatprep.mubr.bf16.mxu0 %v3686
      %3727 = vmatmul.mubr.bf16.gmra.mrb[0].mxu0 %v3679
      %v3728 = vpop.f32.mrb[0].mxu0
      %v3729 = vadd.f32 0.0, %v3728
      %v3730 = vpop.f32.mrb[0].mxu0
      %v3731 = vpop.f32.mrb[0].mxu0
      %v3732 = vadd.f32 0.0, %v3731
      %v3733 = vpop.f32.mrb[0].mxu0
      %3734 = vmatprep.mubr.bf16.mxu0 %v3689
      %3735 = vmatmul.mubr.bf16.gmra.mrb[0].mxu0 %v3681
      %v3736 = vpop.f32.mrb[0].mxu0
      %v3737 = vadd.f32 0.0, %v3736
      %v3738 = vpop.f32.mrb[0].mxu0
      %v3739 = vpop.f32.mrb[0].mxu0
      %v3740 = vpop.f32.mrb[0].mxu0
      %3741 = vdwg.mxu0
      %v3745 = vunpack.c.l.b16 %v3661
      %v3746 = vunpack.c.h.b16 %v3661
      %v3747 = vunpack.c.l.b16 %v3662
      %v3748 = vunpack.c.h.b16 %v3662
      %v3749 = vunpack.c.l.b16 %v3663
      %v3750 = vunpack.c.h.b16 %v3663
      %v3751 = vpack.c.b16 %v3747, %v3745
      %v3752 = vpack.c.b16 %v3748, %v3746
      %v3753 = vpack.c.b16 %v3749, %v3749
      %v3754 = vpack.c.b16 %v3750, %v3750
      %v3758 = vsel %vm3535, %v3752, 0
      %v3761 = vsel %vm3535, %v3754, 0
      %3763 = vmatprep.subr.bf16.mxu0 0
      %3764 = vmatpush1.bf16.msra.mxu0 %v3431
      %3765 = vmatprep.subr.bf16.mxu0 0
      %3766 = vmatpush1.bf16.msra.mxu0 %v3489
      %3767 = vmatprep.subr.bf16.mxu0 0
      %3768 = vmatpush1.bf16.msra.mxu0 %v3444
      %3769 = vmatprep.subr.bf16.mxu0 0
      %3770 = vmatpush1.bf16.msra.mxu0 %v3447
      %3771 = vmatprep.subr.bf16.mxu0 0
      %3772 = vmatpush1.bf16.msra.mxu0 %v3493
      %3773 = vmatprep.subr.bf16.mxu0 0
      %3774 = vmatpush1.bf16.msra.mxu0 %v3454
      %3775 = vmatprep.subr.bf16.mxu0 0
      %3776 = vmatpush1.bf16.msra.mxu0 %v3463
      %3777 = vmatprep.subr.bf16.mxu0 0
      %3778 = vmatpush1.bf16.msra.mxu0 %v3497
      %3779 = vmatprep.subr.bf16.mxu0 0
      %3780 = vmatpush1.bf16.msra.mxu0 %v3477
      %3781 = vmatprep.subr.bf16.mxu0 0
      %3782 = vmatpush1.bf16.msra.mxu0 %v3485
      %3783 = vmatprep.subr.bf16.mxu0 0
      %3784 = vmatpush1.bf16.msra.mxu0 %v3543
      %3785 = vmatprep.subr.bf16.mxu0 0
      %3786 = vmatpush1.bf16.msra.mxu0 0
      %3787 = vmatprep.subr.bf16.mxu0 0
      %3788 = vmatpush1.bf16.msra.mxu0 0
      %3789 = vmatprep.subr.bf16.mxu0 0
      %3790 = vmatpush1.bf16.msra.mxu0 0
      %3791 = vmatprep.subr.bf16.mxu0 0
      %3792 = vmatpush1.bf16.msra.mxu0 0
      %3793 = vmatprep.subr.bf16.mxu0 0
      %3794 = vmatpush1.bf16.msra.mxu0 0
      %3795 = vmatprep.mubr.bf16.mxu0 %v3758
      %3796 = vmatmul.mubr.bf16.gmra.mrb[0].mxu0 %v3751
      %v3797 = vpop.f32.mrb[0].mxu0
      %v3798 = vadd.f32 %v3729, %v3797
      %v3799 = vpop.f32.mrb[0].mxu0
      %v3800 = vpop.f32.mrb[0].mxu0
      %v3801 = vadd.f32 %v3732, %v3800
      %v3802 = vpop.f32.mrb[0].mxu0
      %3803 = vmatprep.mubr.bf16.mxu0 %v3761
      %3804 = vmatmul.mubr.bf16.gmra.mrb[0].mxu0 %v3753
      %v3805 = vpop.f32.mrb[0].mxu0
      %v3806 = vadd.f32 %v3737, %v3805
      %v3807 = vpop.f32.mrb[0].mxu0
      %v3808 = vpop.f32.mrb[0].mxu0
      %v3809 = vpop.f32.mrb[0].mxu0
      %3810 = vdwg.mxu0
      %3812 = vset.pattern.permute.xlu0 0
      %3813 = vperm.xlu0 %3812, %v3667
      %v3814 = vpop.permute.xlu0 %3813
      %3817 = vset.pattern.permute.xlu0 0
      %3818 = vperm.xlu0 %3817, %v3668
      %v3819 = vpop.permute.xlu0 %3818
      %3822 = vset.pattern.permute.xlu0 0
      %3823 = vperm.xlu0 %3822, %v3669
      %v3824 = vpop.permute.xlu0 %3823
      %v3826 = vadd.f32 %v3798, %v3814
      %v3827 = vadd.f32 %v3801, %v3819
      %v3828 = vadd.f32 %v3806, %v3824
      %v3829 = vmax.f32 %v3826, 0.0
      %v3830 = vmax.f32 %v3827, 0.0
      %v3831 = vmax.f32 %v3828, 0.0
      %v3832 = vpack.c.bf16 %v3830, %v3829
      %v3833 = vpack.c.bf16 %v3831, %v3831
      %3836 = vrot.lane.b32.xlu0 %v3832, 3
      %v3837 = vpop.permute.xlu0 %3836
      %3838 = vrot.lane.b32.xlu0 %v3833, 3
      %v3839 = vpop.permute.xlu0 %3838
      %v3841 = vsel %vm1098, 0, %v3837
      %v3844 = vsel %vm1098, 0, %v3839
      %v3847 = vrot.slane %v3841, 4
      %v3848 = vrot.slane %v3844, 4
      %v3849 = vsel %vm3437, %v3847, %v3848
      %3850 = vrot.lane.b32.xlu0 %v3847, 127
      %v3851 = vpop.permute.xlu0 %3850
      %3852 = vrot.lane.b32.xlu0 %v3849, 127
      %v3853 = vpop.permute.xlu0 %3852
      %3855 = vrot.lane.b32.xlu0 %v3841, 126
      %v3856 = vpop.permute.xlu0 %3855
      %3857 = vrot.lane.b32.xlu0 %v3844, 126
      %v3858 = vpop.permute.xlu0 %3857
      %3860 = vrot.lane.b32.xlu0 %v3847, 125
      %v3861 = vpop.permute.xlu0 %3860
      %3862 = vrot.lane.b32.xlu0 %v3849, 125
      %v3863 = vpop.permute.xlu0 %3862
      %3865 = vrot.lane.b32.xlu0 %v3841, 124
      %v3866 = vpop.permute.xlu0 %3865
      %3867 = vrot.lane.b32.xlu0 %v3844, 124
      %v3868 = vpop.permute.xlu0 %3867
      %v3869 = vsel %vm1163, %v3866, %v3460
      %v3870 = vsel %vm1163, %v3868, %v3460
      %3872 = vrot.lane.b32.xlu0 %v3847, 123
      %v3873 = vpop.permute.xlu0 %3872
      %3874 = vrot.lane.b32.xlu0 %v3849, 123
      %v3875 = vpop.permute.xlu0 %3874
      %v3876 = vsel %vm1175, %v3873, %v3471
      %v3877 = vsel %vm1175, %v3875, %v3475
      %3879 = vrot.lane.b32.xlu0 %v3841, 122
      %v3880 = vpop.permute.xlu0 %3879
      %3881 = vrot.lane.b32.xlu0 %v3844, 122
      %v3882 = vpop.permute.xlu0 %3881
      %v3883 = vsel %vm1187, %v3880, %v3482
      %v3884 = vsel %vm1187, %v3882, %v3482
      %v3887 = vsel %vm1206, %v3844, %v3851
      %v3891 = vsel %vm1206, %v3858, %v3861
      %v3895 = vsel %vm1206, %v3870, %v3876
      %v3897 = vld [vmem:[%s35] sm:$0xff]
      %v3898 = vld [vmem:[%s35 + $0x8] sm:$0xff]
      %v3899 = vld [vmem:[%s37] sm:$0xff]
      %v3900 = vld [vmem:[%s37 + $0x8] sm:$0xff]
      %v3901 = vld [vmem:[%s39] sm:$0xff]
      %v3902 = vld [vmem:[%s39 + $0x8] sm:$0xff]
      %v3903 = vld [vmem:[%s41] sm:$0xff]
      %v3904 = vld [vmem:[%s41 + $0x8] sm:$0xff]
      %v3907 = vunpack.c.l.b16 %v3899
      %v3908 = vunpack.c.h.b16 %v3899
      %v3909 = vunpack.c.l.b16 %v3900
      %v3910 = vunpack.c.h.b16 %v3900
      %v3911 = vpack.c.b16 %v3909, %v3907
      %v3912 = vpack.c.b16 %v3910, %v3908
      %v3915 = vsel %vm3535, %v3912, 0
      %3917 = vmatprep.subr.bf16.mxu0 0
      %3918 = vmatpush1.bf16.msra.mxu0 %v3605
      %3919 = vmatprep.subr.bf16.mxu0 0
      %3920 = vmatpush1.bf16.msra.mxu0 %v3651
      %3921 = vmatprep.subr.bf16.mxu0 0
      %3922 = vmatpush1.bf16.msra.mxu0 %v3617
      %3923 = vmatprep.subr.bf16.mxu0 0
      %3924 = vmatpush1.bf16.msra.mxu0 %v3620
      %3925 = vmatprep.subr.bf16.mxu0 0
      %3926 = vmatpush1.bf16.msra.mxu0 %v3655
      %3927 = vmatprep.subr.bf16.mxu0 0
      %3928 = vmatpush1.bf16.msra.mxu0 %v3627
      %3929 = vmatprep.subr.bf16.mxu0 0
      %3930 = vmatpush1.bf16.msra.mxu0 %v3633
      %3931 = vmatprep.subr.bf16.mxu0 0
      %3932 = vmatpush1.bf16.msra.mxu0 %v3659
      %3933 = vmatprep.subr.bf16.mxu0 0
      %3934 = vmatpush1.bf16.msra.mxu0 %v3641
      %3935 = vmatprep.subr.bf16.mxu0 0
      %3936 = vmatpush1.bf16.msra.mxu0 %v3647
      %3937 = vmatprep.subr.bf16.mxu0 0
      %3938 = vmatpush1.bf16.msra.mxu0 %v3692
      %3939 = vmatprep.subr.bf16.mxu0 0
      %3940 = vmatpush1.bf16.msra.mxu0 0
      %3941 = vmatprep.subr.bf16.mxu0 0
      %3942 = vmatpush1.bf16.msra.mxu0 0
      %3943 = vmatprep.subr.bf16.mxu0 0
      %3944 = vmatpush1.bf16.msra.mxu0 0
      %3945 = vmatprep.subr.bf16.mxu0 0
      %3946 = vmatpush1.bf16.msra.mxu0 0
      %3947 = vmatprep.subr.bf16.mxu0 0
      %3948 = vmatpush1.bf16.msra.mxu0 0
      %3949 = vmatprep.mubr.bf16.mxu0 %v3915
      %3950 = vmatmul.mubr.bf16.gmra.mrb[0].mxu0 %v3911
      %v3951 = vpop.f32.mrb[0].mxu0
      %v3952 = vadd.f32 0.0, %v3951
      %v3953 = vpop.f32.mrb[0].mxu0
      %v3954 = vpop.f32.mrb[0].mxu0
      %v3955 = vadd.f32 0.0, %v3954
      %v3956 = vpop.f32.mrb[0].mxu0
      %3957 = vdwg.mxu0
      %v3960 = vunpack.c.l.b16 %v3897
      %v3961 = vunpack.c.h.b16 %v3897
      %v3962 = vunpack.c.l.b16 %v3898
      %v3963 = vunpack.c.h.b16 %v3898
      %v3964 = vpack.c.b16 %v3962, %v3960
      %v3965 = vpack.c.b16 %v3963, %v3961
      %v3968 = vsel %vm3535, %v3965, 0
      %3970 = vmatprep.subr.bf16.mxu0 0
      %3971 = vmatpush1.bf16.msra.mxu0 %v3431
      %3972 = vmatprep.subr.bf16.mxu0 0
      %3973 = vmatpush1.bf16.msra.mxu0 %v3489
      %3974 = vmatprep.subr.bf16.mxu0 0
      %3975 = vmatpush1.bf16.msra.mxu0 %v3444
      %3976 = vmatprep.subr.bf16.mxu0 0
      %3977 = vmatpush1.bf16.msra.mxu0 %v3447
      %3978 = vmatprep.subr.bf16.mxu0 0
      %3979 = vmatpush1.bf16.msra.mxu0 %v3493
      %3980 = vmatprep.subr.bf16.mxu0 0
      %3981 = vmatpush1.bf16.msra.mxu0 %v3454
      %3982 = vmatprep.subr.bf16.mxu0 0
      %3983 = vmatpush1.bf16.msra.mxu0 %v3463
      %3984 = vmatprep.subr.bf16.mxu0 0
      %3985 = vmatpush1.bf16.msra.mxu0 %v3497
      %3986 = vmatprep.subr.bf16.mxu0 0
      %3987 = vmatpush1.bf16.msra.mxu0 %v3477
      %3988 = vmatprep.subr.bf16.mxu0 0
      %3989 = vmatpush1.bf16.msra.mxu0 %v3485
      %3990 = vmatprep.subr.bf16.mxu0 0
      %3991 = vmatpush1.bf16.msra.mxu0 %v3543
      %3992 = vmatprep.subr.bf16.mxu0 0
      %3993 = vmatpush1.bf16.msra.mxu0 0
      %3994 = vmatprep.subr.bf16.mxu0 0
      %3995 = vmatpush1.bf16.msra.mxu0 0
      %3996 = vmatprep.subr.bf16.mxu0 0
      %3997 = vmatpush1.bf16.msra.mxu0 0
      %3998 = vmatprep.subr.bf16.mxu0 0
      %3999 = vmatpush1.bf16.msra.mxu0 0
      %4000 = vmatprep.subr.bf16.mxu0 0
      %4001 = vmatpush1.bf16.msra.mxu0 0
      %4002 = vmatprep.mubr.bf16.mxu0 %v3968
      %4003 = vmatmul.mubr.bf16.gmra.mrb[0].mxu0 %v3964
      %v4004 = vpop.f32.mrb[0].mxu0
      %v4005 = vadd.f32 %v3952, %v4004
      %v4006 = vpop.f32.mrb[0].mxu0
      %v4007 = vpop.f32.mrb[0].mxu0
      %v4008 = vadd.f32 %v3955, %v4007
      %v4009 = vpop.f32.mrb[0].mxu0
      %4010 = vdwg.mxu0
      %v4013 = vunpack.c.l.b16 %v3901
      %v4014 = vunpack.c.h.b16 %v3901
      %v4015 = vunpack.c.l.b16 %v3902
      %v4016 = vunpack.c.h.b16 %v3902
      %v4017 = vpack.c.b16 %v4015, %v4013
      %v4018 = vpack.c.b16 %v4016, %v4014
      %v4021 = vsel %vm3535, %v4018, 0
      %v4024 = vsel %vm1206, %v3884, 0
      %4026 = vmatprep.subr.bf16.mxu0 0
      %4027 = vmatpush1.bf16.msra.mxu0 %v3841
      %4028 = vmatprep.subr.bf16.mxu0 0
      %4029 = vmatpush1.bf16.msra.mxu0 %v3887
      %4030 = vmatprep.subr.bf16.mxu0 0
      %4031 = vmatpush1.bf16.msra.mxu0 %v3853
      %4032 = vmatprep.subr.bf16.mxu0 0
      %4033 = vmatpush1.bf16.msra.mxu0 %v3856
      %4034 = vmatprep.subr.bf16.mxu0 0
      %4035 = vmatpush1.bf16.msra.mxu0 %v3891
      %4036 = vmatprep.subr.bf16.mxu0 0
      %4037 = vmatpush1.bf16.msra.mxu0 %v3863
      %4038 = vmatprep.subr.bf16.mxu0 0
      %4039 = vmatpush1.bf16.msra.mxu0 %v3869
      %4040 = vmatprep.subr.bf16.mxu0 0
      %4041 = vmatpush1.bf16.msra.mxu0 %v3895
      %4042 = vmatprep.subr.bf16.mxu0 0
      %4043 = vmatpush1.bf16.msra.mxu0 %v3877
      %4044 = vmatprep.subr.bf16.mxu0 0
      %4045 = vmatpush1.bf16.msra.mxu0 %v3883
      %4046 = vmatprep.subr.bf16.mxu0 0
      %4047 = vmatpush1.bf16.msra.mxu0 %v4024
      %4048 = vmatprep.subr.bf16.mxu0 0
      %4049 = vmatpush1.bf16.msra.mxu0 0
      %4050 = vmatprep.subr.bf16.mxu0 0
      %4051 = vmatpush1.bf16.msra.mxu0 0
      %4052 = vmatprep.subr.bf16.mxu0 0
      %4053 = vmatpush1.bf16.msra.mxu0 0
      %4054 = vmatprep.subr.bf16.mxu0 0
      %4055 = vmatpush1.bf16.msra.mxu0 0
      %4056 = vmatprep.subr.bf16.mxu0 0
      %4057 = vmatpush1.bf16.msra.mxu0 0
      %4058 = vmatprep.mubr.bf16.mxu0 %v4021
      %4059 = vmatmul.mubr.bf16.gmra.mrb[0].mxu0 %v4017
      %v4060 = vpop.f32.mrb[0].mxu0
      %v4061 = vadd.f32 0.0, %v4060
      %v4062 = vpop.f32.mrb[0].mxu0
      %v4063 = vpop.f32.mrb[0].mxu0
      %v4064 = vadd.f32 0.0, %v4063
      %v4065 = vpop.f32.mrb[0].mxu0
      %4066 = vdwg.mxu0
      %v4067 = vadd.f32 %v4005, %v4061
      %v4068 = vadd.f32 %v4008, %v4064
      %4070 = vset.pattern.permute.xlu0 0
      %4071 = vperm.xlu0 %4070, %v3903
      %v4072 = vpop.permute.xlu0 %4071
      %4075 = vset.pattern.permute.xlu0 0
      %4076 = vperm.xlu0 %4075, %v3904
      %v4077 = vpop.permute.xlu0 %4076
      %v4079 = vadd.f32 %v4067, %v4072
      %v4080 = vadd.f32 %v4068, %v4077
      %v4081 = vmax.f32 %v4079, 0.0
      %v4082 = vmax.f32 %v4080, 0.0
      %v4083 = vld [vmem:[%s57] sm:$0xf]
      %v4084 = vld [vmem:[%s57 + $0x4] sm:$0xf]
      %v4085 = vld [vmem:[%s57 + $0x8] sm:$0xf]
      %v4086 = vld [vmem:[%s57 + $0xc] sm:$0xf]
      %v4087 = vld [vmem:[%s57 + $0x10] sm:$0xf]
      %v4088 = vld [vmem:[%s57 + $0x14] sm:$0xf]
      %v4089 = vld [vmem:[%s57 + $0x18] sm:$0xf]
      %v4090 = vld [vmem:[%s57 + $0x1c] sm:$0xf]
      %v4091 = vld [vmem:[%s57 + $0x20] sm:$0xf]
      %v4092 = vld [vmem:[%s57 + $0x24] sm:$0xf]
      %v4093 = vld [vmem:[%s57 + $0x28] sm:$0xf]
      %v4094 = vld [vmem:[%s57 + $0x2c] sm:$0xf]
      %v4095 = vld [vmem:[%s57 + $0x30] sm:$0xf]
      %v4096 = vld [vmem:[%s57 + $0x34] sm:$0xf]
      %v4097 = vld [vmem:[%s57 + $0x38] sm:$0xf]
      %v4098 = vld [vmem:[%s57 + $0x3c] sm:$0x7]
      %v4099 = vpack.c.bf16 %v4082, %v4081
      %v4116 = vunpack.c.l.b16 %v4083
      %v4117 = vunpack.c.l.b16 %v4084
      %v4118 = vunpack.c.l.b16 %v4085
      %v4119 = vunpack.c.l.b16 %v4086
      %v4120 = vunpack.c.l.b16 %v4087
      %v4121 = vunpack.c.l.b16 %v4088
      %v4122 = vunpack.c.l.b16 %v4089
      %v4123 = vunpack.c.l.b16 %v4090
      %v4124 = vunpack.c.l.b16 %v4091
      %v4125 = vunpack.c.l.b16 %v4092
      %v4126 = vunpack.c.l.b16 %v4093
      %v4127 = vunpack.c.l.b16 %v4094
      %v4128 = vunpack.c.l.b16 %v4095
      %v4129 = vunpack.c.l.b16 %v4096
      %v4130 = vunpack.c.l.b16 %v4097
      %v4131 = vunpack.c.l.b16 %v4098
      %v4132 = vpack.c.b16 %v4117, %v4116
      %v4133 = vpack.c.b16 %v4119, %v4118
      %v4134 = vpack.c.b16 %v4121, %v4120
      %v4135 = vpack.c.b16 %v4123, %v4122
      %v4136 = vpack.c.b16 %v4125, %v4124
      %v4137 = vpack.c.b16 %v4127, %v4126
      %v4138 = vpack.c.b16 %v4129, %v4128
      %v4139 = vpack.c.b16 %v4131, %v4130
      %v4148 = vsel %vm2377, %v4099, 0
      %vm4150 = vcmask 1046528
      %v4151 = vsel %vm1191, 4294967295, 65535
      %v4152 = vsel %vm4150, %v4151, 0
      %v4154 = vand.u32 %v4139, %v4152
      %4156 = vmatprep.subr.bf16.mxu0 0
      %4157 = vmatpush1.bf16.msra.mxu0 %v4132
      %4158 = vmatprep.subr.bf16.mxu0 0
      %4159 = vmatpush1.bf16.msra.mxu0 %v4133
      %4160 = vmatprep.subr.bf16.mxu0 0
      %4161 = vmatpush1.bf16.msra.mxu0 %v4134
      %4162 = vmatprep.subr.bf16.mxu0 0
      %4163 = vmatpush1.bf16.msra.mxu0 %v4135
      %4164 = vmatprep.subr.bf16.mxu0 0
      %4165 = vmatpush1.bf16.msra.mxu0 %v4136
      %4166 = vmatprep.subr.bf16.mxu0 0
      %4167 = vmatpush1.bf16.msra.mxu0 %v4137
      %4168 = vmatprep.subr.bf16.mxu0 0
      %4169 = vmatpush1.bf16.msra.mxu0 %v4138
      %4170 = vmatprep.subr.bf16.mxu0 0
      %4171 = vmatpush1.bf16.msra.mxu0 %v4154
      %4172 = vmatprep.subr.bf16.mxu0 0
      %4173 = vmatpush1.bf16.msra.mxu0 0
      %4174 = vmatprep.subr.bf16.mxu0 0
      %4175 = vmatpush1.bf16.msra.mxu0 0
      %4176 = vmatprep.subr.bf16.mxu0 0
      %4177 = vmatpush1.bf16.msra.mxu0 0
      %4178 = vmatprep.subr.bf16.mxu0 0
      %4179 = vmatpush1.bf16.msra.mxu0 0
      %4180 = vmatprep.subr.bf16.mxu0 0
      %4181 = vmatpush1.bf16.msra.mxu0 0
      %4182 = vmatprep.subr.bf16.mxu0 0
      %4183 = vmatpush1.bf16.msra.mxu0 0
      %4184 = vmatprep.subr.bf16.mxu0 0
      %4185 = vmatpush1.bf16.msra.mxu0 0
      %4186 = vmatprep.subr.bf16.mxu0 0
      %4187 = vmatpush1.bf16.msra.mxu0 0
      %4188 = vmatprep.mubr.bf16.mxu0 0
      %4189 = vmatmul.mubr.bf16.gmra.mrb[0].mxu0 %v4148
      %v4190 = vpop.f32.mrb[0].mxu0
      %v4191 = vadd.f32 0.0, %v4190
      %v4192 = vpop.f32.mrb[0].mxu0
      %v4193 = vpop.f32.mrb[0].mxu0
      %v4194 = vadd.f32 0.0, %v4193
      %v4195 = vpop.f32.mrb[0].mxu0
      %4196 = vdwg.mxu0
      %v4197 = vpack.c.bf16 %v4194, %v4191
      %4199 = vrot.lane.b32.xlu0 %v4197, 3
      %v4200 = vpop.permute.xlu0 %4199
      %v4202 = vsel %vm1098, 0, %v4200
      %vm4203 = vcmask 531456
      %v4204 = vsel %vm4203, %v4202, 0
      %4207 = vrot.lane.b32.xlu0 %v4204, 127
      %v4208 = vpop.permute.xlu0 %4207
      %4210 = vrot.lane.b32.xlu0 %v4204, 126
      %v4211 = vpop.permute.xlu0 %4210
      %4213 = vrot.lane.b32.xlu0 %v4204, 125
      %v4214 = vpop.permute.xlu0 %4213
      %4216 = vrot.lane.b32.xlu0 %v4204, 124
      %v4217 = vpop.permute.xlu0 %4216
      %4219 = vrot.lane.b32.xlu0 %v4204, 123
      %v4220 = vpop.permute.xlu0 %4219
      %4222 = vrot.lane.b32.xlu0 %v4204, 122
      %v4223 = vpop.permute.xlu0 %4222
      %v4225 = vld [vmem:[%s43] sm:$0xf]
      %v4226 = vld [vmem:[%s43 + $0x4] sm:$0xf]
      %v4227 = vld [vmem:[%s45] sm:$0xff]
      %v4228 = vld [vmem:[%s45 + $0x8] sm:$0xff]
      %4230 = vset.pattern.permute.xlu0 0
      %4231 = vperm.xlu0 %4230, %v4227
      %v4232 = vpop.permute.xlu0 %4231
      %4235 = vset.pattern.permute.xlu0 0
      %4236 = vperm.xlu0 %4235, %v4228
      %v4237 = vpop.permute.xlu0 %4236
      %v4241 = vunpack.c.l.b16 %v4225
      %v4242 = vunpack.c.l.b16 %v4226
      %v4243 = vpack.c.b16 %v4242, %v4241
      %vm4244 = vcmask 916480
      %v4246 = vsel %vm4244, %v4243, 0
      %4248 = vmatprep.subr.bf16.mxu0 0
      %4249 = vmatpush1.bf16.msra.mxu0 %v4204
      %4250 = vmatprep.subr.bf16.mxu0 0
      %4251 = vmatpush1.bf16.msra.mxu0 %v4208
      %4252 = vmatprep.subr.bf16.mxu0 0
      %4253 = vmatpush1.bf16.msra.mxu0 %v4211
      %4254 = vmatprep.subr.bf16.mxu0 0
      %4255 = vmatpush1.bf16.msra.mxu0 %v4214
      %4256 = vmatprep.subr.bf16.mxu0 0
      %4257 = vmatpush1.bf16.msra.mxu0 %v4217
      %4258 = vmatprep.subr.bf16.mxu0 0
      %4259 = vmatpush1.bf16.msra.mxu0 %v4220
      %4260 = vmatprep.subr.bf16.mxu0 0
      %4261 = vmatpush1.bf16.msra.mxu0 %v4223
      %4262 = vmatprep.subr.bf16.mxu0 0
      %4263 = vmatpush1.bf16.msra.mxu0 0
      %4264 = vmatprep.subr.bf16.mxu0 0
      %4265 = vmatpush1.bf16.msra.mxu0 0
      %4266 = vmatprep.subr.bf16.mxu0 0
      %4267 = vmatpush1.bf16.msra.mxu0 0
      %4268 = vmatprep.subr.bf16.mxu0 0
      %4269 = vmatpush1.bf16.msra.mxu0 0
      %4270 = vmatprep.subr.bf16.mxu0 0
      %4271 = vmatpush1.bf16.msra.mxu0 0
      %4272 = vmatprep.subr.bf16.mxu0 0
      %4273 = vmatpush1.bf16.msra.mxu0 0
      %4274 = vmatprep.subr.bf16.mxu0 0
      %4275 = vmatpush1.bf16.msra.mxu0 0
      %4276 = vmatprep.subr.bf16.mxu0 0
      %4277 = vmatpush1.bf16.msra.mxu0 0
      %4278 = vmatprep.subr.bf16.mxu0 0
      %4279 = vmatpush1.bf16.msra.mxu0 0
      %4280 = vmatprep.mubr.bf16.mxu0 0
      %4281 = vmatmul.mubr.bf16.gmra.mrb[0].mxu0 %v4246
      %v4282 = vpop.f32.mrb[0].mxu0
      %v4283 = vadd.f32 %v4232, %v4282
      %v4284 = vpop.f32.mrb[0].mxu0
      %v4285 = vpop.f32.mrb[0].mxu0
      %v4286 = vadd.f32 %v4237, %v4285
      %v4287 = vpop.f32.mrb[0].mxu0
      %4288 = vdwg.mxu0
      %v4289 = vmax.f32 %v4283, 0.0
      %v4290 = vmax.f32 %v4286, 0.0
      %v4291 = vpack.c.bf16 %v4290, %v4289
      %4293 = vrot.lane.b32.xlu0 %v4291, 3
      %v4294 = vpop.permute.xlu0 %4293
      %v4296 = vsel %vm1098, 0, %v4294
      %v4297 = vsel %vm4203, %v4296, 0
      %4300 = vrot.lane.b32.xlu0 %v4297, 127
      %v4301 = vpop.permute.xlu0 %4300
      %4303 = vrot.lane.b32.xlu0 %v4297, 126
      %v4304 = vpop.permute.xlu0 %4303
      %4306 = vrot.lane.b32.xlu0 %v4297, 125
      %v4307 = vpop.permute.xlu0 %4306
      %4309 = vrot.lane.b32.xlu0 %v4297, 124
      %v4310 = vpop.permute.xlu0 %4309
      %4312 = vrot.lane.b32.xlu0 %v4297, 123
      %v4313 = vpop.permute.xlu0 %4312
      %4315 = vrot.lane.b32.xlu0 %v4297, 122
      %v4316 = vpop.permute.xlu0 %4315
      %v4318 = vld [vmem:[%s47] sm:$0xf]
      %v4319 = vld [vmem:[%s47 + $0x4] sm:$0xf]
      %v4320 = vld [vmem:[%s49] sm:$0xf]
      %v4321 = vld [vmem:[%s49 + $0x4] sm:$0xf]
      %v4322 = vld [vmem:[%s51] sm:$0xff]
      %v4323 = vld [vmem:[%s51 + $0x8] sm:$0xff]
      %v4326 = vunpack.c.l.b16 %v4320
      %v4327 = vunpack.c.l.b16 %v4321
      %v4328 = vpack.c.b16 %v4327, %v4326
      %v4330 = vsel %vm4244, %v4328, 0
      %4332 = vmatprep.subr.bf16.mxu0 0
      %4333 = vmatpush1.bf16.msra.mxu0 %v4297
      %4334 = vmatprep.subr.bf16.mxu0 0
      %4335 = vmatpush1.bf16.msra.mxu0 %v4301
      %4336 = vmatprep.subr.bf16.mxu0 0
      %4337 = vmatpush1.bf16.msra.mxu0 %v4304
      %4338 = vmatprep.subr.bf16.mxu0 0
      %4339 = vmatpush1.bf16.msra.mxu0 %v4307
      %4340 = vmatprep.subr.bf16.mxu0 0
      %4341 = vmatpush1.bf16.msra.mxu0 %v4310
      %4342 = vmatprep.subr.bf16.mxu0 0
      %4343 = vmatpush1.bf16.msra.mxu0 %v4313
      %4344 = vmatprep.subr.bf16.mxu0 0
      %4345 = vmatpush1.bf16.msra.mxu0 %v4316
      %4346 = vmatprep.subr.bf16.mxu0 0
      %4347 = vmatpush1.bf16.msra.mxu0 0
      %4348 = vmatprep.subr.bf16.mxu0 0
      %4349 = vmatpush1.bf16.msra.mxu0 0
      %4350 = vmatprep.subr.bf16.mxu0 0
      %4351 = vmatpush1.bf16.msra.mxu0 0
      %4352 = vmatprep.subr.bf16.mxu0 0
      %4353 = vmatpush1.bf16.msra.mxu0 0
      %4354 = vmatprep.subr.bf16.mxu0 0
      %4355 = vmatpush1.bf16.msra.mxu0 0
      %4356 = vmatprep.subr.bf16.mxu0 0
      %4357 = vmatpush1.bf16.msra.mxu0 0
      %4358 = vmatprep.subr.bf16.mxu0 0
      %4359 = vmatpush1.bf16.msra.mxu0 0
      %4360 = vmatprep.subr.bf16.mxu0 0
      %4361 = vmatpush1.bf16.msra.mxu0 0
      %4362 = vmatprep.subr.bf16.mxu0 0
      %4363 = vmatpush1.bf16.msra.mxu0 0
      %4364 = vmatprep.mubr.bf16.mxu0 0
      %4365 = vmatmul.mubr.bf16.gmra.mrb[0].mxu0 %v4330
      %v4366 = vpop.f32.mrb[0].mxu0
      %v4367 = vadd.f32 0.0, %v4366
      %v4368 = vpop.f32.mrb[0].mxu0
      %v4369 = vpop.f32.mrb[0].mxu0
      %v4370 = vadd.f32 0.0, %v4369
      %v4371 = vpop.f32.mrb[0].mxu0
      %4372 = vdwg.mxu0
      %v4375 = vunpack.c.l.b16 %v4318
      %v4376 = vunpack.c.l.b16 %v4319
      %v4377 = vpack.c.b16 %v4376, %v4375
      %v4379 = vsel %vm4244, %v4377, 0
      %4381 = vmatprep.subr.bf16.mxu0 0
      %4382 = vmatpush1.bf16.msra.mxu0 %v4204
      %4383 = vmatprep.subr.bf16.mxu0 0
      %4384 = vmatpush1.bf16.msra.mxu0 %v4208
      %4385 = vmatprep.subr.bf16.mxu0 0
      %4386 = vmatpush1.bf16.msra.mxu0 %v4211
      %4387 = vmatprep.subr.bf16.mxu0 0
      %4388 = vmatpush1.bf16.msra.mxu0 %v4214
      %4389 = vmatprep.subr.bf16.mxu0 0
      %4390 = vmatpush1.bf16.msra.mxu0 %v4217
      %4391 = vmatprep.subr.bf16.mxu0 0
      %4392 = vmatpush1.bf16.msra.mxu0 %v4220
      %4393 = vmatprep.subr.bf16.mxu0 0
      %4394 = vmatpush1.bf16.msra.mxu0 %v4223
      %4395 = vmatprep.subr.bf16.mxu0 0
      %4396 = vmatpush1.bf16.msra.mxu0 0
      %4397 = vmatprep.subr.bf16.mxu0 0
      %4398 = vmatpush1.bf16.msra.mxu0 0
      %4399 = vmatprep.subr.bf16.mxu0 0
      %4400 = vmatpush1.bf16.msra.mxu0 0
      %4401 = vmatprep.subr.bf16.mxu0 0
      %4402 = vmatpush1.bf16.msra.mxu0 0
      %4403 = vmatprep.subr.bf16.mxu0 0
      %4404 = vmatpush1.bf16.msra.mxu0 0
      %4405 = vmatprep.subr.bf16.mxu0 0
      %4406 = vmatpush1.bf16.msra.mxu0 0
      %4407 = vmatprep.subr.bf16.mxu0 0
      %4408 = vmatpush1.bf16.msra.mxu0 0
      %4409 = vmatprep.subr.bf16.mxu0 0
      %4410 = vmatpush1.bf16.msra.mxu0 0
      %4411 = vmatprep.subr.bf16.mxu0 0
      %4412 = vmatpush1.bf16.msra.mxu0 0
      %4413 = vmatprep.mubr.bf16.mxu0 0
      %4414 = vmatmul.mubr.bf16.gmra.mrb[0].mxu0 %v4379
      %v4415 = vpop.f32.mrb[0].mxu0
      %v4416 = vadd.f32 %v4367, %v4415
      %v4417 = vpop.f32.mrb[0].mxu0
      %v4418 = vpop.f32.mrb[0].mxu0
      %v4419 = vadd.f32 %v4370, %v4418
      %v4420 = vpop.f32.mrb[0].mxu0
      %4421 = vdwg.mxu0
      %4423 = vset.pattern.permute.xlu0 0
      %4424 = vperm.xlu0 %4423, %v4322
      %v4425 = vpop.permute.xlu0 %4424
      %4428 = vset.pattern.permute.xlu0 0
      %4429 = vperm.xlu0 %4428, %v4323
      %v4430 = vpop.permute.xlu0 %4429
      %v4432 = vadd.f32 %v4416, %v4425
      %v4433 = vadd.f32 %v4419, %v4430
      %v4434 = vmax.f32 %v4432, 0.0
      %v4435 = vmax.f32 %v4433, 0.0
      %v4436 = vld [vmem:[%s59] sm:$0xff]
      %v4437 = vld [vmem:[%s59 + $0x8] sm:$0xff]
      %v4438 = vld [vmem:[%s59 + $0x10] sm:$0xff]
      %v4439 = vld [vmem:[%s59 + $0x18] sm:$0xff]
      %v4440 = vld [vmem:[%s59 + $0x20] sm:$0xff]
      %v4441 = vld [vmem:[%s59 + $0x28] sm:$0xff]
      %v4442 = vld [vmem:[%s59 + $0x30] sm:$0xff]
      %v4443 = vld [vmem:[%s59 + $0x38] sm:$0xff]
      %v4444 = vld [vmem:[%s59 + $0x40] sm:$0xff]
      %v4445 = vld [vmem:[%s59 + $0x48] sm:$0xff]
      %v4446 = vld [vmem:[%s59 + $0x50] sm:$0xff]
      %v4447 = vld [vmem:[%s59 + $0x58] sm:$0xff]
      %v4448 = vld [vmem:[%s59 + $0x60] sm:$0xff]
      %v4449 = vld [vmem:[%s59 + $0x68] sm:$0xff]
      %v4450 = vld [vmem:[%s59 + $0x70] sm:$0xff]
      %v4451 = vld [vmem:[%s59 + $0x78] sm:$0xff]
      %v4452 = vld [vmem:[%s59 + $0x80] sm:$0xff]
      %v4453 = vld [vmem:[%s59 + $0x88] sm:$0xff]
      %v4454 = vld [vmem:[%s59 + $0x90] sm:$0xff]
      %v4455 = vld [vmem:[%s59 + $0x98] sm:$0xff]
      %v4456 = vld [vmem:[%s59 + $0xa0] sm:$0xff]
      %v4457 = vld [vmem:[%s59 + $0xa8] sm:$0xff]
      %v4458 = vld [vmem:[%s59 + $0xb0] sm:$0xff]
      %v4459 = vld [vmem:[%s59 + $0xb8] sm:$0xff]
      %v4460 = vld [vmem:[%s59 + $0xc0] sm:$0xff]
      %v4461 = vld [vmem:[%s59 + $0xc8] sm:$0xff]
      %v4462 = vld [vmem:[%s59 + $0xd0] sm:$0xff]
      %v4463 = vld [vmem:[%s59 + $0xd8] sm:$0xff]
      %v4464 = vld [vmem:[%s59 + $0xe0] sm:$0xff]
      %v4465 = vld [vmem:[%s59 + $0xe8] sm:$0xff]
      %v4466 = vld [vmem:[%s59 + $0xf0] sm:$0xff]
      %v4467 = vld [vmem:[%s59 + $0xf8] sm:$0xff]
      %v4468 = vld [vmem:[%s59 + $0x100] sm:$0xff]
      %v4469 = vld [vmem:[%s59 + $0x108] sm:$0xff]
      %v4470 = vld [vmem:[%s59 + $0x110] sm:$0xff]
      %v4471 = vld [vmem:[%s59 + $0x118] sm:$0xff]
      %v4472 = vld [vmem:[%s59 + $0x120] sm:$0xff]
      %v4473 = vld [vmem:[%s59 + $0x128] sm:$0xff]
      %v4474 = vld [vmem:[%s59 + $0x130] sm:$0xff]
      %v4475 = vld [vmem:[%s59 + $0x138] sm:$0xff]
      %v4476 = vld [vmem:[%s59 + $0x140] sm:$0xff]
      %v4477 = vld [vmem:[%s59 + $0x148] sm:$0xff]
      %v4478 = vld [vmem:[%s59 + $0x150] sm:$0xff]
      %v4479 = vld [vmem:[%s59 + $0x158] sm:$0xff]
      %v4480 = vld [vmem:[%s59 + $0x160] sm:$0xff]
      %v4481 = vld [vmem:[%s59 + $0x168] sm:$0xff]
      %v4482 = vld [vmem:[%s59 + $0x170] sm:$0xff]
      %v4483 = vld [vmem:[%s59 + $0x178] sm:$0xff]
      %v4484 = vld [vmem:[%s59 + $0x180] sm:$0xff]
      %v4485 = vld [vmem:[%s59 + $0x188] sm:$0xff]
      %v4486 = vld [vmem:[%s59 + $0x190] sm:$0xff]
      %v4487 = vld [vmem:[%s59 + $0x198] sm:$0xff]
      %v4488 = vld [vmem:[%s59 + $0x1a0] sm:$0xff]
      %v4489 = vld [vmem:[%s59 + $0x1a8] sm:$0xff]
      %v4490 = vld [vmem:[%s59 + $0x1b0] sm:$0xff]
      %v4491 = vld [vmem:[%s59 + $0x1b8] sm:$0xff]
      %v4492 = vld [vmem:[%s59 + $0x1c0] sm:$0xff]
      %v4493 = vld [vmem:[%s59 + $0x1c8] sm:$0xff]
      %v4494 = vld [vmem:[%s59 + $0x1d0] sm:$0xff]
      %v4495 = vld [vmem:[%s59 + $0x1d8] sm:$0xff]
      %v4496 = vld [vmem:[%s59 + $0x1e0] sm:$0xff]
      %v4497 = vld [vmem:[%s59 + $0x1e8] sm:$0xff]
      %v4498 = vld [vmem:[%s59 + $0x1f0] sm:$0xff]
      %v4499 = vld [vmem:[%s59 + $0x1f8] sm:$0xff]
      %v4500 = vld [vmem:[%s59 + $0x200] sm:$0xff]
      %v4501 = vld [vmem:[%s59 + $0x208] sm:$0xff]
      %v4502 = vld [vmem:[%s59 + $0x210] sm:$0xff]
      %v4503 = vld [vmem:[%s59 + $0x218] sm:$0xff]
      %v4504 = vld [vmem:[%s59 + $0x220] sm:$0xff]
      %v4505 = vld [vmem:[%s59 + $0x228] sm:$0xff]
      %v4506 = vld [vmem:[%s59 + $0x230] sm:$0xff]
      %v4507 = vld [vmem:[%s59 + $0x238] sm:$0xff]
      %v4508 = vld [vmem:[%s59 + $0x240] sm:$0xff]
      %v4509 = vld [vmem:[%s59 + $0x248] sm:$0xff]
      %v4510 = vld [vmem:[%s59 + $0x250] sm:$0xff]
      %v4511 = vld [vmem:[%s59 + $0x258] sm:$0xff]
      %v4512 = vld [vmem:[%s59 + $0x260] sm:$0xff]
      %v4513 = vld [vmem:[%s59 + $0x268] sm:$0xff]
      %v4514 = vld [vmem:[%s59 + $0x270] sm:$0xff]
      %v4515 = vld [vmem:[%s59 + $0x278] sm:$0xff]
      %v4516 = vld [vmem:[%s59 + $0x280] sm:$0xff]
      %v4517 = vld [vmem:[%s59 + $0x288] sm:$0xff]
      %v4518 = vld [vmem:[%s59 + $0x290] sm:$0xff]
      %v4519 = vld [vmem:[%s59 + $0x298] sm:$0xff]
      %v4520 = vld [vmem:[%s59 + $0x2a0] sm:$0xff]
      %v4521 = vld [vmem:[%s59 + $0x2a8] sm:$0xff]
      %v4522 = vld [vmem:[%s59 + $0x2b0] sm:$0xff]
      %v4523 = vld [vmem:[%s59 + $0x2b8] sm:$0xff]
      %v4524 = vld [vmem:[%s59 + $0x2c0] sm:$0xff]
      %v4525 = vld [vmem:[%s59 + $0x2c8] sm:$0xff]
      %v4526 = vld [vmem:[%s59 + $0x2d0] sm:$0xff]
      %v4527 = vld [vmem:[%s59 + $0x2d8] sm:$0xff]
      %v4528 = vld [vmem:[%s59 + $0x2e0] sm:$0xff]
      %v4529 = vld [vmem:[%s59 + $0x2e8] sm:$0xff]
      %v4530 = vld [vmem:[%s59 + $0x2f0] sm:$0xff]
      %v4531 = vld [vmem:[%s59 + $0x2f8] sm:$0xff]
      %v4532 = vmul.f32 %v4436, %v4191
      %v4533 = vmul.f32 %v4437, %v4194
      %v4534 = vmul.f32 %v4438, %v4289
      %v4535 = vmul.f32 %v4439, %v4290
      %v4536 = vmul.f32 %v4440, %v4434
      %v4537 = vmul.f32 %v4441, %v4435
      %v4538 = vmul.f32 %v4442, %v4191
      %v4539 = vmul.f32 %v4443, %v4194
      %v4540 = vmul.f32 %v4444, %v4289
      %v4541 = vmul.f32 %v4445, %v4290
      %v4542 = vmul.f32 %v4446, %v4434
      %v4543 = vmul.f32 %v4447, %v4435
      %v4544 = vmul.f32 %v4448, %v4191
      %v4545 = vmul.f32 %v4449, %v4194
      %v4546 = vmul.f32 %v4450, %v4289
      %v4547 = vmul.f32 %v4451, %v4290
      %v4548 = vmul.f32 %v4452, %v4434
      %v4549 = vmul.f32 %v4453, %v4435
      %v4550 = vmul.f32 %v4454, %v4191
      %v4551 = vmul.f32 %v4455, %v4194
      %v4552 = vmul.f32 %v4456, %v4289
      %v4553 = vmul.f32 %v4457, %v4290
      %v4554 = vmul.f32 %v4458, %v4434
      %v4555 = vmul.f32 %v4459, %v4435
      %v4556 = vmul.f32 %v4460, %v4191
      %v4557 = vmul.f32 %v4461, %v4194
      %v4558 = vmul.f32 %v4462, %v4289
      %v4559 = vmul.f32 %v4463, %v4290
      %v4560 = vmul.f32 %v4464, %v4434
      %v4561 = vmul.f32 %v4465, %v4435
      %v4562 = vmul.f32 %v4466, %v4191
      %v4563 = vmul.f32 %v4467, %v4194
      %v4564 = vmul.f32 %v4468, %v4289
      %v4565 = vmul.f32 %v4469, %v4290
      %v4566 = vmul.f32 %v4470, %v4434
      %v4567 = vmul.f32 %v4471, %v4435
      %v4568 = vmul.f32 %v4472, %v4191
      %v4569 = vmul.f32 %v4473, %v4194
      %v4570 = vmul.f32 %v4474, %v4289
      %v4571 = vmul.f32 %v4475, %v4290
      %v4572 = vmul.f32 %v4476, %v4434
      %v4573 = vmul.f32 %v4477, %v4435
      %v4574 = vmul.f32 %v4478, %v4191
      %v4575 = vmul.f32 %v4479, %v4194
      %v4576 = vmul.f32 %v4480, %v4289
      %v4577 = vmul.f32 %v4481, %v4290
      %v4578 = vmul.f32 %v4482, %v4434
      %v4579 = vmul.f32 %v4483, %v4435
      %v4580 = vmul.f32 %v4484, %v4191
      %v4581 = vmul.f32 %v4485, %v4194
      %v4582 = vmul.f32 %v4486, %v4289
      %v4583 = vmul.f32 %v4487, %v4290
      %v4584 = vmul.f32 %v4488, %v4434
      %v4585 = vmul.f32 %v4489, %v4435
      %v4586 = vmul.f32 %v4490, %v4191
      %v4587 = vmul.f32 %v4491, %v4194
      %v4588 = vmul.f32 %v4492, %v4289
      %v4589 = vmul.f32 %v4493, %v4290
      %v4590 = vmul.f32 %v4494, %v4434
      %v4591 = vmul.f32 %v4495, %v4435
      %v4592 = vmul.f32 %v4496, %v4191
      %v4593 = vmul.f32 %v4497, %v4194
      %v4594 = vmul.f32 %v4498, %v4289
      %v4595 = vmul.f32 %v4499, %v4290
      %v4596 = vmul.f32 %v4500, %v4434
      %v4597 = vmul.f32 %v4501, %v4435
      %v4598 = vmul.f32 %v4502, %v4191
      %v4599 = vmul.f32 %v4503, %v4194
      %v4600 = vmul.f32 %v4504, %v4289
      %v4601 = vmul.f32 %v4505, %v4290
      %v4602 = vmul.f32 %v4506, %v4434
      %v4603 = vmul.f32 %v4507, %v4435
      %v4604 = vmul.f32 %v4508, %v4191
      %v4605 = vmul.f32 %v4509, %v4194
      %v4606 = vmul.f32 %v4510, %v4289
      %v4607 = vmul.f32 %v4511, %v4290
      %v4608 = vmul.f32 %v4512, %v4434
      %v4609 = vmul.f32 %v4513, %v4435
      %v4610 = vmul.f32 %v4514, %v4191
      %v4611 = vmul.f32 %v4515, %v4194
      %v4612 = vmul.f32 %v4516, %v4289
      %v4613 = vmul.f32 %v4517, %v4290
      %v4614 = vmul.f32 %v4518, %v4434
      %v4615 = vmul.f32 %v4519, %v4435
      %v4616 = vmul.f32 %v4520, %v4191
      %v4617 = vmul.f32 %v4521, %v4194
      %v4618 = vmul.f32 %v4522, %v4289
      %v4619 = vmul.f32 %v4523, %v4290
      %v4620 = vmul.f32 %v4524, %v4434
      %v4621 = vmul.f32 %v4525, %v4435
      %v4622 = vmul.f32 %v4526, %v4191
      %v4623 = vmul.f32 %v4527, %v4194
      %v4624 = vmul.f32 %v4528, %v4289
      %v4625 = vmul.f32 %v4529, %v4290
      %v4626 = vmul.f32 %v4530, %v4434
      %v4627 = vmul.f32 %v4531, %v4435
      %vm4628 = vcmask 506880
      %v4629 = vsel %vm4628, %v4532, 0.0
      %4630 = vadd.xlane.f32.xlu0 %v4629
      %v4631 = vpop.xlane.xlu0 %4630
      %v4632 = vsel %vm4628, %v4533, 0.0
      %4633 = vadd.xlane.f32.xlu0 %v4632
      %v4634 = vpop.xlane.xlu0 %4633
      %v4635 = vsel %vm4628, %v4534, 0.0
      %4636 = vadd.xlane.f32.xlu0 %v4635
      %v4637 = vpop.xlane.xlu0 %4636
      %v4638 = vsel %vm4628, %v4535, 0.0
      %4639 = vadd.xlane.f32.xlu0 %v4638
      %v4640 = vpop.xlane.xlu0 %4639
      %v4641 = vsel %vm4628, %v4536, 0.0
      %4642 = vadd.xlane.f32.xlu0 %v4641
      %v4643 = vpop.xlane.xlu0 %4642
      %v4644 = vsel %vm4628, %v4537, 0.0
      %4645 = vadd.xlane.f32.xlu0 %v4644
      %v4646 = vpop.xlane.xlu0 %4645
      %v4647 = vsel %vm4628, %v4538, 0.0
      %4648 = vadd.xlane.f32.xlu0 %v4647
      %v4649 = vpop.xlane.xlu0 %4648
      %v4650 = vsel %vm4628, %v4539, 0.0
      %4651 = vadd.xlane.f32.xlu0 %v4650
      %v4652 = vpop.xlane.xlu0 %4651
      %v4653 = vsel %vm4628, %v4540, 0.0
      %4654 = vadd.xlane.f32.xlu0 %v4653
      %v4655 = vpop.xlane.xlu0 %4654
      %v4656 = vsel %vm4628, %v4541, 0.0
      %4657 = vadd.xlane.f32.xlu0 %v4656
      %v4658 = vpop.xlane.xlu0 %4657
      %v4659 = vsel %vm4628, %v4542, 0.0
      %4660 = vadd.xlane.f32.xlu0 %v4659
      %v4661 = vpop.xlane.xlu0 %4660
      %v4662 = vsel %vm4628, %v4543, 0.0
      %4663 = vadd.xlane.f32.xlu0 %v4662
      %v4664 = vpop.xlane.xlu0 %4663
      %v4665 = vsel %vm4628, %v4544, 0.0
      %4666 = vadd.xlane.f32.xlu0 %v4665
      %v4667 = vpop.xlane.xlu0 %4666
      %v4668 = vsel %vm4628, %v4545, 0.0
      %4669 = vadd.xlane.f32.xlu0 %v4668
      %v4670 = vpop.xlane.xlu0 %4669
      %v4671 = vsel %vm4628, %v4546, 0.0
      %4672 = vadd.xlane.f32.xlu0 %v4671
      %v4673 = vpop.xlane.xlu0 %4672
      %v4674 = vsel %vm4628, %v4547, 0.0
      %4675 = vadd.xlane.f32.xlu0 %v4674
      %v4676 = vpop.xlane.xlu0 %4675
      %v4677 = vsel %vm4628, %v4548, 0.0
      %4678 = vadd.xlane.f32.xlu0 %v4677
      %v4679 = vpop.xlane.xlu0 %4678
      %v4680 = vsel %vm4628, %v4549, 0.0
      %4681 = vadd.xlane.f32.xlu0 %v4680
      %v4682 = vpop.xlane.xlu0 %4681
      %v4683 = vsel %vm4628, %v4550, 0.0
      %4684 = vadd.xlane.f32.xlu0 %v4683
      %v4685 = vpop.xlane.xlu0 %4684
      %v4686 = vsel %vm4628, %v4551, 0.0
      %4687 = vadd.xlane.f32.xlu0 %v4686
      %v4688 = vpop.xlane.xlu0 %4687
      %v4689 = vsel %vm4628, %v4552, 0.0
      %4690 = vadd.xlane.f32.xlu0 %v4689
      %v4691 = vpop.xlane.xlu0 %4690
      %v4692 = vsel %vm4628, %v4553, 0.0
      %4693 = vadd.xlane.f32.xlu0 %v4692
      %v4694 = vpop.xlane.xlu0 %4693
      %v4695 = vsel %vm4628, %v4554, 0.0
      %4696 = vadd.xlane.f32.xlu0 %v4695
      %v4697 = vpop.xlane.xlu0 %4696
      %v4698 = vsel %vm4628, %v4555, 0.0
      %4699 = vadd.xlane.f32.xlu0 %v4698
      %v4700 = vpop.xlane.xlu0 %4699
      %v4701 = vsel %vm4628, %v4556, 0.0
      %4702 = vadd.xlane.f32.xlu0 %v4701
      %v4703 = vpop.xlane.xlu0 %4702
      %v4704 = vsel %vm4628, %v4557, 0.0
      %4705 = vadd.xlane.f32.xlu0 %v4704
      %v4706 = vpop.xlane.xlu0 %4705
      %v4707 = vsel %vm4628, %v4558, 0.0
      %4708 = vadd.xlane.f32.xlu0 %v4707
      %v4709 = vpop.xlane.xlu0 %4708
      %v4710 = vsel %vm4628, %v4559, 0.0
      %4711 = vadd.xlane.f32.xlu0 %v4710
      %v4712 = vpop.xlane.xlu0 %4711
      %v4713 = vsel %vm4628, %v4560, 0.0
      %4714 = vadd.xlane.f32.xlu0 %v4713
      %v4715 = vpop.xlane.xlu0 %4714
      %v4716 = vsel %vm4628, %v4561, 0.0
      %4717 = vadd.xlane.f32.xlu0 %v4716
      %v4718 = vpop.xlane.xlu0 %4717
      %v4719 = vsel %vm4628, %v4562, 0.0
      %4720 = vadd.xlane.f32.xlu0 %v4719
      %v4721 = vpop.xlane.xlu0 %4720
      %v4722 = vsel %vm4628, %v4563, 0.0
      %4723 = vadd.xlane.f32.xlu0 %v4722
      %v4724 = vpop.xlane.xlu0 %4723
      %v4725 = vsel %vm4628, %v4564, 0.0
      %4726 = vadd.xlane.f32.xlu0 %v4725
      %v4727 = vpop.xlane.xlu0 %4726
      %v4728 = vsel %vm4628, %v4565, 0.0
      %4729 = vadd.xlane.f32.xlu0 %v4728
      %v4730 = vpop.xlane.xlu0 %4729
      %v4731 = vsel %vm4628, %v4566, 0.0
      %4732 = vadd.xlane.f32.xlu0 %v4731
      %v4733 = vpop.xlane.xlu0 %4732
      %v4734 = vsel %vm4628, %v4567, 0.0
      %4735 = vadd.xlane.f32.xlu0 %v4734
      %v4736 = vpop.xlane.xlu0 %4735
      %v4737 = vsel %vm4628, %v4568, 0.0
      %4738 = vadd.xlane.f32.xlu0 %v4737
      %v4739 = vpop.xlane.xlu0 %4738
      %v4740 = vsel %vm4628, %v4569, 0.0
      %4741 = vadd.xlane.f32.xlu0 %v4740
      %v4742 = vpop.xlane.xlu0 %4741
      %v4743 = vsel %vm4628, %v4570, 0.0
      %4744 = vadd.xlane.f32.xlu0 %v4743
      %v4745 = vpop.xlane.xlu0 %4744
      %v4746 = vsel %vm4628, %v4571, 0.0
      %4747 = vadd.xlane.f32.xlu0 %v4746
      %v4748 = vpop.xlane.xlu0 %4747
      %v4749 = vsel %vm4628, %v4572, 0.0
      %4750 = vadd.xlane.f32.xlu0 %v4749
      %v4751 = vpop.xlane.xlu0 %4750
      %v4752 = vsel %vm4628, %v4573, 0.0
      %4753 = vadd.xlane.f32.xlu0 %v4752
      %v4754 = vpop.xlane.xlu0 %4753
      %v4755 = vsel %vm4628, %v4574, 0.0
      %4756 = vadd.xlane.f32.xlu0 %v4755
      %v4757 = vpop.xlane.xlu0 %4756
      %v4758 = vsel %vm4628, %v4575, 0.0
      %4759 = vadd.xlane.f32.xlu0 %v4758
      %v4760 = vpop.xlane.xlu0 %4759
      %v4761 = vsel %vm4628, %v4576, 0.0
      %4762 = vadd.xlane.f32.xlu0 %v4761
      %v4763 = vpop.xlane.xlu0 %4762
      %v4764 = vsel %vm4628, %v4577, 0.0
      %4765 = vadd.xlane.f32.xlu0 %v4764
      %v4766 = vpop.xlane.xlu0 %4765
      %v4767 = vsel %vm4628, %v4578, 0.0
      %4768 = vadd.xlane.f32.xlu0 %v4767
      %v4769 = vpop.xlane.xlu0 %4768
      %v4770 = vsel %vm4628, %v4579, 0.0
      %4771 = vadd.xlane.f32.xlu0 %v4770
      %v4772 = vpop.xlane.xlu0 %4771
      %v4773 = vsel %vm4628, %v4580, 0.0
      %4774 = vadd.xlane.f32.xlu0 %v4773
      %v4775 = vpop.xlane.xlu0 %4774
      %v4776 = vsel %vm4628, %v4581, 0.0
      %4777 = vadd.xlane.f32.xlu0 %v4776
      %v4778 = vpop.xlane.xlu0 %4777
      %v4779 = vsel %vm4628, %v4582, 0.0
      %4780 = vadd.xlane.f32.xlu0 %v4779
      %v4781 = vpop.xlane.xlu0 %4780
      %v4782 = vsel %vm4628, %v4583, 0.0
      %4783 = vadd.xlane.f32.xlu0 %v4782
      %v4784 = vpop.xlane.xlu0 %4783
      %v4785 = vsel %vm4628, %v4584, 0.0
      %4786 = vadd.xlane.f32.xlu0 %v4785
      %v4787 = vpop.xlane.xlu0 %4786
      %v4788 = vsel %vm4628, %v4585, 0.0
      %4789 = vadd.xlane.f32.xlu0 %v4788
      %v4790 = vpop.xlane.xlu0 %4789
      %v4791 = vsel %vm4628, %v4586, 0.0
      %4792 = vadd.xlane.f32.xlu0 %v4791
      %v4793 = vpop.xlane.xlu0 %4792
      %v4794 = vsel %vm4628, %v4587, 0.0
      %4795 = vadd.xlane.f32.xlu0 %v4794
      %v4796 = vpop.xlane.xlu0 %4795
      %v4797 = vsel %vm4628, %v4588, 0.0
      %4798 = vadd.xlane.f32.xlu0 %v4797
      %v4799 = vpop.xlane.xlu0 %4798
      %v4800 = vsel %vm4628, %v4589, 0.0
      %4801 = vadd.xlane.f32.xlu0 %v4800
      %v4802 = vpop.xlane.xlu0 %4801
      %v4803 = vsel %vm4628, %v4590, 0.0
      %4804 = vadd.xlane.f32.xlu0 %v4803
      %v4805 = vpop.xlane.xlu0 %4804
      %v4806 = vsel %vm4628, %v4591, 0.0
      %4807 = vadd.xlane.f32.xlu0 %v4806
      %v4808 = vpop.xlane.xlu0 %4807
      %v4809 = vsel %vm4628, %v4592, 0.0
      %4810 = vadd.xlane.f32.xlu0 %v4809
      %v4811 = vpop.xlane.xlu0 %4810
      %v4812 = vsel %vm4628, %v4593, 0.0
      %4813 = vadd.xlane.f32.xlu0 %v4812
      %v4814 = vpop.xlane.xlu0 %4813
      %v4815 = vsel %vm4628, %v4594, 0.0
      %4816 = vadd.xlane.f32.xlu0 %v4815
      %v4817 = vpop.xlane.xlu0 %4816
      %v4818 = vsel %vm4628, %v4595, 0.0
      %4819 = vadd.xlane.f32.xlu0 %v4818
      %v4820 = vpop.xlane.xlu0 %4819
      %v4821 = vsel %vm4628, %v4596, 0.0
      %4822 = vadd.xlane.f32.xlu0 %v4821
      %v4823 = vpop.xlane.xlu0 %4822
      %v4824 = vsel %vm4628, %v4597, 0.0
      %4825 = vadd.xlane.f32.xlu0 %v4824
      %v4826 = vpop.xlane.xlu0 %4825
      %v4827 = vsel %vm4628, %v4598, 0.0
      %4828 = vadd.xlane.f32.xlu0 %v4827
      %v4829 = vpop.xlane.xlu0 %4828
      %v4830 = vsel %vm4628, %v4599, 0.0
      %4831 = vadd.xlane.f32.xlu0 %v4830
      %v4832 = vpop.xlane.xlu0 %4831
      %v4833 = vsel %vm4628, %v4600, 0.0
      %4834 = vadd.xlane.f32.xlu0 %v4833
      %v4835 = vpop.xlane.xlu0 %4834
      %v4836 = vsel %vm4628, %v4601, 0.0
      %4837 = vadd.xlane.f32.xlu0 %v4836
      %v4838 = vpop.xlane.xlu0 %4837
      %v4839 = vsel %vm4628, %v4602, 0.0
      %4840 = vadd.xlane.f32.xlu0 %v4839
      %v4841 = vpop.xlane.xlu0 %4840
      %v4842 = vsel %vm4628, %v4603, 0.0
      %4843 = vadd.xlane.f32.xlu0 %v4842
      %v4844 = vpop.xlane.xlu0 %4843
      %v4845 = vsel %vm4628, %v4604, 0.0
      %4846 = vadd.xlane.f32.xlu0 %v4845
      %v4847 = vpop.xlane.xlu0 %4846
      %v4848 = vsel %vm4628, %v4605, 0.0
      %4849 = vadd.xlane.f32.xlu0 %v4848
      %v4850 = vpop.xlane.xlu0 %4849
      %v4851 = vsel %vm4628, %v4606, 0.0
      %4852 = vadd.xlane.f32.xlu0 %v4851
      %v4853 = vpop.xlane.xlu0 %4852
      %v4854 = vsel %vm4628, %v4607, 0.0
      %4855 = vadd.xlane.f32.xlu0 %v4854
      %v4856 = vpop.xlane.xlu0 %4855
      %v4857 = vsel %vm4628, %v4608, 0.0
      %4858 = vadd.xlane.f32.xlu0 %v4857
      %v4859 = vpop.xlane.xlu0 %4858
      %v4860 = vsel %vm4628, %v4609, 0.0
      %4861 = vadd.xlane.f32.xlu0 %v4860
      %v4862 = vpop.xlane.xlu0 %4861
      %v4863 = vsel %vm4628, %v4610, 0.0
      %4864 = vadd.xlane.f32.xlu0 %v4863
      %v4865 = vpop.xlane.xlu0 %4864
      %v4866 = vsel %vm4628, %v4611, 0.0
      %4867 = vadd.xlane.f32.xlu0 %v4866
      %v4868 = vpop.xlane.xlu0 %4867
      %v4869 = vsel %vm4628, %v4612, 0.0
      %4870 = vadd.xlane.f32.xlu0 %v4869
      %v4871 = vpop.xlane.xlu0 %4870
      %v4872 = vsel %vm4628, %v4613, 0.0
      %4873 = vadd.xlane.f32.xlu0 %v4872
      %v4874 = vpop.xlane.xlu0 %4873
      %v4875 = vsel %vm4628, %v4614, 0.0
      %4876 = vadd.xlane.f32.xlu0 %v4875
      %v4877 = vpop.xlane.xlu0 %4876
      %v4878 = vsel %vm4628, %v4615, 0.0
      %4879 = vadd.xlane.f32.xlu0 %v4878
      %v4880 = vpop.xlane.xlu0 %4879
      %v4881 = vsel %vm4628, %v4616, 0.0
      %4882 = vadd.xlane.f32.xlu0 %v4881
      %v4883 = vpop.xlane.xlu0 %4882
      %v4884 = vsel %vm4628, %v4617, 0.0
      %4885 = vadd.xlane.f32.xlu0 %v4884
      %v4886 = vpop.xlane.xlu0 %4885
      %v4887 = vsel %vm4628, %v4618, 0.0
      %4888 = vadd.xlane.f32.xlu0 %v4887
      %v4889 = vpop.xlane.xlu0 %4888
      %v4890 = vsel %vm4628, %v4619, 0.0
      %4891 = vadd.xlane.f32.xlu0 %v4890
      %v4892 = vpop.xlane.xlu0 %4891
      %v4893 = vsel %vm4628, %v4620, 0.0
      %4894 = vadd.xlane.f32.xlu0 %v4893
      %v4895 = vpop.xlane.xlu0 %4894
      %v4896 = vsel %vm4628, %v4621, 0.0
      %4897 = vadd.xlane.f32.xlu0 %v4896
      %v4898 = vpop.xlane.xlu0 %4897
      %v4899 = vsel %vm4628, %v4622, 0.0
      %4900 = vadd.xlane.f32.xlu0 %v4899
      %v4901 = vpop.xlane.xlu0 %4900
      %v4902 = vsel %vm4628, %v4623, 0.0
      %4903 = vadd.xlane.f32.xlu0 %v4902
      %v4904 = vpop.xlane.xlu0 %4903
      %v4905 = vsel %vm4628, %v4624, 0.0
      %4906 = vadd.xlane.f32.xlu0 %v4905
      %v4907 = vpop.xlane.xlu0 %4906
      %v4908 = vsel %vm4628, %v4625, 0.0
      %4909 = vadd.xlane.f32.xlu0 %v4908
      %v4910 = vpop.xlane.xlu0 %4909
      %v4911 = vsel %vm4628, %v4626, 0.0
      %4912 = vadd.xlane.f32.xlu0 %v4911
      %v4913 = vpop.xlane.xlu0 %4912
      %v4914 = vsel %vm4628, %v4627, 0.0
      %4915 = vadd.xlane.f32.xlu0 %v4914
      %v4916 = vpop.xlane.xlu0 %4915
      %v5013 = vlaneseq
      %v5014 = vand.u32 %v5013, 127
      %v5015 = vlaneseq
      %v5016 = vshrl.u32 %v5015, 7
      %v5017 = vsub.s32 %v5014, %v5016
      %v5018 = vrot.slane %v4631, %v5017
      %v5019 = vadd.s32 %v5014, 4294967288
      %v5020 = vlaneseq
      %v5021 = vshrl.u32 %v5020, 7
      %v5022 = vsub.s32 %v5019, %v5021
      %v5023 = vrot.slane %v4634, %v5022
      %vm5024 = vcmask 130112
      %v5025 = vsel %vm5024, %v5023, %v5018
      %v5026 = vadd.s32 %v5014, 4294967280
      %v5027 = vlaneseq
      %v5028 = vshrl.u32 %v5027, 7
      %v5029 = vsub.s32 %v5026, %v5028
      %v5030 = vrot.slane %v4637, %v5029
      %vm5031 = vcmask 195712
      %v5032 = vsel %vm5031, %v5030, %v5025
      %v5033 = vadd.s32 %v5014, 4294967272
      %v5034 = vlaneseq
      %v5035 = vshrl.u32 %v5034, 7
      %v5036 = vsub.s32 %v5033, %v5035
      %v5037 = vrot.slane %v4640, %v5036
      %vm5038 = vcmask 261312
      %v5039 = vsel %vm5038, %v5037, %v5032
      %v5040 = vadd.s32 %v5014, 4294967264
      %v5041 = vlaneseq
      %v5042 = vshrl.u32 %v5041, 7
      %v5043 = vsub.s32 %v5040, %v5042
      %v5044 = vrot.slane %v4643, %v5043
      %vm5045 = vcmask 326912
      %v5046 = vsel %vm5045, %v5044, %v5039
      %v5047 = vadd.s32 %v5014, 4294967256
      %v5048 = vlaneseq
      %v5049 = vshrl.u32 %v5048, 7
      %v5050 = vsub.s32 %v5047, %v5049
      %v5051 = vrot.slane %v4646, %v5050
      %vm5052 = vcmask 392512
      %v5053 = vsel %vm5052, %v5051, %v5046
      %v5054 = vlaneseq
      %v5055 = vshrl.u32 %v5054, 7
      %v5056 = vsub.s32 %v5014, %v5055
      %v5057 = vrot.slane %v4649, %v5056
      %v5058 = vlaneseq
      %v5059 = vshrl.u32 %v5058, 7
      %v5060 = vsub.s32 %v5019, %v5059
      %v5061 = vrot.slane %v4652, %v5060
      %v5062 = vsel %vm5024, %v5061, %v5057
      %v5063 = vlaneseq
      %v5064 = vshrl.u32 %v5063, 7
      %v5065 = vsub.s32 %v5026, %v5064
      %v5066 = vrot.slane %v4655, %v5065
      %v5067 = vsel %vm5031, %v5066, %v5062
      %v5068 = vlaneseq
      %v5069 = vshrl.u32 %v5068, 7
      %v5070 = vsub.s32 %v5033, %v5069
      %v5071 = vrot.slane %v4658, %v5070
      %v5072 = vsel %vm5038, %v5071, %v5067
      %v5073 = vlaneseq
      %v5074 = vshrl.u32 %v5073, 7
      %v5075 = vsub.s32 %v5040, %v5074
      %v5076 = vrot.slane %v4661, %v5075
      %v5077 = vsel %vm5045, %v5076, %v5072
      %v5078 = vlaneseq
      %v5079 = vshrl.u32 %v5078, 7
      %v5080 = vsub.s32 %v5047, %v5079
      %v5081 = vrot.slane %v4664, %v5080
      %v5082 = vsel %vm5052, %v5081, %v5077
      %v5083 = vlaneseq
      %v5084 = vshrl.u32 %v5083, 7
      %v5085 = vsub.s32 %v5014, %v5084
      %v5086 = vrot.slane %v4667, %v5085
      %v5087 = vlaneseq
      %v5088 = vshrl.u32 %v5087, 7
      %v5089 = vsub.s32 %v5019, %v5088
      %v5090 = vrot.slane %v4670, %v5089
      %v5091 = vsel %vm5024, %v5090, %v5086
      %v5092 = vlaneseq
      %v5093 = vshrl.u32 %v5092, 7
      %v5094 = vsub.s32 %v5026, %v5093
      %v5095 = vrot.slane %v4673, %v5094
      %v5096 = vsel %vm5031, %v5095, %v5091
      %v5097 = vlaneseq
      %v5098 = vshrl.u32 %v5097, 7
      %v5099 = vsub.s32 %v5033, %v5098
      %v5100 = vrot.slane %v4676, %v5099
      %v5101 = vsel %vm5038, %v5100, %v5096
      %v5102 = vlaneseq
      %v5103 = vshrl.u32 %v5102, 7
      %v5104 = vsub.s32 %v5040, %v5103
      %v5105 = vrot.slane %v4679, %v5104
      %v5106 = vsel %vm5045, %v5105, %v5101
      %v5107 = vlaneseq
      %v5108 = vshrl.u32 %v5107, 7
      %v5109 = vsub.s32 %v5047, %v5108
      %v5110 = vrot.slane %v4682, %v5109
      %v5111 = vsel %vm5052, %v5110, %v5106
      %v5112 = vlaneseq
      %v5113 = vshrl.u32 %v5112, 7
      %v5114 = vsub.s32 %v5014, %v5113
      %v5115 = vrot.slane %v4685, %v5114
      %v5116 = vlaneseq
      %v5117 = vshrl.u32 %v5116, 7
      %v5118 = vsub.s32 %v5019, %v5117
      %v5119 = vrot.slane %v4688, %v5118
      %v5120 = vsel %vm5024, %v5119, %v5115
      %v5121 = vlaneseq
      %v5122 = vshrl.u32 %v5121, 7
      %v5123 = vsub.s32 %v5026, %v5122
      %v5124 = vrot.slane %v4691, %v5123
      %v5125 = vsel %vm5031, %v5124, %v5120
      %v5126 = vlaneseq
      %v5127 = vshrl.u32 %v5126, 7
      %v5128 = vsub.s32 %v5033, %v5127
      %v5129 = vrot.slane %v4694, %v5128
      %v5130 = vsel %vm5038, %v5129, %v5125
      %v5131 = vlaneseq
      %v5132 = vshrl.u32 %v5131, 7
      %v5133 = vsub.s32 %v5040, %v5132
      %v5134 = vrot.slane %v4697, %v5133
      %v5135 = vsel %vm5045, %v5134, %v5130
      %v5136 = vlaneseq
      %v5137 = vshrl.u32 %v5136, 7
      %v5138 = vsub.s32 %v5047, %v5137
      %v5139 = vrot.slane %v4700, %v5138
      %v5140 = vsel %vm5052, %v5139, %v5135
      %v5141 = vlaneseq
      %v5142 = vshrl.u32 %v5141, 7
      %v5143 = vsub.s32 %v5014, %v5142
      %v5144 = vrot.slane %v4703, %v5143
      %v5145 = vlaneseq
      %v5146 = vshrl.u32 %v5145, 7
      %v5147 = vsub.s32 %v5019, %v5146
      %v5148 = vrot.slane %v4706, %v5147
      %v5149 = vsel %vm5024, %v5148, %v5144
      %v5150 = vlaneseq
      %v5151 = vshrl.u32 %v5150, 7
      %v5152 = vsub.s32 %v5026, %v5151
      %v5153 = vrot.slane %v4709, %v5152
      %v5154 = vsel %vm5031, %v5153, %v5149
      %v5155 = vlaneseq
      %v5156 = vshrl.u32 %v5155, 7
      %v5157 = vsub.s32 %v5033, %v5156
      %v5158 = vrot.slane %v4712, %v5157
      %v5159 = vsel %vm5038, %v5158, %v5154
      %v5160 = vlaneseq
      %v5161 = vshrl.u32 %v5160, 7
      %v5162 = vsub.s32 %v5040, %v5161
      %v5163 = vrot.slane %v4715, %v5162
      %v5164 = vsel %vm5045, %v5163, %v5159
      %v5165 = vlaneseq
      %v5166 = vshrl.u32 %v5165, 7
      %v5167 = vsub.s32 %v5047, %v5166
      %v5168 = vrot.slane %v4718, %v5167
      %v5169 = vsel %vm5052, %v5168, %v5164
      %v5170 = vlaneseq
      %v5171 = vshrl.u32 %v5170, 7
      %v5172 = vsub.s32 %v5014, %v5171
      %v5173 = vrot.slane %v4721, %v5172
      %v5174 = vlaneseq
      %v5175 = vshrl.u32 %v5174, 7
      %v5176 = vsub.s32 %v5019, %v5175
      %v5177 = vrot.slane %v4724, %v5176
      %v5178 = vsel %vm5024, %v5177, %v5173
      %v5179 = vlaneseq
      %v5180 = vshrl.u32 %v5179, 7
      %v5181 = vsub.s32 %v5026, %v5180
      %v5182 = vrot.slane %v4727, %v5181
      %v5183 = vsel %vm5031, %v5182, %v5178
      %v5184 = vlaneseq
      %v5185 = vshrl.u32 %v5184, 7
      %v5186 = vsub.s32 %v5033, %v5185
      %v5187 = vrot.slane %v4730, %v5186
      %v5188 = vsel %vm5038, %v5187, %v5183
      %v5189 = vlaneseq
      %v5190 = vshrl.u32 %v5189, 7
      %v5191 = vsub.s32 %v5040, %v5190
      %v5192 = vrot.slane %v4733, %v5191
      %v5193 = vsel %vm5045, %v5192, %v5188
      %v5194 = vlaneseq
      %v5195 = vshrl.u32 %v5194, 7
      %v5196 = vsub.s32 %v5047, %v5195
      %v5197 = vrot.slane %v4736, %v5196
      %v5198 = vsel %vm5052, %v5197, %v5193
      %v5199 = vlaneseq
      %v5200 = vshrl.u32 %v5199, 7
      %v5201 = vsub.s32 %v5014, %v5200
      %v5202 = vrot.slane %v4739, %v5201
      %v5203 = vlaneseq
      %v5204 = vshrl.u32 %v5203, 7
      %v5205 = vsub.s32 %v5019, %v5204
      %v5206 = vrot.slane %v4742, %v5205
      %v5207 = vsel %vm5024, %v5206, %v5202
      %v5208 = vlaneseq
      %v5209 = vshrl.u32 %v5208, 7
      %v5210 = vsub.s32 %v5026, %v5209
      %v5211 = vrot.slane %v4745, %v5210
      %v5212 = vsel %vm5031, %v5211, %v5207
      %v5213 = vlaneseq
      %v5214 = vshrl.u32 %v5213, 7
      %v5215 = vsub.s32 %v5033, %v5214
      %v5216 = vrot.slane %v4748, %v5215
      %v5217 = vsel %vm5038, %v5216, %v5212
      %v5218 = vlaneseq
      %v5219 = vshrl.u32 %v5218, 7
      %v5220 = vsub.s32 %v5040, %v5219
      %v5221 = vrot.slane %v4751, %v5220
      %v5222 = vsel %vm5045, %v5221, %v5217
      %v5223 = vlaneseq
      %v5224 = vshrl.u32 %v5223, 7
      %v5225 = vsub.s32 %v5047, %v5224
      %v5226 = vrot.slane %v4754, %v5225
      %v5227 = vsel %vm5052, %v5226, %v5222
      %v5228 = vlaneseq
      %v5229 = vshrl.u32 %v5228, 7
      %v5230 = vsub.s32 %v5014, %v5229
      %v5231 = vrot.slane %v4757, %v5230
      %v5232 = vlaneseq
      %v5233 = vshrl.u32 %v5232, 7
      %v5234 = vsub.s32 %v5019, %v5233
      %v5235 = vrot.slane %v4760, %v5234
      %v5236 = vsel %vm5024, %v5235, %v5231
      %v5237 = vlaneseq
      %v5238 = vshrl.u32 %v5237, 7
      %v5239 = vsub.s32 %v5026, %v5238
      %v5240 = vrot.slane %v4763, %v5239
      %v5241 = vsel %vm5031, %v5240, %v5236
      %v5242 = vlaneseq
      %v5243 = vshrl.u32 %v5242, 7
      %v5244 = vsub.s32 %v5033, %v5243
      %v5245 = vrot.slane %v4766, %v5244
      %v5246 = vsel %vm5038, %v5245, %v5241
      %v5247 = vlaneseq
      %v5248 = vshrl.u32 %v5247, 7
      %v5249 = vsub.s32 %v5040, %v5248
      %v5250 = vrot.slane %v4769, %v5249
      %v5251 = vsel %vm5045, %v5250, %v5246
      %v5252 = vlaneseq
      %v5253 = vshrl.u32 %v5252, 7
      %v5254 = vsub.s32 %v5047, %v5253
      %v5255 = vrot.slane %v4772, %v5254
      %v5256 = vsel %vm5052, %v5255, %v5251
      %v5257 = vlaneseq
      %v5258 = vshrl.u32 %v5257, 7
      %v5259 = vsub.s32 %v5014, %v5258
      %v5260 = vrot.slane %v4775, %v5259
      %v5261 = vlaneseq
      %v5262 = vshrl.u32 %v5261, 7
      %v5263 = vsub.s32 %v5019, %v5262
      %v5264 = vrot.slane %v4778, %v5263
      %v5265 = vsel %vm5024, %v5264, %v5260
      %v5266 = vlaneseq
      %v5267 = vshrl.u32 %v5266, 7
      %v5268 = vsub.s32 %v5026, %v5267
      %v5269 = vrot.slane %v4781, %v5268
      %v5270 = vsel %vm5031, %v5269, %v5265
      %v5271 = vlaneseq
      %v5272 = vshrl.u32 %v5271, 7
      %v5273 = vsub.s32 %v5033, %v5272
      %v5274 = vrot.slane %v4784, %v5273
      %v5275 = vsel %vm5038, %v5274, %v5270
      %v5276 = vlaneseq
      %v5277 = vshrl.u32 %v5276, 7
      %v5278 = vsub.s32 %v5040, %v5277
      %v5279 = vrot.slane %v4787, %v5278
      %v5280 = vsel %vm5045, %v5279, %v5275
      %v5281 = vlaneseq
      %v5282 = vshrl.u32 %v5281, 7
      %v5283 = vsub.s32 %v5047, %v5282
      %v5284 = vrot.slane %v4790, %v5283
      %v5285 = vsel %vm5052, %v5284, %v5280
      %v5286 = vlaneseq
      %v5287 = vshrl.u32 %v5286, 7
      %v5288 = vsub.s32 %v5014, %v5287
      %v5289 = vrot.slane %v4793, %v5288
      %v5290 = vlaneseq
      %v5291 = vshrl.u32 %v5290, 7
      %v5292 = vsub.s32 %v5019, %v5291
      %v5293 = vrot.slane %v4796, %v5292
      %v5294 = vsel %vm5024, %v5293, %v5289
      %v5295 = vlaneseq
      %v5296 = vshrl.u32 %v5295, 7
      %v5297 = vsub.s32 %v5026, %v5296
      %v5298 = vrot.slane %v4799, %v5297
      %v5299 = vsel %vm5031, %v5298, %v5294
      %v5300 = vlaneseq
      %v5301 = vshrl.u32 %v5300, 7
      %v5302 = vsub.s32 %v5033, %v5301
      %v5303 = vrot.slane %v4802, %v5302
      %v5304 = vsel %vm5038, %v5303, %v5299
      %v5305 = vlaneseq
      %v5306 = vshrl.u32 %v5305, 7
      %v5307 = vsub.s32 %v5040, %v5306
      %v5308 = vrot.slane %v4805, %v5307
      %v5309 = vsel %vm5045, %v5308, %v5304
      %v5310 = vlaneseq
      %v5311 = vshrl.u32 %v5310, 7
      %v5312 = vsub.s32 %v5047, %v5311
      %v5313 = vrot.slane %v4808, %v5312
      %v5314 = vsel %vm5052, %v5313, %v5309
      %v5315 = vlaneseq
      %v5316 = vshrl.u32 %v5315, 7
      %v5317 = vsub.s32 %v5014, %v5316
      %v5318 = vrot.slane %v4811, %v5317
      %v5319 = vlaneseq
      %v5320 = vshrl.u32 %v5319, 7
      %v5321 = vsub.s32 %v5019, %v5320
      %v5322 = vrot.slane %v4814, %v5321
      %v5323 = vsel %vm5024, %v5322, %v5318
      %v5324 = vlaneseq
      %v5325 = vshrl.u32 %v5324, 7
      %v5326 = vsub.s32 %v5026, %v5325
      %v5327 = vrot.slane %v4817, %v5326
      %v5328 = vsel %vm5031, %v5327, %v5323
      %v5329 = vlaneseq
      %v5330 = vshrl.u32 %v5329, 7
      %v5331 = vsub.s32 %v5033, %v5330
      %v5332 = vrot.slane %v4820, %v5331
      %v5333 = vsel %vm5038, %v5332, %v5328
      %v5334 = vlaneseq
      %v5335 = vshrl.u32 %v5334, 7
      %v5336 = vsub.s32 %v5040, %v5335
      %v5337 = vrot.slane %v4823, %v5336
      %v5338 = vsel %vm5045, %v5337, %v5333
      %v5339 = vlaneseq
      %v5340 = vshrl.u32 %v5339, 7
      %v5341 = vsub.s32 %v5047, %v5340
      %v5342 = vrot.slane %v4826, %v5341
      %v5343 = vsel %vm5052, %v5342, %v5338
      %v5344 = vlaneseq
      %v5345 = vshrl.u32 %v5344, 7
      %v5346 = vsub.s32 %v5014, %v5345
      %v5347 = vrot.slane %v4829, %v5346
      %v5348 = vlaneseq
      %v5349 = vshrl.u32 %v5348, 7
      %v5350 = vsub.s32 %v5019, %v5349
      %v5351 = vrot.slane %v4832, %v5350
      %v5352 = vsel %vm5024, %v5351, %v5347
      %v5353 = vlaneseq
      %v5354 = vshrl.u32 %v5353, 7
      %v5355 = vsub.s32 %v5026, %v5354
      %v5356 = vrot.slane %v4835, %v5355
      %v5357 = vsel %vm5031, %v5356, %v5352
      %v5358 = vlaneseq
      %v5359 = vshrl.u32 %v5358, 7
      %v5360 = vsub.s32 %v5033, %v5359
      %v5361 = vrot.slane %v4838, %v5360
      %v5362 = vsel %vm5038, %v5361, %v5357
      %v5363 = vlaneseq
      %v5364 = vshrl.u32 %v5363, 7
      %v5365 = vsub.s32 %v5040, %v5364
      %v5366 = vrot.slane %v4841, %v5365
      %v5367 = vsel %vm5045, %v5366, %v5362
      %v5368 = vlaneseq
      %v5369 = vshrl.u32 %v5368, 7
      %v5370 = vsub.s32 %v5047, %v5369
      %v5371 = vrot.slane %v4844, %v5370
      %v5372 = vsel %vm5052, %v5371, %v5367
      %v5373 = vlaneseq
      %v5374 = vshrl.u32 %v5373, 7
      %v5375 = vsub.s32 %v5014, %v5374
      %v5376 = vrot.slane %v4847, %v5375
      %v5377 = vlaneseq
      %v5378 = vshrl.u32 %v5377, 7
      %v5379 = vsub.s32 %v5019, %v5378
      %v5380 = vrot.slane %v4850, %v5379
      %v5381 = vsel %vm5024, %v5380, %v5376
      %v5382 = vlaneseq
      %v5383 = vshrl.u32 %v5382, 7
      %v5384 = vsub.s32 %v5026, %v5383
      %v5385 = vrot.slane %v4853, %v5384
      %v5386 = vsel %vm5031, %v5385, %v5381
      %v5387 = vlaneseq
      %v5388 = vshrl.u32 %v5387, 7
      %v5389 = vsub.s32 %v5033, %v5388
      %v5390 = vrot.slane %v4856, %v5389
      %v5391 = vsel %vm5038, %v5390, %v5386
      %v5392 = vlaneseq
      %v5393 = vshrl.u32 %v5392, 7
      %v5394 = vsub.s32 %v5040, %v5393
      %v5395 = vrot.slane %v4859, %v5394
      %v5396 = vsel %vm5045, %v5395, %v5391
      %v5397 = vlaneseq
      %v5398 = vshrl.u32 %v5397, 7
      %v5399 = vsub.s32 %v5047, %v5398
      %v5400 = vrot.slane %v4862, %v5399
      %v5401 = vsel %vm5052, %v5400, %v5396
      %v5402 = vlaneseq
      %v5403 = vshrl.u32 %v5402, 7
      %v5404 = vsub.s32 %v5014, %v5403
      %v5405 = vrot.slane %v4865, %v5404
      %v5406 = vlaneseq
      %v5407 = vshrl.u32 %v5406, 7
      %v5408 = vsub.s32 %v5019, %v5407
      %v5409 = vrot.slane %v4868, %v5408
      %v5410 = vsel %vm5024, %v5409, %v5405
      %v5411 = vlaneseq
      %v5412 = vshrl.u32 %v5411, 7
      %v5413 = vsub.s32 %v5026, %v5412
      %v5414 = vrot.slane %v4871, %v5413
      %v5415 = vsel %vm5031, %v5414, %v5410
      %v5416 = vlaneseq
      %v5417 = vshrl.u32 %v5416, 7
      %v5418 = vsub.s32 %v5033, %v5417
      %v5419 = vrot.slane %v4874, %v5418
      %v5420 = vsel %vm5038, %v5419, %v5415
      %v5421 = vlaneseq
      %v5422 = vshrl.u32 %v5421, 7
      %v5423 = vsub.s32 %v5040, %v5422
      %v5424 = vrot.slane %v4877, %v5423
      %v5425 = vsel %vm5045, %v5424, %v5420
      %v5426 = vlaneseq
      %v5427 = vshrl.u32 %v5426, 7
      %v5428 = vsub.s32 %v5047, %v5427
      %v5429 = vrot.slane %v4880, %v5428
      %v5430 = vsel %vm5052, %v5429, %v5425
      %v5431 = vlaneseq
      %v5432 = vshrl.u32 %v5431, 7
      %v5433 = vsub.s32 %v5014, %v5432
      %v5434 = vrot.slane %v4883, %v5433
      %v5435 = vlaneseq
      %v5436 = vshrl.u32 %v5435, 7
      %v5437 = vsub.s32 %v5019, %v5436
      %v5438 = vrot.slane %v4886, %v5437
      %v5439 = vsel %vm5024, %v5438, %v5434
      %v5440 = vlaneseq
      %v5441 = vshrl.u32 %v5440, 7
      %v5442 = vsub.s32 %v5026, %v5441
      %v5443 = vrot.slane %v4889, %v5442
      %v5444 = vsel %vm5031, %v5443, %v5439
      %v5445 = vlaneseq
      %v5446 = vshrl.u32 %v5445, 7
      %v5447 = vsub.s32 %v5033, %v5446
      %v5448 = vrot.slane %v4892, %v5447
      %v5449 = vsel %vm5038, %v5448, %v5444
      %v5450 = vlaneseq
      %v5451 = vshrl.u32 %v5450, 7
      %v5452 = vsub.s32 %v5040, %v5451
      %v5453 = vrot.slane %v4895, %v5452
      %v5454 = vsel %vm5045, %v5453, %v5449
      %v5455 = vlaneseq
      %v5456 = vshrl.u32 %v5455, 7
      %v5457 = vsub.s32 %v5047, %v5456
      %v5458 = vrot.slane %v4898, %v5457
      %v5459 = vsel %vm5052, %v5458, %v5454
      %v5460 = vlaneseq
      %v5461 = vshrl.u32 %v5460, 7
      %v5462 = vsub.s32 %v5014, %v5461
      %v5463 = vrot.slane %v4901, %v5462
      %v5464 = vlaneseq
      %v5465 = vshrl.u32 %v5464, 7
      %v5466 = vsub.s32 %v5019, %v5465
      %v5467 = vrot.slane %v4904, %v5466
      %v5468 = vsel %vm5024, %v5467, %v5463
      %v5469 = vlaneseq
      %v5470 = vshrl.u32 %v5469, 7
      %v5471 = vsub.s32 %v5026, %v5470
      %v5472 = vrot.slane %v4907, %v5471
      %v5473 = vsel %vm5031, %v5472, %v5468
      %v5474 = vlaneseq
      %v5475 = vshrl.u32 %v5474, 7
      %v5476 = vsub.s32 %v5033, %v5475
      %v5477 = vrot.slane %v4910, %v5476
      %v5478 = vsel %vm5038, %v5477, %v5473
      %v5479 = vlaneseq
      %v5480 = vshrl.u32 %v5479, 7
      %v5481 = vsub.s32 %v5040, %v5480
      %v5482 = vrot.slane %v4913, %v5481
      %v5483 = vsel %vm5045, %v5482, %v5478
      %v5484 = vlaneseq
      %v5485 = vshrl.u32 %v5484, 7
      %v5486 = vsub.s32 %v5047, %v5485
      %v5487 = vrot.slane %v4916, %v5486
      %v5488 = vsel %vm5052, %v5487, %v5483
      %vm5489 = vcmask 1041409
      %v5490 = vsel %vm5489, %v5082, %v5053
      %vm5491 = vcmask 1042434
      %v5492 = vsel %vm5491, %v5111, %v5490
      %vm5493 = vcmask 1043459
      %v5494 = vsel %vm5493, %v5140, %v5492
      %vm5495 = vcmask 1044484
      %v5496 = vsel %vm5495, %v5169, %v5494
      %vm5497 = vcmask 1045509
      %v5498 = vsel %vm5497, %v5198, %v5496
      %vm5499 = vcmask 1046534
      %v5500 = vsel %vm5499, %v5227, %v5498
      %vm5501 = vcmask 1047559
      %v5502 = vsel %vm5501, %v5256, %v5500
      %v5503 = vsel %vm5489, %v5314, %v5285
      %v5504 = vsel %vm5491, %v5343, %v5503
      %v5505 = vsel %vm5493, %v5372, %v5504
      %v5506 = vsel %vm5495, %v5401, %v5505
      %v5507 = vsel %vm5497, %v5430, %v5506
      %v5508 = vsel %vm5499, %v5459, %v5507
      %v5509 = vsel %vm5501, %v5488, %v5508
      %vm5512 = vcmask 392192
      %v5513 = vsel %vm5512, %v5502, 0.0
      %5514 = vadd.xlane.f32.xlu0 %v5513
      %v5515 = vpop.xlane.xlu0 %5514
      %v5516 = vsel %vm5512, %v5509, 0.0
      %5517 = vadd.xlane.f32.xlu0 %v5516
      %v5518 = vpop.xlane.xlu0 %5517
      %v5519 = vld [vmem:[%s61] sm:$0xff]
      %v5520 = vld [vmem:[%s61 + $0x8] sm:$0xff]
      %v5521 = vadd.f32 %v5515, %v5519
      %v5522 = vadd.f32 %v5518, %v5520
      %v5523 = vmax.f32 %v5521, 0.0
      %v5524 = vmax.f32 %v5522, 0.0
      %v5525 = vld [vmem:[%s63] sm:$0xff]
      %v5526 = vld [vmem:[%s63 + $0x8] sm:$0xff]
      %5528 = vset.pattern.permute.xlu0 0
      %5529 = vperm.xlu0 %5528, %v5523
      %v5530 = vpop.permute.xlu0 %5529
      %5533 = vset.pattern.permute.xlu0 0
      %5534 = vperm.xlu0 %5533, %v5524
      %v5535 = vpop.permute.xlu0 %5534
      %v5537 = vmul.f32 %v5525, %v5530
      %v5538 = vmul.f32 %v5526, %v5535
      %vm5539 = vcmask 523264
      %v5540 = vsel %vm5539, %v5537, 0.0
      %v5541 = vsel %vm5539, %v5538, 0.0
      %v5542 = vadd.f32 %v5540, %v5541
      %v5543 = vrot.slane %v5542, 4
      %v5544 = vadd.f32 %v5542, %v5543
      %v5545 = vrot.slane %v5544, 2
      %v5546 = vadd.f32 %v5544, %v5545
      %v5547 = vrot.slane %v5546, 1
      %v5548 = vadd.f32 %v5546, %v5547
      %v5549 = vld [vmem:[%s65] sm:$0x1]
      %v5550 = vadd.f32 %v5548, %v5549
      %v5551 = vmax.f32 %v5550, 0.0
      %v5552 = vld [vmem:[%s67] sm:$0x1]
      %v5553 = vmul.f32 %v5552, %v5551
      %vm5554 = vcmask 516096
      %v5555 = vsel %vm5554, %v5553, 0.0
      %5556 = vadd.xlane.f32.xlu0 %v5555
      %v5557 = vpop.xlane.xlu0 %5556
      %v5558 = vld [vmem:[#allocation2] sm:$0x1]
      %v5559 = vadd.f32 %v5557, %v5558
      %vm5560 = vcmask 0
      %5561 = vst.msk [vmem:[%s1068] sm:$0x1] %vm5560, %v5559
      %p5562 = scmp.lt.s32.totalorder %s84, 1
      %s5563 = scalar_select %p5562, %s84, 1
      %s5564 = scalar_lea.vmem %s71, %s5563
      // Predicated region
      $region161: #{ml4cvd_forward.1} parent=159 // pred_check
        %p5565 = pneg %p842
      $region162: #{ml4cvd_forward.1} parent=159 // pred_check_branch
        %5567 = sbr.rel (%p5565) target = $region164
      $region163: #{ml4cvd_forward.1} parent=159 // pred_region
        _
      $region164: #{ml4cvd_forward.1} parent=159 // pred_fallthru
        _
    $region160: #{ml4cvd_forward.1} parent=5 // pred_fallthru
      _
    %p5568 = scmp.le.s32.totalorder 2, %s79
    // Predicated region
    $region165: #{ml4cvd_forward.1} parent=5 // pred_check
      %p5569 = pneg %p5568
    $region166: #{ml4cvd_forward.1} parent=5 // pred_check_branch
      %5571 = sbr.rel (%p5569) target = $region168
    $region167: #{ml4cvd_forward.1} parent=5 // pred_region
      %s5572 = ssub.s32 %s79, 2
      // Predicated region
      $region169: #{ml4cvd_forward.1} parent=167 // pred_check
        %p5573 = pneg %p848
      $region170: #{ml4cvd_forward.1} parent=167 // pred_check_branch
        %5575 = sbr.rel (%p5573) target = $region172
      $region171: #{ml4cvd_forward.1} parent=167 // pred_region
        %p5576 = scmp.lt.s32.totalorder %s85, 1
        %s5577 = scalar_select %p5576, %s85, 1
        %s5578 = scalar_lea.vmem %s71, %s5577
      $region172: #{ml4cvd_forward.1} parent=167 // pred_fallthru
        _
    $region168: #{ml4cvd_forward.1} parent=5 // pred_fallthru
      _
  $region6: #{ml4cvd_forward.1} parent=0 // loop_footer
    %s83 = sadd.s32 1, %s79
  $region7: #{ml4cvd_forward.1} parent=0 // loop_footer_branch
    %78 = sbr.rel target = $region3
  $region8: #{ml4cvd_forward.1} parent=0 // loop_exit
    _

</llo_original>
